<compile_context>
chip_gen: v7x
topology: tpu7x:2x2x1
jax: 0.10.0
libtpu: 0.0.40
codegen_flags: <defaults>
</compile_context>

<pallas_src>
import functools
import math

import jax
import jax.numpy as jnp
from jax import lax
from jax.experimental import pallas as pl
from jax.experimental.pallas import tpu as pltpu

# ----------------------- config (small test shapes) -------------------------
# Real ViT config: image 128, hidden 768, 12 layers, 12 heads. Small shapes
# consistent with the module are used for the runnable demo; HIDDEN is kept a
# multiple of 128 (like the real 768) so every matmul/store is lane-dense.
IMAGE_SIZE = 24
PATCH_SIZE = 6                 # matches Vision.PATCH_SIZE
NUM_CHANNELS = 3               # matches Vision.NUM_CHANNELS
HIDDEN = 128
NUM_HEADS = 4
HEAD_DIM = HIDDEN // NUM_HEADS
NUM_LAYERS = 2
INTERMEDIATE = 4 * HIDDEN      # 512
NUM_CLASSES = 16               # TODO(synk): TEMP_RANGES[2] undefined in spec
LN_EPS = 1e-12                 # ViT layer_norm_eps
NUM_PATCHES = (IMAGE_SIZE // PATCH_SIZE) ** 2
SEQ_LEN = NUM_PATCHES + 1      # +1 CLS token
PATCH_DIM = NUM_CHANNELS * PATCH_SIZE * PATCH_SIZE

ACT_DTYPE = jnp.bfloat16                 # activation transport dtype
VMEM_LIMIT = 32 * 1024 * 1024            # safe on v5e / v6e / v7x at demo size


# ------------------------------ kernel helpers -------------------------------
def _mm(a, b):
    """bf16-operand MXU matmul with f32 accumulation."""
    return jnp.dot(a.astype(jnp.bfloat16), b.astype(jnp.bfloat16),
                   preferred_element_type=jnp.float32)


def _gelu(y):
    c = math.sqrt(2.0 / math.pi)
    return 0.5 * y * (1.0 + jnp.tanh(c * (y + 0.044715 * y * y * y)))


def _silu(y):
    return y * (1.0 / (1.0 + jnp.exp(-y)))


def _layernorm(x, g, b, eps):
    mu = jnp.mean(x, axis=-1, keepdims=True)
    var = jnp.mean(jnp.square(x - mu), axis=-1, keepdims=True)
    return (x - mu) * lax.rsqrt(var + eps) * g + b


def _row_tile(m):
    """Largest row tile that still gives >=2 grid steps (pipelining / 2 TCs)."""
    for cand in (256, 128, 64, 32, 16, 8):
        if cand < m and m % cand == 0:
            return cand
    return m


# -------------------------------- kernels ------------------------------------
def _patch_embed_kernel(p_ref, w_ref, b_ref, o_ref):
    """Fused feature-extractor normalization ((x-0.5)/0.5) + patch projection."""
    x = 2.0 * p_ref[...] - 1.0
    o_ref[...] = (_mm(x, w_ref[...]) + b_ref[...]).astype(o_ref.dtype)


def _encoder_layer_kernel(x_ref, ln1g_ref, ln1b_ref, qkvw_ref, qkvb_ref,
                          projw_ref, projb_ref, ln2g_ref, ln2b_ref,
                          fc1w_ref, fc1b_ref, fc2w_ref, fc2b_ref, o_ref,
                          *, num_heads, head_dim, scale, eps):
    """One whole pre-LN ViT encoder layer for one batch element, fully in VMEM."""
    x = x_ref[0].astype(jnp.float32)                       # (T, H)
    h_dim = num_heads * head_dim

    # ---- LN1 fused with the lane-dense q|k|v projection (one MXU pass) -----
    xn = _layernorm(x, ln1g_ref[...], ln1b_ref[...], eps)
    qkv = _mm(xn, qkvw_ref[...]) + qkvb_ref[...]           # (T, 3H) f32

    # ---- multi-head attention; context accumulated straight into the
    #      out-projection + residual (no concat, nothing leaves VMEM) --------
    pw = projw_ref[...]                                    # (H, H) bf16
    attn = x + projb_ref[...]                              # residual + proj bias
    for h in range(num_heads):
        lo = h * head_dim
        qh = qkv[:, lo:lo + head_dim]
        kh = qkv[:, h_dim + lo:h_dim + lo + head_dim]
        vh = qkv[:, 2 * h_dim + lo:2 * h_dim + lo + head_dim]
        s = lax.dot_general(qh.astype(jnp.bfloat16), kh.astype(jnp.bfloat16),
                            (((1,), (1,)), ((), ())),
                            preferred_element_type=jnp.float32) * scale
        s = s - jnp.max(s, axis=-1, keepdims=True)
        p = jnp.exp(s)
        p = p / jnp.sum(p, axis=-1, keepdims=True)          # exact softmax
        ctx = _mm(p, vh)                                    # (T, dh)
        attn = attn + _mm(ctx, pw[lo:lo + head_dim, :])     # per-head out-proj

    # ---- LN2 -> fc1 -> GELU -> fc2 -> +residual, intermediate stays in VMEM
    xn2 = _layernorm(attn, ln2g_ref[...], ln2b_ref[...], eps)
    mid = _gelu(_mm(xn2, fc1w_ref[...]) + fc1b_ref[...])
    out = _mm(mid, fc2w_ref[...]) + fc2b_ref[...] + attn
    o_ref[0] = out.astype(o_ref.dtype)


def _pool_head_kernel(x_ref, lnfg_ref, lnfb_ref, poolw_ref, poolb_ref,
                      w1_ref, b1_ref, w2_ref, b2_ref, w3_ref, b3_ref,
                      w4_ref, b4_ref, o_ref, *, eps):
    """Final LN + pooler (dense+tanh) + last_layer_together head, one kernel."""
    x = x_ref[...].astype(jnp.float32)
    xn = _layernorm(x, lnfg_ref[...], lnfb_ref[...], eps)
    pooled = jnp.tanh(_mm(xn, poolw_ref[...]) + poolb_ref[...])
    h = _silu(_mm(pooled, w1_ref[...]) + b1_ref[...])
    h = _silu(_mm(h, w2_ref[...]) + b2_ref[...])
    h = _silu(_mm(h, w3_ref[...]) + b3_ref[...])
    o_ref[...] = _mm(h, w4_ref[...]) + b4_ref[...]


# ------------------------------ pallas wrappers -------------------------------
def pallas_patch_embed(patches, w, b):
    M, K = patches.shape
    N = w.shape[1]
    TM = _row_tile(M)
    Mp = ((M + TM - 1) // TM) * TM
    if Mp != M:
        patches = jnp.pad(patches, ((0, Mp - M), (0, 0)))
    out = pl.pallas_call(
        _patch_embed_kernel,
        out_shape=jax.ShapeDtypeStruct((Mp, N), jnp.float32),
        grid=(Mp // TM,),
        in_specs=[pl.BlockSpec((TM, K), lambda i: (i, 0)),
                  pl.BlockSpec((K, N), lambda i: (0, 0)),
                  pl.BlockSpec((1, N), lambda i: (0, 0))],
        out_specs=pl.BlockSpec((TM, N), lambda i: (i, 0)),
        compiler_params=pltpu.CompilerParams(
            dimension_semantics=("parallel",),
            vmem_limit_bytes=VMEM_LIMIT),
    )(patches, w, b)
    return out[:M] if Mp != M else out


def pallas_encoder_layer(x, lp, *, scale):
    B, T, H = x.shape

    def w(shape):
        return pl.BlockSpec(shape, lambda b: (0, 0))

    kernel = functools.partial(_encoder_layer_kernel,
                               num_heads=NUM_HEADS, head_dim=HEAD_DIM,
                               scale=scale, eps=LN_EPS)
    return pl.pallas_call(
        kernel,
        out_shape=jax.ShapeDtypeStruct((B, T, H), ACT_DTYPE),
        grid=(B,),                      # >=2 parallel steps (one per batch elt)
        in_specs=[pl.BlockSpec((1, T, H), lambda b: (b, 0, 0)),
                  w((1, H)), w((1, H)),
                  w((H, 3 * H)), w((1, 3 * H)),
                  w((H, H)), w((1, H)),
                  w((1, H)), w((1, H)),
                  w((H, INTERMEDIATE)), w((1, INTERMEDIATE)),
                  w((INTERMEDIATE, H)), w((1, H))],
        out_specs=pl.BlockSpec((1, T, H), lambda b: (b, 0, 0)),
        compiler_params=pltpu.CompilerParams(
            dimension_semantics=("parallel",),
            vmem_limit_bytes=VMEM_LIMIT),
    )(x, lp["ln1_g"], lp["ln1_b"], lp["qkv_w"], lp["qkv_b"],
      lp["proj_w"], lp["proj_b"], lp["ln2_g"], lp["ln2_b"],
      lp["fc1_w"], lp["fc1_b"], lp["fc2_w"], lp["fc2_b"])


def pallas_pool_head(cls_tok, p):
    B, H = cls_tok.shape

    def w(shape):
        return pl.BlockSpec(shape, lambda i: (0, 0))

    return pl.pallas_call(
        functools.partial(_pool_head_kernel, eps=LN_EPS),
        out_shape=jax.ShapeDtypeStruct((B, NUM_CLASSES), jnp.float32),
        grid=(1,),
        in_specs=[w((B, H)),
                  w((1, H)), w((1, H)),
                  w((H, H)), w((1, H)),
                  w((H, 512)), w((1, 512)),
                  w((512, 256)), w((1, 256)),
                  w((256, 64)), w((1, 64)),
                  w((64, NUM_CLASSES)), w((1, NUM_CLASSES))],
        out_specs=w((B, NUM_CLASSES)),
        compiler_params=pltpu.CompilerParams(
            dimension_semantics=("arbitrary",),
            vmem_limit_bytes=VMEM_LIMIT),
    )(cls_tok, p["lnf_g"], p["lnf_b"], p["pool_w"], p["pool_b"],
      p["head_w1"], p["head_b1"], p["head_w2"], p["head_b2"],
      p["head_w3"], p["head_b3"], p["head_w4"], p["head_b4"])


# -------------------------------- parameters ---------------------------------
def init_params(key):
    """Kernel-ready params: weights pre-cast to bf16 ONCE, biases f32 (1, N)."""
    def lin(k, fan_in, fan_out):
        kw, kb = jax.random.split(k)
        bound = 1.0 / math.sqrt(fan_in)
        w = jax.random.uniform(kw, (fan_in, fan_out), jnp.float32, -bound, bound)
        b = jax.random.uniform(kb, (fan_out,), jnp.float32, -bound, bound)
        return w.astype(jnp.bfloat16), b.reshape(1, fan_out)

    keys = iter(jax.random.split(key, 8 * NUM_LAYERS + 16))
    p = {}
    p["patch_w"], p["patch_b"] = lin(next(keys), PATCH_DIM, HIDDEN)
    p["cls"] = 0.02 * jax.random.normal(next(keys), (1, 1, HIDDEN), jnp.float32)
    p["pos"] = 0.02 * jax.random.normal(next(keys), (1, SEQ_LEN, HIDDEN),
                                        jnp.float32)

    layers = []
    for _ in range(NUM_LAYERS):
        lp = {}
        lp["ln1_g"] = jnp.ones((1, HIDDEN), jnp.float32)
        lp["ln1_b"] = jnp.zeros((1, HIDDEN), jnp.float32)
        wq, bq = lin(next(keys), HIDDEN, HIDDEN)
        wk, bk = lin(next(keys), HIDDEN, HIDDEN)
        wv, bv = lin(next(keys), HIDDEN, HIDDEN)
        lp["qkv_w"] = jnp.concatenate([wq, wk, wv], axis=1)   # fused (H, 3H)
        lp["qkv_b"] = jnp.concatenate([bq, bk, bv], axis=1)   # (1, 3H)
        lp["proj_w"], lp["proj_b"] = lin(next(keys), HIDDEN, HIDDEN)
        lp["ln2_g"] = jnp.ones((1, HIDDEN), jnp.float32)
        lp["ln2_b"] = jnp.zeros((1, HIDDEN), jnp.float32)
        lp["fc1_w"], lp["fc1_b"] = lin(next(keys), HIDDEN, INTERMEDIATE)
        lp["fc2_w"], lp["fc2_b"] = lin(next(keys), INTERMEDIATE, HIDDEN)
        layers.append(lp)
    p["layers"] = layers

    p["lnf_g"] = jnp.ones((1, HIDDEN), jnp.float32)
    p["lnf_b"] = jnp.zeros((1, HIDDEN), jnp.float32)
    p["pool_w"], p["pool_b"] = lin(next(keys), HIDDEN, HIDDEN)
    p["head_w1"], p["head_b1"] = lin(next(keys), HIDDEN, 512)
    p["head_w2"], p["head_b2"] = lin(next(keys), 512, 256)
    p["head_w3"], p["head_b3"] = lin(next(keys), 256, 64)
    p["head_w4"], p["head_b4"] = lin(next(keys), 64, NUM_CLASSES)
    return p


# ---------------------------------- forward ----------------------------------
def vision_forward(params, img):
    """img: (B, C, H, W) float in [0, 1] (do_rescale=False upstream)."""
    B = img.shape[0]
    P = PATCH_SIZE
    n = IMAGE_SIZE // P

    # Patchify (host-style glue): (B,C,H,W) -> (B*num_patches, C*P*P).
    # The (x-0.5)/0.5 normalization is fused into the patch-embed kernel.
    patches = (img.reshape(B, NUM_CHANNELS, n, P, n, P)
                  .transpose(0, 2, 4, 1, 3, 5)
                  .reshape(B * n * n, PATCH_DIM))

    x = pallas_patch_embed(patches, params["patch_w"], params["patch_b"])
    x = x.reshape(B, NUM_PATCHES, HIDDEN)
    cls = jnp.broadcast_to(params["cls"], (B, 1, HIDDEN))
    x = jnp.concatenate([cls, x], axis=1) + params["pos"]        # (B, T, H) f32
    x = x.astype(ACT_DTYPE)                                      # bf16 transport

    scale = 1.0 / math.sqrt(HEAD_DIM)
    for lp in params["layers"]:
        x = pallas_encoder_layer(x, lp, scale=scale)             # one call/layer

    # Final LayerNorm + pooler + head on the CLS token only — LayerNorm is
    # per-row, so restricting it to the pooled row is exact.
    return pallas_pool_head(x[:, 0, :], params)


# ----------------------------------- main ------------------------------------
if __name__ == "__main__":
    key = jax.random.PRNGKey(0)
    k_params, k_img = jax.random.split(key)

    params = init_params(k_params)
    B = 2
    img = jax.random.uniform(k_img, (B, NUM_CHANNELS, IMAGE_SIZE, IMAGE_SIZE),
                             jnp.float32)

    fwd = jax.jit(vision_forward)
    out = jax.block_until_ready(fwd(params, img))

    assert out.shape == (B, NUM_CLASSES), out.shape
    assert bool(jnp.all(jnp.isfinite(out)))
    print("KERNEL_OK")
</pallas_src>

<mosaic_0001>
module attributes {stable_mosaic.version = 11 : i64} {
  func.func @_patch_embed_kernel(%arg0: i32, %arg1: memref<16x108xf32, #tpu.memory_space<vmem>>, %arg2: memref<108x128xbf16, #tpu.memory_space<vmem>>, %arg3: memref<1x128xf32, #tpu.memory_space<vmem>>, %arg4: memref<16x128xf32, #tpu.memory_space<vmem>>) attributes {dimension_semantics = [#tpu.dimension_semantics<parallel>], iteration_bounds = array<i64: 2>, scalar_prefetch = 0 : i64, scratch_operands = 0 : i64, tpu.core_type = #tpu.core_type<tc>, window_params = [{transform_indices = @transform_0, window_bounds = array<i64: 16, 108>}, {pipeline_mode = #tpu.pipeline_mode<synchronous>, transform_indices = @transform_1, window_bounds = array<i64: 108, 128>}, {pipeline_mode = #tpu.pipeline_mode<synchronous>, transform_indices = @transform_2, window_bounds = array<i64: 1, 128>}, {transform_indices = @transform_3, window_bounds = array<i64: 16, 128>}]} {
    %c0 = arith.constant 0 : index
    %c0_0 = arith.constant 0 : index
    %0 = vector.load %arg1[%c0, %c0_0] : memref<16x108xf32, #tpu.memory_space<vmem>>, vector<16x108xf32>
    %cst = arith.constant 2.000000e+00 : f32
    %1 = vector.broadcast %cst : f32 to vector<16x108xf32>
    %2 = arith.mulf %1, %0 : vector<16x108xf32>
    %cst_1 = arith.constant 1.000000e+00 : f32
    %3 = vector.broadcast %cst_1 : f32 to vector<16x108xf32>
    %4 = arith.subf %2, %3 : vector<16x108xf32>
    %c0_2 = arith.constant 0 : index
    %c0_3 = arith.constant 0 : index
    %5 = vector.load %arg2[%c0_2, %c0_3] : memref<108x128xbf16, #tpu.memory_space<vmem>>, vector<108x128xbf16>
    %6 = arith.truncf %4 : vector<16x108xf32> to vector<16x108xbf16>
    %cst_4 = arith.constant dense<0.000000e+00> : vector<16x128xf32>
    %7 = tpu.matmul %6, %5, %cst_4 {dimension_numbers = #tpu.dot_dimension_numbers<[1], [0], [0], [1], [0, 0, 1, 1], [], []>} : vector<16x108xbf16>, vector<108x128xbf16>, vector<16x128xf32> -> vector<16x128xf32>
    %c0_5 = arith.constant 0 : index
    %c0_6 = arith.constant 0 : index
    %8 = vector.load %arg3[%c0_5, %c0_6] : memref<1x128xf32, #tpu.memory_space<vmem>>, vector<1x128xf32>
    %9 = vector.broadcast %8 : vector<1x128xf32> to vector<16x128xf32>
    %10 = arith.addf %7, %9 : vector<16x128xf32>
    %c0_7 = arith.constant 0 : index
    %c0_8 = arith.constant 0 : index
    %11 = vector.load %arg4[%c0_7, %c0_8] : memref<16x128xf32, #tpu.memory_space<vmem>>, vector<16x128xf32>
    tpu.vector_store %arg4[%c0_7, %c0_8], %10 {strides = array<i32>} : memref<16x128xf32, #tpu.memory_space<vmem>>, vector<16x128xf32>,
    return
  }
  func.func @transform_0(%arg0: i32) -> (i32, i32) {
    %c0_i32 = arith.constant 0 : i32
    %c0_i32_0 = arith.constant 0 : i32
    return %arg0, %c0_i32 : i32, i32
  }
  func.func @transform_1(%arg0: i32) -> (i32, i32) {
    %c0_i32 = arith.constant 0 : i32
    %c0_i32_0 = arith.constant 0 : i32
    %c0_i32_1 = arith.constant 0 : i32
    return %c0_i32, %c0_i32_0 : i32, i32
  }
  func.func @transform_2(%arg0: i32) -> (i32, i32) {
    %c0_i32 = arith.constant 0 : i32
    %c0_i32_0 = arith.constant 0 : i32
    %c0_i32_1 = arith.constant 0 : i32
    return %c0_i32, %c0_i32_0 : i32, i32
  }
  func.func @transform_3(%arg0: i32) -> (i32, i32) {
    %c0_i32 = arith.constant 0 : i32
    %c0_i32_0 = arith.constant 0 : i32
    return %arg0, %c0_i32 : i32, i32
  }
}

module attributes {stable_mosaic.version = 11 : i64} {
  func.func @_pool_head_kernel(%arg0: i32, %arg1: memref<2x128xbf16, #tpu.memory_space<vmem>>, %arg2: memref<1x128xf32, #tpu.memory_space<vmem>>, %arg3: memref<1x128xf32, #tpu.memory_space<vmem>>, %arg4: memref<128x128xbf16, #tpu.memory_space<vmem>>, %arg5: memref<1x128xf32, #tpu.memory_space<vmem>>, %arg6: memref<128x512xbf16, #tpu.memory_space<vmem>>, %arg7: memref<1x512xf32, #tpu.memory_space<vmem>>, %arg8: memref<512x256xbf16, #tpu.memory_space<vmem>>, %arg9: memref<1x256xf32, #tpu.memory_space<vmem>>, %arg10: memref<256x64xbf16, #tpu.memory_space<vmem>>, %arg11: memref<1x64xf32, #tpu.memory_space<vmem>>, %arg12: memref<64x16xbf16, #tpu.memory_space<vmem>>, %arg13: memref<1x16xf32, #tpu.memory_space<vmem>>, %arg14: memref<2x16xf32, #tpu.memory_space<vmem>>) attributes {dimension_semantics = [#tpu.dimension_semantics<arbitrary>], iteration_bounds = array<i64: 1>, scalar_prefetch = 0 : i64, scratch_operands = 0 : i64, tpu.core_type = #tpu.core_type<tc>, window_params = [{pipeline_mode = #tpu.pipeline_mode<synchronous>, transform_indices = @transform_0, window_bounds = array<i64: 2, 128>}, {pipeline_mode = #tpu.pipeline_mode<synchronous>, transform_indices = @transform_1, window_bounds = array<i64: 1, 128>}, {pipeline_mode = #tpu.pipeline_mode<synchronous>, transform_indices = @transform_2, window_bounds = array<i64: 1, 128>}, {pipeline_mode = #tpu.pipeline_mode<synchronous>, transform_indices = @transform_3, window_bounds = array<i64: 128, 128>}, {pipeline_mode = #tpu.pipeline_mode<synchronous>, transform_indices = @transform_4, window_bounds = array<i64: 1, 128>}, {pipeline_mode = #tpu.pipeline_mode<synchronous>, transform_indices = @transform_5, window_bounds = array<i64: 128, 512>}, {pipeline_mode = #tpu.pipeline_mode<synchronous>, transform_indices = @transform_6, window_bounds = array<i64: 1, 512>}, {pipeline_mode = #tpu.pipeline_mode<synchronous>, transform_indices = @transform_7, window_bounds = array<i64: 512, 256>}, {pipeline_mode = #tpu.pipeline_mode<synchronous>, transform_indices = @transform_8, window_bounds = array<i64: 1, 256>}, {pipeline_mode = #tpu.pipeline_mode<synchronous>, transform_indices = @transform_9, window_bounds = array<i64: 256, 64>}, {pipeline_mode = #tpu.pipeline_mode<synchronous>, transform_indices = @transform_10, window_bounds = array<i64: 1, 64>}, {pipeline_mode = #tpu.pipeline_mode<synchronous>, transform_indices = @transform_11, window_bounds = array<i64: 64, 16>}, {pipeline_mode = #tpu.pipeline_mode<synchronous>, transform_indices = @transform_12, window_bounds = array<i64: 1, 16>}, {pipeline_mode = #tpu.pipeline_mode<synchronous>, transform_indices = @transform_13, window_bounds = array<i64: 2, 16>}]} {
    %c0 = arith.constant 0 : index
    %c0_0 = arith.constant 0 : index
    %0 = vector.load %arg1[%c0, %c0_0] : memref<2x128xbf16, #tpu.memory_space<vmem>>, vector<2x128xbf16>
    %1 = arith.extf %0 : vector<2x128xbf16> to vector<2x128xf32>
    %c0_1 = arith.constant 0 : index
    %c0_2 = arith.constant 0 : index
    %2 = vector.load %arg2[%c0_1, %c0_2] : memref<1x128xf32, #tpu.memory_space<vmem>>, vector<1x128xf32>
    %c0_3 = arith.constant 0 : index
    %c0_4 = arith.constant 0 : index
    %3 = vector.load %arg3[%c0_3, %c0_4] : memref<1x128xf32, #tpu.memory_space<vmem>>, vector<1x128xf32>
    %cst = arith.constant dense<0.000000e+00> : vector<2xf32>
    %4 = vector.multi_reduction <add>, %1, %cst [1] : vector<2x128xf32> to vector<2xf32>
    %5 = vector.shape_cast %4 : vector<2xf32> to vector<2x1xf32>
    %cst_5 = arith.constant 1.280000e+02 : f32
    %6 = vector.broadcast %cst_5 : f32 to vector<2x1xf32>
    %7 = arith.divf %5, %6 : vector<2x1xf32>
    %8 = vector.broadcast %7 : vector<2x1xf32> to vector<2x128xf32>
    %9 = arith.subf %1, %8 : vector<2x128xf32>
    %10 = arith.mulf %9, %9 : vector<2x128xf32>
    %cst_6 = arith.constant dense<0.000000e+00> : vector<2xf32>
    %11 = vector.multi_reduction <add>, %10, %cst_6 [1] : vector<2x128xf32> to vector<2xf32>
    %12 = vector.shape_cast %11 : vector<2xf32> to vector<2x1xf32>
    %cst_7 = arith.constant 1.280000e+02 : f32
    %13 = vector.broadcast %cst_7 : f32 to vector<2x1xf32>
    %14 = arith.divf %12, %13 : vector<2x1xf32>
    %15 = vector.broadcast %7 : vector<2x1xf32> to vector<2x128xf32>
    %16 = arith.subf %1, %15 : vector<2x128xf32>
    %cst_8 = arith.constant 9.99999996E-13 : f32
    %17 = vector.broadcast %cst_8 : f32 to vector<2x1xf32>
    %18 = arith.addf %14, %17 : vector<2x1xf32>
    %19 = math.rsqrt %18 : vector<2x1xf32>
    %20 = vector.broadcast %19 : vector<2x1xf32> to vector<2x128xf32>
    %21 = arith.mulf %16, %20 : vector<2x128xf32>
    %22 = vector.broadcast %2 : vector<1x128xf32> to vector<2x128xf32>
    %23 = arith.mulf %21, %22 : vector<2x128xf32>
    %24 = vector.broadcast %3 : vector<1x128xf32> to vector<2x128xf32>
    %25 = arith.addf %23, %24 : vector<2x128xf32>
    %c0_9 = arith.constant 0 : index
    %c0_10 = arith.constant 0 : index
    %26 = vector.load %arg4[%c0_9, %c0_10] : memref<128x128xbf16, #tpu.memory_space<vmem>>, vector<128x128xbf16>
    %27 = arith.truncf %25 : vector<2x128xf32> to vector<2x128xbf16>
    %cst_11 = arith.constant dense<0.000000e+00> : vector<2x128xf32>
    %28 = tpu.matmul %27, %26, %cst_11 {dimension_numbers = #tpu.dot_dimension_numbers<[1], [0], [0], [1], [0, 0, 1, 1], [], []>} : vector<2x128xbf16>, vector<128x128xbf16>, vector<2x128xf32> -> vector<2x128xf32>
    %c0_12 = arith.constant 0 : index
    %c0_13 = arith.constant 0 : index
    %29 = vector.load %arg5[%c0_12, %c0_13] : memref<1x128xf32, #tpu.memory_space<vmem>>, vector<1x128xf32>
    %30 = vector.broadcast %29 : vector<1x128xf32> to vector<2x128xf32>
    %31 = arith.addf %28, %30 : vector<2x128xf32>
    %32 = math.tanh %31 : vector<2x128xf32>
    %c0_14 = arith.constant 0 : index
    %c0_15 = arith.constant 0 : index
    %33 = vector.load %arg6[%c0_14, %c0_15] : memref<128x512xbf16, #tpu.memory_space<vmem>>, vector<128x512xbf16>
    %34 = arith.truncf %32 : vector<2x128xf32> to vector<2x128xbf16>
    %cst_16 = arith.constant dense<0.000000e+00> : vector<2x512xf32>
    %35 = tpu.matmul %34, %33, %cst_16 {dimension_numbers = #tpu.dot_dimension_numbers<[1], [0], [0], [1], [0, 0, 1, 1], [], []>} : vector<2x128xbf16>, vector<128x512xbf16>, vector<2x512xf32> -> vector<2x512xf32>
    %c0_17 = arith.constant 0 : index
    %c0_18 = arith.constant 0 : index
    %36 = vector.load %arg7[%c0_17, %c0_18] : memref<1x512xf32, #tpu.memory_space<vmem>>, vector<1x512xf32>
    %37 = vector.broadcast %36 : vector<1x512xf32> to vector<2x512xf32>
    %38 = arith.addf %35, %37 : vector<2x512xf32>
    %cst_19 = arith.constant 0.000000e+00 : f32
    %39 = vector.broadcast %cst_19 : f32 to vector<2x512xf32>
    %40 = arith.subf %39, %38 : vector<2x512xf32>
    %41 = math.exp %40 : vector<2x512xf32>
    %cst_20 = arith.constant 1.000000e+00 : f32
    %42 = vector.broadcast %cst_20 : f32 to vector<2x512xf32>
    %43 = arith.addf %42, %41 : vector<2x512xf32>
    %cst_21 = arith.constant 1.000000e+00 : f32
    %44 = vector.broadcast %cst_21 : f32 to vector<2x512xf32>
    %45 = arith.divf %44, %43 : vector<2x512xf32>
    %46 = arith.mulf %38, %45 : vector<2x512xf32>
    %c0_22 = arith.constant 0 : index
    %c0_23 = arith.constant 0 : index
    %47 = vector.load %arg8[%c0_22, %c0_23] : memref<512x256xbf16, #tpu.memory_space<vmem>>, vector<512x256xbf16>
    %48 = arith.truncf %46 : vector<2x512xf32> to vector<2x512xbf16>
    %cst_24 = arith.constant dense<0.000000e+00> : vector<2x256xf32>
    %49 = tpu.matmul %48, %47, %cst_24 {dimension_numbers = #tpu.dot_dimension_numbers<[1], [0], [0], [1], [0, 0, 1, 1], [], []>} : vector<2x512xbf16>, vector<512x256xbf16>, vector<2x256xf32> -> vector<2x256xf32>
    %c0_25 = arith.constant 0 : index
    %c0_26 = arith.constant 0 : index
    %50 = vector.load %arg9[%c0_25, %c0_26] : memref<1x256xf32, #tpu.memory_space<vmem>>, vector<1x256xf32>
    %51 = vector.broadcast %50 : vector<1x256xf32> to vector<2x256xf32>
    %52 = arith.addf %49, %51 : vector<2x256xf32>
    %cst_27 = arith.constant 0.000000e+00 : f32
    %53 = vector.broadcast %cst_27 : f32 to vector<2x256xf32>
    %54 = arith.subf %53, %52 : vector<2x256xf32>
    %55 = math.exp %54 : vector<2x256xf32>
    %cst_28 = arith.constant 1.000000e+00 : f32
    %56 = vector.broadcast %cst_28 : f32 to vector<2x256xf32>
    %57 = arith.addf %56, %55 : vector<2x256xf32>
    %cst_29 = arith.constant 1.000000e+00 : f32
    %58 = vector.broadcast %cst_29 : f32 to vector<2x256xf32>
    %59 = arith.divf %58, %57 : vector<2x256xf32>
    %60 = arith.mulf %52, %59 : vector<2x256xf32>
    %c0_30 = arith.constant 0 : index
    %c0_31 = arith.constant 0 : index
    %61 = vector.load %arg10[%c0_30, %c0_31] : memref<256x64xbf16, #tpu.memory_space<vmem>>, vector<256x64xbf16>
    %62 = arith.truncf %60 : vector<2x256xf32> to vector<2x256xbf16>
    %cst_32 = arith.constant dense<0.000000e+00> : vector<2x64xf32>
    %63 = tpu.matmul %62, %61, %cst_32 {dimension_numbers = #tpu.dot_dimension_numbers<[1], [0], [0], [1], [0, 0, 1, 1], [], []>} : vector<2x256xbf16>, vector<256x64xbf16>, vector<2x64xf32> -> vector<2x64xf32>
    %c0_33 = arith.constant 0 : index
    %c0_34 = arith.constant 0 : index
    %64 = vector.load %arg11[%c0_33, %c0_34] : memref<1x64xf32, #tpu.memory_space<vmem>>, vector<1x64xf32>
    %65 = vector.broadcast %64 : vector<1x64xf32> to vector<2x64xf32>
    %66 = arith.addf %63, %65 : vector<2x64xf32>
    %cst_35 = arith.constant 0.000000e+00 : f32
    %67 = vector.broadcast %cst_35 : f32 to vector<2x64xf32>
    %68 = arith.subf %67, %66 : vector<2x64xf32>
    %69 = math.exp %68 : vector<2x64xf32>
    %cst_36 = arith.constant 1.000000e+00 : f32
    %70 = vector.broadcast %cst_36 : f32 to vector<2x64xf32>
    %71 = arith.addf %70, %69 : vector<2x64xf32>
    %cst_37 = arith.constant 1.000000e+00 : f32
    %72 = vector.broadcast %cst_37 : f32 to vector<2x64xf32>
    %73 = arith.divf %72, %71 : vector<2x64xf32>
    %74 = arith.mulf %66, %73 : vector<2x64xf32>
    %c0_38 = arith.constant 0 : index
    %c0_39 = arith.constant 0 : index
    %75 = vector.load %arg12[%c0_38, %c0_39] : memref<64x16xbf16, #tpu.memory_space<vmem>>, vector<64x16xbf16>
    %76 = arith.truncf %74 : vector<2x64xf32> to vector<2x64xbf16>
    %cst_40 = arith.constant dense<0.000000e+00> : vector<2x16xf32>
    %77 = tpu.matmul %76, %75, %cst_40 {dimension_numbers = #tpu.dot_dimension_numbers<[1], [0], [0], [1], [0, 0, 1, 1], [], []>} : vector<2x64xbf16>, vector<64x16xbf16>, vector<2x16xf32> -> vector<2x16xf32>
    %c0_41 = arith.constant 0 : index
    %c0_42 = arith.constant 0 : index
    %78 = vector.load %arg13[%c0_41, %c0_42] : memref<1x16xf32, #tpu.memory_space<vmem>>, vector<1x16xf32>
    %79 = vector.broadcast %78 : vector<1x16xf32> to vector<2x16xf32>
    %80 = arith.addf %77, %79 : vector<2x16xf32>
    %c0_43 = arith.constant 0 : index
    %c0_44 = arith.constant 0 : index
    %81 = vector.load %arg14[%c0_43, %c0_44] : memref<2x16xf32, #tpu.memory_space<vmem>>, vector<2x16xf32>
    tpu.vector_store %arg14[%c0_43, %c0_44], %80 {strides = array<i32>} : memref<2x16xf32, #tpu.memory_space<vmem>>, vector<2x16xf32>,
    return
  }
  func.func @transform_0(%arg0: i32) -> (i32, i32) {
    %c0_i32 = arith.constant 0 : i32
    %c0_i32_0 = arith.constant 0 : i32
    %c0_i32_1 = arith.constant 0 : i32
    return %c0_i32, %c0_i32_0 : i32, i32
  }
  func.func @transform_1(%arg0: i32) -> (i32, i32) {
    %c0_i32 = arith.constant 0 : i32
    %c0_i32_0 = arith.constant 0 : i32
    %c0_i32_1 = arith.constant 0 : i32
    return %c0_i32, %c0_i32_0 : i32, i32
  }
  func.func @transform_2(%arg0: i32) -> (i32, i32) {
    %c0_i32 = arith.constant 0 : i32
    %c0_i32_0 = arith.constant 0 : i32
    %c0_i32_1 = arith.constant 0 : i32
    return %c0_i32, %c0_i32_0 : i32, i32
  }
  func.func @transform_3(%arg0: i32) -> (i32, i32) {
    %c0_i32 = arith.constant 0 : i32
    %c0_i32_0 = arith.constant 0 : i32
    %c0_i32_1 = arith.constant 0 : i32
    return %c0_i32, %c0_i32_0 : i32, i32
  }
  func.func @transform_4(%arg0: i32) -> (i32, i32) {
    %c0_i32 = arith.constant 0 : i32
    %c0_i32_0 = arith.constant 0 : i32
    %c0_i32_1 = arith.constant 0 : i32
    return %c0_i32, %c0_i32_0 : i32, i32
  }
  func.func @transform_5(%arg0: i32) -> (i32, i32) {
    %c0_i32 = arith.constant 0 : i32
    %c0_i32_0 = arith.constant 0 : i32
    %c0_i32_1 = arith.constant 0 : i32
    return %c0_i32, %c0_i32_0 : i32, i32
  }
  func.func @transform_6(%arg0: i32) -> (i32, i32) {
    %c0_i32 = arith.constant 0 : i32
    %c0_i32_0 = arith.constant 0 : i32
    %c0_i32_1 = arith.constant 0 : i32
    return %c0_i32, %c0_i32_0 : i32, i32
  }
  func.func @transform_7(%arg0: i32) -> (i32, i32) {
    %c0_i32 = arith.constant 0 : i32
    %c0_i32_0 = arith.constant 0 : i32
    %c0_i32_1 = arith.constant 0 : i32
    return %c0_i32, %c0_i32_0 : i32, i32
  }
  func.func @transform_8(%arg0: i32) -> (i32, i32) {
    %c0_i32 = arith.constant 0 : i32
    %c0_i32_0 = arith.constant 0 : i32
    %c0_i32_1 = arith.constant 0 : i32
    return %c0_i32, %c0_i32_0 : i32, i32
  }
  func.func @transform_9(%arg0: i32) -> (i32, i32) {
    %c0_i32 = arith.constant 0 : i32
    %c0_i32_0 = arith.constant 0 : i32
    %c0_i32_1 = arith.constant 0 : i32
    return %c0_i32, %c0_i32_0 : i32, i32
  }
  func.func @transform_10(%arg0: i32) -> (i32, i32) {
    %c0_i32 = arith.constant 0 : i32
    %c0_i32_0 = arith.constant 0 : i32
    %c0_i32_1 = arith.constant 0 : i32
    return %c0_i32, %c0_i32_0 : i32, i32
  }
  func.func @transform_11(%arg0: i32) -> (i32, i32) {
    %c0_i32 = arith.constant 0 : i32
    %c0_i32_0 = arith.constant 0 : i32
    %c0_i32_1 = arith.constant 0 : i32
    return %c0_i32, %c0_i32_0 : i32, i32
  }
  func.func @transform_12(%arg0: i32) -> (i32, i32) {
    %c0_i32 = arith.constant 0 : i32
    %c0_i32_0 = arith.constant 0 : i32
    %c0_i32_1 = arith.constant 0 : i32
    return %c0_i32, %c0_i32_0 : i32, i32
  }
  func.func @transform_13(%arg0: i32) -> (i32, i32) {
    %c0_i32 = arith.constant 0 : i32
    %c0_i32_0 = arith.constant 0 : i32
    %c0_i32_1 = arith.constant 0 : i32
    return %c0_i32, %c0_i32_0 : i32, i32
  }
}

module attributes {stable_mosaic.version = 11 : i64} {
  func.func @_encoder_layer_kernel(%arg0: i32, %arg1: memref<1x17x128xbf16, #tpu.memory_space<vmem>>, %arg2: memref<1x128xf32, #tpu.memory_space<vmem>>, %arg3: memref<1x128xf32, #tpu.memory_space<vmem>>, %arg4: memref<128x384xbf16, #tpu.memory_space<vmem>>, %arg5: memref<1x384xf32, #tpu.memory_space<vmem>>, %arg6: memref<128x128xbf16, #tpu.memory_space<vmem>>, %arg7: memref<1x128xf32, #tpu.memory_space<vmem>>, %arg8: memref<1x128xf32, #tpu.memory_space<vmem>>, %arg9: memref<1x128xf32, #tpu.memory_space<vmem>>, %arg10: memref<128x512xbf16, #tpu.memory_space<vmem>>, %arg11: memref<1x512xf32, #tpu.memory_space<vmem>>, %arg12: memref<512x128xbf16, #tpu.memory_space<vmem>>, %arg13: memref<1x128xf32, #tpu.memory_space<vmem>>, %arg14: memref<1x17x128xbf16, #tpu.memory_space<vmem>>) attributes {dimension_semantics = [#tpu.dimension_semantics<parallel>], iteration_bounds = array<i64: 2>, scalar_prefetch = 0 : i64, scratch_operands = 0 : i64, tpu.core_type = #tpu.core_type<tc>, window_params = [{transform_indices = @transform_0, window_bounds = array<i64: 1, 17, 128>}, {pipeline_mode = #tpu.pipeline_mode<synchronous>, transform_indices = @transform_1, window_bounds = array<i64: 1, 128>}, {pipeline_mode = #tpu.pipeline_mode<synchronous>, transform_indices = @transform_2, window_bounds = array<i64: 1, 128>}, {pipeline_mode = #tpu.pipeline_mode<synchronous>, transform_indices = @transform_3, window_bounds = array<i64: 128, 384>}, {pipeline_mode = #tpu.pipeline_mode<synchronous>, transform_indices = @transform_4, window_bounds = array<i64: 1, 384>}, {pipeline_mode = #tpu.pipeline_mode<synchronous>, transform_indices = @transform_5, window_bounds = array<i64: 128, 128>}, {pipeline_mode = #tpu.pipeline_mode<synchronous>, transform_indices = @transform_6, window_bounds = array<i64: 1, 128>}, {pipeline_mode = #tpu.pipeline_mode<synchronous>, transform_indices = @transform_7, window_bounds = array<i64: 1, 128>}, {pipeline_mode = #tpu.pipeline_mode<synchronous>, transform_indices = @transform_8, window_bounds = array<i64: 1, 128>}, {pipeline_mode = #tpu.pipeline_mode<synchronous>, transform_indices = @transform_9, window_bounds = array<i64: 128, 512>}, {pipeline_mode = #tpu.pipeline_mode<synchronous>, transform_indices = @transform_10, window_bounds = array<i64: 1, 512>}, {pipeline_mode = #tpu.pipeline_mode<synchronous>, transform_indices = @transform_11, window_bounds = array<i64: 512, 128>}, {pipeline_mode = #tpu.pipeline_mode<synchronous>, transform_indices = @transform_12, window_bounds = array<i64: 1, 128>}, {transform_indices = @transform_13, window_bounds = array<i64: 1, 17, 128>}]} {
    %c0 = arith.constant 0 : index
    %c0_0 = arith.constant 0 : index
    %c0_1 = arith.constant 0 : index
    %0 = vector.load %arg1[%c0, %c0_0, %c0_1] : memref<1x17x128xbf16, #tpu.memory_space<vmem>>, vector<1x17x128xbf16>
    %1 = vector.shape_cast %0 : vector<1x17x128xbf16> to vector<17x128xbf16>
    %2 = arith.extf %1 : vector<17x128xbf16> to vector<17x128xf32>
    %c0_2 = arith.constant 0 : index
    %c0_3 = arith.constant 0 : index
    %3 = vector.load %arg2[%c0_2, %c0_3] : memref<1x128xf32, #tpu.memory_space<vmem>>, vector<1x128xf32>
    %c0_4 = arith.constant 0 : index
    %c0_5 = arith.constant 0 : index
    %4 = vector.load %arg3[%c0_4, %c0_5] : memref<1x128xf32, #tpu.memory_space<vmem>>, vector<1x128xf32>
    %cst = arith.constant dense<0.000000e+00> : vector<17xf32>
    %5 = vector.multi_reduction <add>, %2, %cst [1] : vector<17x128xf32> to vector<17xf32>
    %6 = vector.shape_cast %5 : vector<17xf32> to vector<17x1xf32>
    %cst_6 = arith.constant 1.280000e+02 : f32
    %7 = vector.broadcast %cst_6 : f32 to vector<17x1xf32>
    %8 = arith.divf %6, %7 : vector<17x1xf32>
    %9 = vector.broadcast %8 : vector<17x1xf32> to vector<17x128xf32>
    %10 = arith.subf %2, %9 : vector<17x128xf32>
    %11 = arith.mulf %10, %10 : vector<17x128xf32>
    %cst_7 = arith.constant dense<0.000000e+00> : vector<17xf32>
    %12 = vector.multi_reduction <add>, %11, %cst_7 [1] : vector<17x128xf32> to vector<17xf32>
    %13 = vector.shape_cast %12 : vector<17xf32> to vector<17x1xf32>
    %cst_8 = arith.constant 1.280000e+02 : f32
    %14 = vector.broadcast %cst_8 : f32 to vector<17x1xf32>
    %15 = arith.divf %13, %14 : vector<17x1xf32>
    %16 = vector.broadcast %8 : vector<17x1xf32> to vector<17x128xf32>
    %17 = arith.subf %2, %16 : vector<17x128xf32>
    %cst_9 = arith.constant 9.99999996E-13 : f32
    %18 = vector.broadcast %cst_9 : f32 to vector<17x1xf32>
    %19 = arith.addf %15, %18 : vector<17x1xf32>
    %20 = math.rsqrt %19 : vector<17x1xf32>
    %21 = vector.broadcast %20 : vector<17x1xf32> to vector<17x128xf32>
    %22 = arith.mulf %17, %21 : vector<17x128xf32>
    %23 = vector.broadcast %3 : vector<1x128xf32> to vector<17x128xf32>
    %24 = arith.mulf %22, %23 : vector<17x128xf32>
    %25 = vector.broadcast %4 : vector<1x128xf32> to vector<17x128xf32>
    %26 = arith.addf %24, %25 : vector<17x128xf32>
    %c0_10 = arith.constant 0 : index
    %c0_11 = arith.constant 0 : index
    %27 = vector.load %arg4[%c0_10, %c0_11] : memref<128x384xbf16, #tpu.memory_space<vmem>>, vector<128x384xbf16>
    %28 = arith.truncf %26 : vector<17x128xf32> to vector<17x128xbf16>
    %cst_12 = arith.constant dense<0.000000e+00> : vector<17x384xf32>
    %29 = tpu.matmul %28, %27, %cst_12 {dimension_numbers = #tpu.dot_dimension_numbers<[1], [0], [0], [1], [0, 0, 1, 1], [], []>} : vector<17x128xbf16>, vector<128x384xbf16>, vector<17x384xf32> -> vector<17x384xf32>
    %c0_13 = arith.constant 0 : index
    %c0_14 = arith.constant 0 : index
    %30 = vector.load %arg5[%c0_13, %c0_14] : memref<1x384xf32, #tpu.memory_space<vmem>>, vector<1x384xf32>
    %31 = vector.broadcast %30 : vector<1x384xf32> to vector<17x384xf32>
    %32 = arith.addf %29, %31 : vector<17x384xf32>
    %c0_15 = arith.constant 0 : index
    %c0_16 = arith.constant 0 : index
    %33 = vector.load %arg6[%c0_15, %c0_16] : memref<128x128xbf16, #tpu.memory_space<vmem>>, vector<128x128xbf16>
    %c0_17 = arith.constant 0 : index
    %c0_18 = arith.constant 0 : index
    %34 = vector.load %arg7[%c0_17, %c0_18] : memref<1x128xf32, #tpu.memory_space<vmem>>, vector<1x128xf32>
    %35 = vector.broadcast %34 : vector<1x128xf32> to vector<17x128xf32>
    %36 = arith.addf %2, %35 : vector<17x128xf32>
    %37 = vector.extract_strided_slice %32 {offsets = [0, 0], sizes = [17, 32], strides = [1, 1]} : vector<17x384xf32> to vector<17x32xf32>
    %38 = vector.extract_strided_slice %32 {offsets = [0, 128], sizes = [17, 32], strides = [1, 1]} : vector<17x384xf32> to vector<17x32xf32>
    %39 = vector.extract_strided_slice %32 {offsets = [0, 256], sizes = [17, 32], strides = [1, 1]} : vector<17x384xf32> to vector<17x32xf32>
    %40 = arith.truncf %37 : vector<17x32xf32> to vector<17x32xbf16>
    %41 = arith.truncf %38 : vector<17x32xf32> to vector<17x32xbf16>
    %cst_19 = arith.constant dense<0.000000e+00> : vector<17x17xf32>
    %42 = tpu.matmul %40, %41, %cst_19 {dimension_numbers = #tpu.dot_dimension_numbers<[1], [1], [0], [0], [0, 0, 1, 0], [], []>} : vector<17x32xbf16>, vector<17x32xbf16>, vector<17x17xf32> -> vector<17x17xf32>
    %cst_20 = arith.constant 0.176776692 : f32
    %43 = vector.broadcast %cst_20 : f32 to vector<17x17xf32>
    %44 = arith.mulf %42, %43 : vector<17x17xf32>
    %cst_21 = arith.constant dense<0xFF800000> : vector<17xf32>
    %45 = vector.multi_reduction <maximumf>, %44, %cst_21 [1] : vector<17x17xf32> to vector<17xf32>
    %46 = vector.shape_cast %45 : vector<17xf32> to vector<17x1xf32>
    %47 = vector.broadcast %46 : vector<17x1xf32> to vector<17x17xf32>
    %48 = arith.subf %44, %47 : vector<17x17xf32>
    %49 = math.exp %48 : vector<17x17xf32>
    %cst_22 = arith.constant dense<0.000000e+00> : vector<17xf32>
    %50 = vector.multi_reduction <add>, %49, %cst_22 [1] : vector<17x17xf32> to vector<17xf32>
    %51 = vector.shape_cast %50 : vector<17xf32> to vector<17x1xf32>
    %52 = vector.broadcast %51 : vector<17x1xf32> to vector<17x17xf32>
    %53 = arith.divf %49, %52 : vector<17x17xf32>
    %54 = arith.truncf %53 : vector<17x17xf32> to vector<17x17xbf16>
    %55 = arith.truncf %39 : vector<17x32xf32> to vector<17x32xbf16>
    %cst_23 = arith.constant dense<0.000000e+00> : vector<17x32xf32>
    %56 = tpu.matmul %54, %55, %cst_23 {dimension_numbers = #tpu.dot_dimension_numbers<[1], [0], [0], [1], [0, 0, 1, 1], [], []>} : vector<17x17xbf16>, vector<17x32xbf16>, vector<17x32xf32> -> vector<17x32xf32>
    %57 = vector.extract_strided_slice %33 {offsets = [0, 0], sizes = [32, 128], strides = [1, 1]} : vector<128x128xbf16> to vector<32x128xbf16>
    %58 = arith.truncf %56 : vector<17x32xf32> to vector<17x32xbf16>
    %cst_24 = arith.constant dense<0.000000e+00> : vector<17x128xf32>
    %59 = tpu.matmul %58, %57, %cst_24 {dimension_numbers = #tpu.dot_dimension_numbers<[1], [0], [0], [1], [0, 0, 1, 1], [], []>} : vector<17x32xbf16>, vector<32x128xbf16>, vector<17x128xf32> -> vector<17x128xf32>
    %60 = arith.addf %36, %59 : vector<17x128xf32>
    %61 = vector.extract_strided_slice %32 {offsets = [0, 32], sizes = [17, 32], strides = [1, 1]} : vector<17x384xf32> to vector<17x32xf32>
    %62 = vector.extract_strided_slice %32 {offsets = [0, 160], sizes = [17, 32], strides = [1, 1]} : vector<17x384xf32> to vector<17x32xf32>
    %63 = vector.extract_strided_slice %32 {offsets = [0, 288], sizes = [17, 32], strides = [1, 1]} : vector<17x384xf32> to vector<17x32xf32>
    %64 = arith.truncf %61 : vector<17x32xf32> to vector<17x32xbf16>
    %65 = arith.truncf %62 : vector<17x32xf32> to vector<17x32xbf16>
    %cst_25 = arith.constant dense<0.000000e+00> : vector<17x17xf32>
    %66 = tpu.matmul %64, %65, %cst_25 {dimension_numbers = #tpu.dot_dimension_numbers<[1], [1], [0], [0], [0, 0, 1, 0], [], []>} : vector<17x32xbf16>, vector<17x32xbf16>, vector<17x17xf32> -> vector<17x17xf32>
    %cst_26 = arith.constant 0.176776692 : f32
    %67 = vector.broadcast %cst_26 : f32 to vector<17x17xf32>
    %68 = arith.mulf %66, %67 : vector<17x17xf32>
    %cst_27 = arith.constant dense<0xFF800000> : vector<17xf32>
    %69 = vector.multi_reduction <maximumf>, %68, %cst_27 [1] : vector<17x17xf32> to vector<17xf32>
    %70 = vector.shape_cast %69 : vector<17xf32> to vector<17x1xf32>
    %71 = vector.broadcast %70 : vector<17x1xf32> to vector<17x17xf32>
    %72 = arith.subf %68, %71 : vector<17x17xf32>
    %73 = math.exp %72 : vector<17x17xf32>
    %cst_28 = arith.constant dense<0.000000e+00> : vector<17xf32>
    %74 = vector.multi_reduction <add>, %73, %cst_28 [1] : vector<17x17xf32> to vector<17xf32>
    %75 = vector.shape_cast %74 : vector<17xf32> to vector<17x1xf32>
    %76 = vector.broadcast %75 : vector<17x1xf32> to vector<17x17xf32>
    %77 = arith.divf %73, %76 : vector<17x17xf32>
    %78 = arith.truncf %77 : vector<17x17xf32> to vector<17x17xbf16>
    %79 = arith.truncf %63 : vector<17x32xf32> to vector<17x32xbf16>
    %cst_29 = arith.constant dense<0.000000e+00> : vector<17x32xf32>
    %80 = tpu.matmul %78, %79, %cst_29 {dimension_numbers = #tpu.dot_dimension_numbers<[1], [0], [0], [1], [0, 0, 1, 1], [], []>} : vector<17x17xbf16>, vector<17x32xbf16>, vector<17x32xf32> -> vector<17x32xf32>
    %81 = vector.extract_strided_slice %33 {offsets = [32, 0], sizes = [32, 128], strides = [1, 1]} : vector<128x128xbf16> to vector<32x128xbf16>
    %82 = arith.truncf %80 : vector<17x32xf32> to vector<17x32xbf16>
    %cst_30 = arith.constant dense<0.000000e+00> : vector<17x128xf32>
    %83 = tpu.matmul %82, %81, %cst_30 {dimension_numbers = #tpu.dot_dimension_numbers<[1], [0], [0], [1], [0, 0, 1, 1], [], []>} : vector<17x32xbf16>, vector<32x128xbf16>, vector<17x128xf32> -> vector<17x128xf32>
    %84 = arith.addf %60, %83 : vector<17x128xf32>
    %85 = vector.extract_strided_slice %32 {offsets = [0, 64], sizes = [17, 32], strides = [1, 1]} : vector<17x384xf32> to vector<17x32xf32>
    %86 = vector.extract_strided_slice %32 {offsets = [0, 192], sizes = [17, 32], strides = [1, 1]} : vector<17x384xf32> to vector<17x32xf32>
    %87 = vector.extract_strided_slice %32 {offsets = [0, 320], sizes = [17, 32], strides = [1, 1]} : vector<17x384xf32> to vector<17x32xf32>
    %88 = arith.truncf %85 : vector<17x32xf32> to vector<17x32xbf16>
    %89 = arith.truncf %86 : vector<17x32xf32> to vector<17x32xbf16>
    %cst_31 = arith.constant dense<0.000000e+00> : vector<17x17xf32>
    %90 = tpu.matmul %88, %89, %cst_31 {dimension_numbers = #tpu.dot_dimension_numbers<[1], [1], [0], [0], [0, 0, 1, 0], [], []>} : vector<17x32xbf16>, vector<17x32xbf16>, vector<17x17xf32> -> vector<17x17xf32>
    %cst_32 = arith.constant 0.176776692 : f32
    %91 = vector.broadcast %cst_32 : f32 to vector<17x17xf32>
    %92 = arith.mulf %90, %91 : vector<17x17xf32>
    %cst_33 = arith.constant dense<0xFF800000> : vector<17xf32>
    %93 = vector.multi_reduction <maximumf>, %92, %cst_33 [1] : vector<17x17xf32> to vector<17xf32>
    %94 = vector.shape_cast %93 : vector<17xf32> to vector<17x1xf32>
    %95 = vector.broadcast %94 : vector<17x1xf32> to vector<17x17xf32>
    %96 = arith.subf %92, %95 : vector<17x17xf32>
    %97 = math.exp %96 : vector<17x17xf32>
    %cst_34 = arith.constant dense<0.000000e+00> : vector<17xf32>
    %98 = vector.multi_reduction <add>, %97, %cst_34 [1] : vector<17x17xf32> to vector<17xf32>
    %99 = vector.shape_cast %98 : vector<17xf32> to vector<17x1xf32>
    %100 = vector.broadcast %99 : vector<17x1xf32> to vector<17x17xf32>
    %101 = arith.divf %97, %100 : vector<17x17xf32>
    %102 = arith.truncf %101 : vector<17x17xf32> to vector<17x17xbf16>
    %103 = arith.truncf %87 : vector<17x32xf32> to vector<17x32xbf16>
    %cst_35 = arith.constant dense<0.000000e+00> : vector<17x32xf32>
    %104 = tpu.matmul %102, %103, %cst_35 {dimension_numbers = #tpu.dot_dimension_numbers<[1], [0], [0], [1], [0, 0, 1, 1], [], []>} : vector<17x17xbf16>, vector<17x32xbf16>, vector<17x32xf32> -> vector<17x32xf32>
    %105 = vector.extract_strided_slice %33 {offsets = [64, 0], sizes = [32, 128], strides = [1, 1]} : vector<128x128xbf16> to vector<32x128xbf16>
    %106 = arith.truncf %104 : vector<17x32xf32> to vector<17x32xbf16>
    %cst_36 = arith.constant dense<0.000000e+00> : vector<17x128xf32>
    %107 = tpu.matmul %106, %105, %cst_36 {dimension_numbers = #tpu.dot_dimension_numbers<[1], [0], [0], [1], [0, 0, 1, 1], [], []>} : vector<17x32xbf16>, vector<32x128xbf16>, vector<17x128xf32> -> vector<17x128xf32>
    %108 = arith.addf %84, %107 : vector<17x128xf32>
    %109 = vector.extract_strided_slice %32 {offsets = [0, 96], sizes = [17, 32], strides = [1, 1]} : vector<17x384xf32> to vector<17x32xf32>
    %110 = vector.extract_strided_slice %32 {offsets = [0, 224], sizes = [17, 32], strides = [1, 1]} : vector<17x384xf32> to vector<17x32xf32>
    %111 = vector.extract_strided_slice %32 {offsets = [0, 352], sizes = [17, 32], strides = [1, 1]} : vector<17x384xf32> to vector<17x32xf32>
    %112 = arith.truncf %109 : vector<17x32xf32> to vector<17x32xbf16>
    %113 = arith.truncf %110 : vector<17x32xf32> to vector<17x32xbf16>
    %cst_37 = arith.constant dense<0.000000e+00> : vector<17x17xf32>
    %114 = tpu.matmul %112, %113, %cst_37 {dimension_numbers = #tpu.dot_dimension_numbers<[1], [1], [0], [0], [0, 0, 1, 0], [], []>} : vector<17x32xbf16>, vector<17x32xbf16>, vector<17x17xf32> -> vector<17x17xf32>
    %cst_38 = arith.constant 0.176776692 : f32
    %115 = vector.broadcast %cst_38 : f32 to vector<17x17xf32>
    %116 = arith.mulf %114, %115 : vector<17x17xf32>
    %cst_39 = arith.constant dense<0xFF800000> : vector<17xf32>
    %117 = vector.multi_reduction <maximumf>, %116, %cst_39 [1] : vector<17x17xf32> to vector<17xf32>
    %118 = vector.shape_cast %117 : vector<17xf32> to vector<17x1xf32>
    %119 = vector.broadcast %118 : vector<17x1xf32> to vector<17x17xf32>
    %120 = arith.subf %116, %119 : vector<17x17xf32>
    %121 = math.exp %120 : vector<17x17xf32>
    %cst_40 = arith.constant dense<0.000000e+00> : vector<17xf32>
    %122 = vector.multi_reduction <add>, %121, %cst_40 [1] : vector<17x17xf32> to vector<17xf32>
    %123 = vector.shape_cast %122 : vector<17xf32> to vector<17x1xf32>
    %124 = vector.broadcast %123 : vector<17x1xf32> to vector<17x17xf32>
    %125 = arith.divf %121, %124 : vector<17x17xf32>
    %126 = arith.truncf %125 : vector<17x17xf32> to vector<17x17xbf16>
    %127 = arith.truncf %111 : vector<17x32xf32> to vector<17x32xbf16>
    %cst_41 = arith.constant dense<0.000000e+00> : vector<17x32xf32>
    %128 = tpu.matmul %126, %127, %cst_41 {dimension_numbers = #tpu.dot_dimension_numbers<[1], [0], [0], [1], [0, 0, 1, 1], [], []>} : vector<17x17xbf16>, vector<17x32xbf16>, vector<17x32xf32> -> vector<17x32xf32>
    %129 = vector.extract_strided_slice %33 {offsets = [96, 0], sizes = [32, 128], strides = [1, 1]} : vector<128x128xbf16> to vector<32x128xbf16>
    %130 = arith.truncf %128 : vector<17x32xf32> to vector<17x32xbf16>
    %cst_42 = arith.constant dense<0.000000e+00> : vector<17x128xf32>
    %131 = tpu.matmul %130, %129, %cst_42 {dimension_numbers = #tpu.dot_dimension_numbers<[1], [0], [0], [1], [0, 0, 1, 1], [], []>} : vector<17x32xbf16>, vector<32x128xbf16>, vector<17x128xf32> -> vector<17x128xf32>
    %132 = arith.addf %108, %131 : vector<17x128xf32>
    %c0_43 = arith.constant 0 : index
    %c0_44 = arith.constant 0 : index
    %133 = vector.load %arg8[%c0_43, %c0_44] : memref<1x128xf32, #tpu.memory_space<vmem>>, vector<1x128xf32>
    %c0_45 = arith.constant 0 : index
    %c0_46 = arith.constant 0 : index
    %134 = vector.load %arg9[%c0_45, %c0_46] : memref<1x128xf32, #tpu.memory_space<vmem>>, vector<1x128xf32>
    %cst_47 = arith.constant dense<0.000000e+00> : vector<17xf32>
    %135 = vector.multi_reduction <add>, %132, %cst_47 [1] : vector<17x128xf32> to vector<17xf32>
    %136 = vector.shape_cast %135 : vector<17xf32> to vector<17x1xf32>
    %cst_48 = arith.constant 1.280000e+02 : f32
    %137 = vector.broadcast %cst_48 : f32 to vector<17x1xf32>
    %138 = arith.divf %136, %137 : vector<17x1xf32>
    %139 = vector.broadcast %138 : vector<17x1xf32> to vector<17x128xf32>
    %140 = arith.subf %132, %139 : vector<17x128xf32>
    %141 = arith.mulf %140, %140 : vector<17x128xf32>
    %cst_49 = arith.constant dense<0.000000e+00> : vector<17xf32>
    %142 = vector.multi_reduction <add>, %141, %cst_49 [1] : vector<17x128xf32> to vector<17xf32>
    %143 = vector.shape_cast %142 : vector<17xf32> to vector<17x1xf32>
    %cst_50 = arith.constant 1.280000e+02 : f32
    %144 = vector.broadcast %cst_50 : f32 to vector<17x1xf32>
    %145 = arith.divf %143, %144 : vector<17x1xf32>
    %146 = vector.broadcast %138 : vector<17x1xf32> to vector<17x128xf32>
    %147 = arith.subf %132, %146 : vector<17x128xf32>
    %cst_51 = arith.constant 9.99999996E-13 : f32
    %148 = vector.broadcast %cst_51 : f32 to vector<17x1xf32>
    %149 = arith.addf %145, %148 : vector<17x1xf32>
    %150 = math.rsqrt %149 : vector<17x1xf32>
    %151 = vector.broadcast %150 : vector<17x1xf32> to vector<17x128xf32>
    %152 = arith.mulf %147, %151 : vector<17x128xf32>
    %153 = vector.broadcast %133 : vector<1x128xf32> to vector<17x128xf32>
    %154 = arith.mulf %152, %153 : vector<17x128xf32>
    %155 = vector.broadcast %134 : vector<1x128xf32> to vector<17x128xf32>
    %156 = arith.addf %154, %155 : vector<17x128xf32>
    %c0_52 = arith.constant 0 : index
    %c0_53 = arith.constant 0 : index
    %157 = vector.load %arg10[%c0_52, %c0_53] : memref<128x512xbf16, #tpu.memory_space<vmem>>, vector<128x512xbf16>
    %158 = arith.truncf %156 : vector<17x128xf32> to vector<17x128xbf16>
    %cst_54 = arith.constant dense<0.000000e+00> : vector<17x512xf32>
    %159 = tpu.matmul %158, %157, %cst_54 {dimension_numbers = #tpu.dot_dimension_numbers<[1], [0], [0], [1], [0, 0, 1, 1], [], []>} : vector<17x128xbf16>, vector<128x512xbf16>, vector<17x512xf32> -> vector<17x512xf32>
    %c0_55 = arith.constant 0 : index
    %c0_56 = arith.constant 0 : index
    %160 = vector.load %arg11[%c0_55, %c0_56] : memref<1x512xf32, #tpu.memory_space<vmem>>, vector<1x512xf32>
    %161 = vector.broadcast %160 : vector<1x512xf32> to vector<17x512xf32>
    %162 = arith.addf %159, %161 : vector<17x512xf32>
    %cst_57 = arith.constant 5.000000e-01 : f32
    %163 = vector.broadcast %cst_57 : f32 to vector<17x512xf32>
    %164 = arith.mulf %163, %162 : vector<17x512xf32>
    %cst_58 = arith.constant 4.471500e-02 : f32
    %165 = vector.broadcast %cst_58 : f32 to vector<17x512xf32>
    %166 = arith.mulf %165, %162 : vector<17x512xf32>
    %167 = arith.mulf %166, %162 : vector<17x512xf32>
    %168 = arith.mulf %167, %162 : vector<17x512xf32>
    %169 = arith.addf %162, %168 : vector<17x512xf32>
    %cst_59 = arith.constant 0.797884583 : f32
    %170 = vector.broadcast %cst_59 : f32 to vector<17x512xf32>
    %171 = arith.mulf %170, %169 : vector<17x512xf32>
    %172 = math.tanh %171 : vector<17x512xf32>
    %cst_60 = arith.constant 1.000000e+00 : f32
    %173 = vector.broadcast %cst_60 : f32 to vector<17x512xf32>
    %174 = arith.addf %173, %172 : vector<17x512xf32>
    %175 = arith.mulf %164, %174 : vector<17x512xf32>
    %c0_61 = arith.constant 0 : index
    %c0_62 = arith.constant 0 : index
    %176 = vector.load %arg12[%c0_61, %c0_62] : memref<512x128xbf16, #tpu.memory_space<vmem>>, vector<512x128xbf16>
    %177 = arith.truncf %175 : vector<17x512xf32> to vector<17x512xbf16>
    %cst_63 = arith.constant dense<0.000000e+00> : vector<17x128xf32>
    %178 = tpu.matmul %177, %176, %cst_63 {dimension_numbers = #tpu.dot_dimension_numbers<[1], [0], [0], [1], [0, 0, 1, 1], [], []>} : vector<17x512xbf16>, vector<512x128xbf16>, vector<17x128xf32> -> vector<17x128xf32>
    %c0_64 = arith.constant 0 : index
    %c0_65 = arith.constant 0 : index
    %179 = vector.load %arg13[%c0_64, %c0_65] : memref<1x128xf32, #tpu.memory_space<vmem>>, vector<1x128xf32>
    %180 = vector.broadcast %179 : vector<1x128xf32> to vector<17x128xf32>
    %181 = arith.addf %178, %180 : vector<17x128xf32>
    %182 = arith.addf %181, %132 : vector<17x128xf32>
    %183 = arith.truncf %182 : vector<17x128xf32> to vector<17x128xbf16>
    %c0_66 = arith.constant 0 : index
    %c0_67 = arith.constant 0 : index
    %c0_68 = arith.constant 0 : index
    %184 = vector.load %arg14[%c0_66, %c0_67, %c0_68] : memref<1x17x128xbf16, #tpu.memory_space<vmem>>, vector<1x17x128xbf16>
    %185 = vector.shape_cast %184 : vector<1x17x128xbf16> to vector<17x128xbf16>
    %186 = vector.shape_cast %183 : vector<17x128xbf16> to vector<1x17x128xbf16>
    tpu.vector_store %arg14[%c0_66, %c0_67, %c0_68], %186 {strides = array<i32>} : memref<1x17x128xbf16, #tpu.memory_space<vmem>>, vector<1x17x128xbf16>,
    return
  }
  func.func @transform_0(%arg0: i32) -> (i32, i32, i32) {
    %c0_i32 = arith.constant 0 : i32
    %c0_i32_0 = arith.constant 0 : i32
    %c0_i32_1 = arith.constant 0 : i32
    return %arg0, %c0_i32, %c0_i32_0 : i32, i32, i32
  }
  func.func @transform_1(%arg0: i32) -> (i32, i32) {
    %c0_i32 = arith.constant 0 : i32
    %c0_i32_0 = arith.constant 0 : i32
    %c0_i32_1 = arith.constant 0 : i32
    return %c0_i32, %c0_i32_0 : i32, i32
  }
  func.func @transform_2(%arg0: i32) -> (i32, i32) {
    %c0_i32 = arith.constant 0 : i32
    %c0_i32_0 = arith.constant 0 : i32
    %c0_i32_1 = arith.constant 0 : i32
    return %c0_i32, %c0_i32_0 : i32, i32
  }
  func.func @transform_3(%arg0: i32) -> (i32, i32) {
    %c0_i32 = arith.constant 0 : i32
    %c0_i32_0 = arith.constant 0 : i32
    %c0_i32_1 = arith.constant 0 : i32
    return %c0_i32, %c0_i32_0 : i32, i32
  }
  func.func @transform_4(%arg0: i32) -> (i32, i32) {
    %c0_i32 = arith.constant 0 : i32
    %c0_i32_0 = arith.constant 0 : i32
    %c0_i32_1 = arith.constant 0 : i32
    return %c0_i32, %c0_i32_0 : i32, i32
  }
  func.func @transform_5(%arg0: i32) -> (i32, i32) {
    %c0_i32 = arith.constant 0 : i32
    %c0_i32_0 = arith.constant 0 : i32
    %c0_i32_1 = arith.constant 0 : i32
    return %c0_i32, %c0_i32_0 : i32, i32
  }
  func.func @transform_6(%arg0: i32) -> (i32, i32) {
    %c0_i32 = arith.constant 0 : i32
    %c0_i32_0 = arith.constant 0 : i32
    %c0_i32_1 = arith.constant 0 : i32
    return %c0_i32, %c0_i32_0 : i32, i32
  }
  func.func @transform_7(%arg0: i32) -> (i32, i32) {
    %c0_i32 = arith.constant 0 : i32
    %c0_i32_0 = arith.constant 0 : i32
    %c0_i32_1 = arith.constant 0 : i32
    return %c0_i32, %c0_i32_0 : i32, i32
  }
  func.func @transform_8(%arg0: i32) -> (i32, i32) {
    %c0_i32 = arith.constant 0 : i32
    %c0_i32_0 = arith.constant 0 : i32
    %c0_i32_1 = arith.constant 0 : i32
    return %c0_i32, %c0_i32_0 : i32, i32
  }
  func.func @transform_9(%arg0: i32) -> (i32, i32) {
    %c0_i32 = arith.constant 0 : i32
    %c0_i32_0 = arith.constant 0 : i32
    %c0_i32_1 = arith.constant 0 : i32
    return %c0_i32, %c0_i32_0 : i32, i32
  }
  func.func @transform_10(%arg0: i32) -> (i32, i32) {
    %c0_i32 = arith.constant 0 : i32
    %c0_i32_0 = arith.constant 0 : i32
    %c0_i32_1 = arith.constant 0 : i32
    return %c0_i32, %c0_i32_0 : i32, i32
  }
  func.func @transform_11(%arg0: i32) -> (i32, i32) {
    %c0_i32 = arith.constant 0 : i32
    %c0_i32_0 = arith.constant 0 : i32
    %c0_i32_1 = arith.constant 0 : i32
    return %c0_i32, %c0_i32_0 : i32, i32
  }
  func.func @transform_12(%arg0: i32) -> (i32, i32) {
    %c0_i32 = arith.constant 0 : i32
    %c0_i32_0 = arith.constant 0 : i32
    %c0_i32_1 = arith.constant 0 : i32
    return %c0_i32, %c0_i32_0 : i32, i32
  }
  func.func @transform_13(%arg0: i32) -> (i32, i32, i32) {
    %c0_i32 = arith.constant 0 : i32
    %c0_i32_0 = arith.constant 0 : i32
    %c0_i32_1 = arith.constant 0 : i32
    return %arg0, %c0_i32, %c0_i32_0 : i32, i32, i32
  }
}

</mosaic_0001>

<llo_original>
// kernel: vision_forward.4
$region0: #{vision_forward.4}
  #allocation0 [shape = 'u32[]', space=smem, size = 0x4, offset = 0x4, fixed_abs, tag = 'smem constant byte address 0x4 - core index']
  #allocation1 [shape = 'u32[144,128]{1,0:T(1,128)}', space=vmem, size = 0x12000, scoped, tag = 'internal scratch']
  %s0 = inlined_call_operand.vmem [shape: f32[32,108], index: 0, kind: input, shape index: {}]
  %s1 = inlined_call_operand.vmem [shape: bf16[108,128], index: 1, kind: input, shape index: {}]
  %s2 = inlined_call_operand.vmem [shape: f32[1,128], index: 2, kind: input, shape index: {}]
  %s3 = inlined_call_operand.vmem [shape: f32[32,128], index: 3, kind: output, shape index: {}]
  %s4 = sld [smem:[#allocation0]]
  $region45: #{vision_forward.4} parent=0
    _
  %s6 = ssub.s32 1, %s4
  %s7 = scalar_select 0, %s6, %s4
  loop: start=0, step=1, limit=4
  $region2: #{vision_forward.4} parent=0 // loop_pre_header
    _
  $region3: #{vision_forward.4} parent=0 // loop_header
    %s9 = sphi 0, %s13
    %p10 = scmp.ge.s32.totalorder %s9, 4
    %s19 = sphi 0, %s21
    %s22 = sphi 0, %s19
    %s23 = sphi 0, %s22
    %s39 = sphi 0, %s23
    %s43 = sphi 0, %s43
    %s45 = sphi 0, %s43
    %s46 = sphi 0, %s45
    %s60 = sphi 0, %s46
    %s64 = sphi 0, %s64
    %s66 = sphi 0, %s64
    %s67 = sphi 0, %s66
    %s81 = sphi 0, %s67
    %s87 = sphi 0, %s89
    %s90 = sphi 0, %s87
    %s91 = sphi 0, %s90
    %s107 = sphi 0, %s91
  $region4: #{vision_forward.4} parent=0 // loop_header_branch
    %12 = sbr.rel (%p10) target = $region8
  $region5: #{vision_forward.4} parent=0 // loop_body
    %s14 = ssub.s32 %s9, 1
    %s15 = ssub.s32 %s9, 2
    %s16 = sadd.s32 %s9, 1
    %s17 = ssub.s32 %s9, %s16
    %p18 = scmp.eq.s32.totalorder %s17, 0
    %s20 = sadd.s32 %s19, 1
    %s21 = scalar_select %p18, %s19, %s20
    %p24 = pneg %p18
    %p25 = scmp.eq.s32.totalorder %s9, 1
    %p26 = por %p24, %p25
    %p27 = scmp.ne.s32.totalorder %s19, %s22
    %p28 = scmp.eq.s32.totalorder %s9, 0
    %p29 = por %p27, %p28
    %p30 = scmp.ne.s32.totalorder %s19, %s22
    %p31 = scmp.eq.s32.totalorder %s14, 1
    %p32 = por %p30, %p31
    %p33 = scmp.ne.s32.totalorder %s22, %s23
    %p34 = scmp.eq.s32.totalorder %s14, 0
    %p35 = por %p33, %p34
    %p36 = scmp.ne.s32.totalorder %s22, %s23
    %p37 = scmp.eq.s32.totalorder %s15, 1
    %p38 = por %p36, %p37
    %p40 = scmp.ne.s32.totalorder %s23, %s39
    %p41 = scmp.eq.s32.totalorder %s15, 0
    %p42 = por %p40, %p41
    %s44 = sadd.s32 %s43, 1
    %p47 = scmp.eq.s32.totalorder %s9, 1
    %p48 = scmp.ne.s32.totalorder %s43, %s45
    %p49 = scmp.eq.s32.totalorder %s9, 0
    %p50 = por %p48, %p49
    %p51 = scmp.ne.s32.totalorder %s43, %s45
    %p52 = scmp.eq.s32.totalorder %s14, 1
    %p53 = por %p51, %p52
    %p54 = scmp.ne.s32.totalorder %s45, %s46
    %p55 = scmp.eq.s32.totalorder %s14, 0
    %p56 = por %p54, %p55
    %p57 = scmp.ne.s32.totalorder %s45, %s46
    %p58 = scmp.eq.s32.totalorder %s15, 1
    %p59 = por %p57, %p58
    %p61 = scmp.ne.s32.totalorder %s46, %s60
    %p62 = scmp.eq.s32.totalorder %s15, 0
    %p63 = por %p61, %p62
    %s65 = sadd.s32 %s64, 1
    %p68 = scmp.eq.s32.totalorder %s9, 1
    %p69 = scmp.ne.s32.totalorder %s64, %s66
    %p70 = scmp.eq.s32.totalorder %s9, 0
    %p71 = por %p69, %p70
    %p72 = scmp.ne.s32.totalorder %s64, %s66
    %p73 = scmp.eq.s32.totalorder %s14, 1
    %p74 = por %p72, %p73
    %p75 = scmp.ne.s32.totalorder %s66, %s67
    %p76 = scmp.eq.s32.totalorder %s14, 0
    %p77 = por %p75, %p76
    %p78 = scmp.ne.s32.totalorder %s66, %s67
    %p79 = scmp.eq.s32.totalorder %s15, 1
    %p80 = por %p78, %p79
    %p82 = scmp.ne.s32.totalorder %s67, %s81
    %p83 = scmp.eq.s32.totalorder %s15, 0
    %p84 = por %p82, %p83
    %s85 = ssub.s32 %s9, %s16
    %p86 = scmp.eq.s32.totalorder %s85, 0
    %s88 = sadd.s32 %s87, 1
    %s89 = scalar_select %p86, %s87, %s88
    %p92 = pneg %p86
    %p93 = scmp.eq.s32.totalorder %s9, 1
    %p94 = por %p92, %p93
    %p95 = scmp.ne.s32.totalorder %s87, %s90
    %p96 = scmp.eq.s32.totalorder %s9, 0
    %p97 = por %p95, %p96
    %p98 = scmp.ne.s32.totalorder %s87, %s90
    %p99 = scmp.eq.s32.totalorder %s14, 1
    %p100 = por %p98, %p99
    %p101 = scmp.ne.s32.totalorder %s90, %s91
    %p102 = scmp.eq.s32.totalorder %s14, 0
    %p103 = por %p101, %p102
    %p104 = scmp.ne.s32.totalorder %s90, %s91
    %p105 = scmp.eq.s32.totalorder %s15, 1
    %p106 = por %p104, %p105
    %p108 = scmp.ne.s32.totalorder %s91, %s107
    %p109 = scmp.eq.s32.totalorder %s15, 0
    %p110 = por %p108, %p109
    %p111 = scmp.le.s32.totalorder 1, %s9
    %p112 = scmp.lt.s32.totalorder %s9, 3
    %p113 = pnand %p111, %p112
    %p114 = pneg %p113
    // Predicated region
    $region9: #{vision_forward.4} parent=5 // pred_check
      _
    $region10: #{vision_forward.4} parent=5 // pred_check_branch
      %116 = sbr.rel (%p113) target = $region12
    $region11: #{vision_forward.4} parent=5 // pred_region
      %s117 = ssub.s32 %s9, 1
      // Predicated region
      $region13: #{vision_forward.4} parent=11 // pred_check
        %p118 = pneg %p56
      $region14: #{vision_forward.4} parent=11 // pred_check_branch
        %120 = sbr.rel (%p118) target = $region16
      $region15: #{vision_forward.4} parent=11 // pred_region
        _
      $region16: #{vision_forward.4} parent=11 // pred_fallthru
        _
      // Predicated region
      $region17: #{vision_forward.4} parent=11 // pred_check
        %p121 = pneg %p77
      $region18: #{vision_forward.4} parent=11 // pred_check_branch
        %123 = sbr.rel (%p121) target = $region20
      $region19: #{vision_forward.4} parent=11 // pred_region
        _
      $region20: #{vision_forward.4} parent=11 // pred_fallthru
        _
    $region12: #{vision_forward.4} parent=5 // pred_fallthru
      _
    %p124 = scmp.lt.s32.totalorder %s9, 2
    // Predicated region
    $region21: #{vision_forward.4} parent=5 // pred_check
      %p125 = pneg %p124
    $region22: #{vision_forward.4} parent=5 // pred_check_branch
      %127 = sbr.rel (%p125) target = $region24
    $region23: #{vision_forward.4} parent=5 // pred_region
      // Predicated region
      $region25: #{vision_forward.4} parent=23 // pred_check
        %p128 = pneg %p29
      $region26: #{vision_forward.4} parent=23 // pred_check_branch
        %130 = sbr.rel (%p128) target = $region28
      $region27: #{vision_forward.4} parent=23 // pred_region
        %s131 = smul.u32 2, %s9
        %p132 = scmp.lt.s32.totalorder %s131, 3
        %s133 = scalar_select %p132, %s131, 3
        %s134 = smul.addr %s133, 8
        %s135 = scalar_lea.vmem %s0, %s134
        %s136 = smul.u32 2, %s9
      $region28: #{vision_forward.4} parent=23 // pred_fallthru
        _
    $region24: #{vision_forward.4} parent=5 // pred_fallthru
      _
    %p137 = scmp.le.s32.totalorder 1, %s9
    %p138 = scmp.lt.s32.totalorder %s9, 3
    %p139 = pnand %p137, %p138
    %p140 = pneg %p139
    // Predicated region
    $region29: #{vision_forward.4} parent=5 // pred_check
      _
    $region30: #{vision_forward.4} parent=5 // pred_check_branch
      %142 = sbr.rel (%p139) target = $region32
    $region31: #{vision_forward.4} parent=5 // pred_region
      %s143 = ssub.s32 %s9, 1
      %s144 = smul.u32 2, %s14
      %p145 = scmp.lt.s32.totalorder %s144, 3
      %s146 = scalar_select %p145, %s144, 3
      %s147 = smul.addr %s146, 8
      %s148 = scalar_lea.vmem %s0, %s147
      %p149 = pneg %p35
      %p150 = pneg %p32
      %p151 = pneg %p56
      %p152 = pneg %p53
      %p153 = pneg %p77
      %p154 = pneg %p74
      %p155 = pneg %p103
      %p156 = pneg %p100
      %s157 = smul.u32 2, %s14
      %p158 = scmp.lt.s32.totalorder %s157, 3
      %s159 = scalar_select %p158, %s157, 3
      %s160 = smul.addr %s159, 8
      %s161 = scalar_lea.vmem %s3, %s160
      %s162 = smul.u32 2, %s14
      %p163 = scmp.lt.s32.totalorder %s162, 3
      %s164 = scalar_select %p163, %s162, 3
      %s165 = smul.addr %s164, 8
      %s166 = scalar_lea.vmem %s0, %s165
      %s167 = smul.u32 2, %s14
      %s168 = smul.u32 2, %s14
      %p169 = scmp.lt.s32.totalorder %s168, 3
      %s170 = scalar_select %p169, %s168, 3
      %s171 = smul.addr %s170, 8
      %s172 = scalar_lea.vmem %s3, %s171
      %s173 = smul.u32 2, %s14
      %v175 = vld [vmem:[%s166] sm:$0xff]
      %v176 = vld [vmem:[%s166 + $0x8] sm:$0xff]
      %v177 = vmul.f32 %v175, 2.0
      %v178 = vmul.f32 %v176, 2.0
      %v179 = vsub.f32 %v177, 1.0
      %v180 = vsub.f32 %v178, 1.0
      %v181 = vld [vmem:[%s1] sm:$0xf]
      %v182 = vld [vmem:[%s1 + $0x4] sm:$0xf]
      %v183 = vld [vmem:[%s1 + $0x8] sm:$0xf]
      %v184 = vld [vmem:[%s1 + $0xc] sm:$0xf]
      %v185 = vld [vmem:[%s1 + $0x10] sm:$0xf]
      %v186 = vld [vmem:[%s1 + $0x14] sm:$0xf]
      %v187 = vld [vmem:[%s1 + $0x18] sm:$0xf]
      %v188 = vld [vmem:[%s1 + $0x1c] sm:$0xf]
      %v189 = vld [vmem:[%s1 + $0x20] sm:$0xf]
      %v190 = vld [vmem:[%s1 + $0x24] sm:$0xf]
      %v191 = vld [vmem:[%s1 + $0x28] sm:$0xf]
      %v192 = vld [vmem:[%s1 + $0x2c] sm:$0xf]
      %v193 = vld [vmem:[%s1 + $0x30] sm:$0xf]
      %v194 = vld [vmem:[%s1 + $0x34] sm:$0x3]
      %v195 = vpack.c.bf16 %v180, %v179
      %v196 = vld [vmem:[%s2] sm:$0x1]
      %v198 = vlaneseq
      %v199 = vshrl.u32 %v198, 7
      %v200 = vsub.s32 0, %v199
      %v201 = vrot.slane %v196, %v200
      %v217 = vunpack.c.l.b16 %v181
      %v218 = vunpack.c.l.b16 %v182
      %v219 = vunpack.c.l.b16 %v183
      %v220 = vunpack.c.l.b16 %v184
      %v221 = vunpack.c.l.b16 %v185
      %v222 = vunpack.c.l.b16 %v186
      %v223 = vunpack.c.l.b16 %v187
      %v224 = vunpack.c.l.b16 %v188
      %v225 = vunpack.c.l.b16 %v189
      %v226 = vunpack.c.l.b16 %v190
      %v227 = vunpack.c.l.b16 %v191
      %v228 = vunpack.c.l.b16 %v192
      %v229 = vunpack.c.l.b16 %v193
      %v230 = vunpack.c.l.b16 %v194
      %v231 = vpack.c.b16 %v218, %v217
      %v232 = vpack.c.b16 %v220, %v219
      %v233 = vpack.c.b16 %v222, %v221
      %v234 = vpack.c.b16 %v224, %v223
      %v235 = vpack.c.b16 %v226, %v225
      %v236 = vpack.c.b16 %v228, %v227
      %v237 = vpack.c.b16 %v230, %v229
      %vm244 = vcmask 883712
      %v246 = vsel %vm244, %v195, 0
      %vm248 = vcmask 1045504
      %v250 = vsel %vm248, %v237, 0
      %252 = vmatprep.subr.bf16.mxu0 0
      %253 = vmatpush1.bf16.msra.mxu0 %v231
      %254 = vmatprep.subr.bf16.mxu0 0
      %255 = vmatpush1.bf16.msra.mxu0 %v232
      %256 = vmatprep.subr.bf16.mxu0 0
      %257 = vmatpush1.bf16.msra.mxu0 %v233
      %258 = vmatprep.subr.bf16.mxu0 0
      %259 = vmatpush1.bf16.msra.mxu0 %v234
      %260 = vmatprep.subr.bf16.mxu0 0
      %261 = vmatpush1.bf16.msra.mxu0 %v235
      %262 = vmatprep.subr.bf16.mxu0 0
      %263 = vmatpush1.bf16.msra.mxu0 %v236
      %264 = vmatprep.subr.bf16.mxu0 0
      %265 = vmatpush1.bf16.msra.mxu0 %v250
      %266 = vmatprep.subr.bf16.mxu0 0
      %267 = vmatpush1.bf16.msra.mxu0 0
      %268 = vmatprep.subr.bf16.mxu0 0
      %269 = vmatpush1.bf16.msra.mxu0 0
      %270 = vmatprep.subr.bf16.mxu0 0
      %271 = vmatpush1.bf16.msra.mxu0 0
      %272 = vmatprep.subr.bf16.mxu0 0
      %273 = vmatpush1.bf16.msra.mxu0 0
      %274 = vmatprep.subr.bf16.mxu0 0
      %275 = vmatpush1.bf16.msra.mxu0 0
      %276 = vmatprep.subr.bf16.mxu0 0
      %277 = vmatpush1.bf16.msra.mxu0 0
      %278 = vmatprep.subr.bf16.mxu0 0
      %279 = vmatpush1.bf16.msra.mxu0 0
      %280 = vmatprep.subr.bf16.mxu0 0
      %281 = vmatpush1.bf16.msra.mxu0 0
      %282 = vmatprep.subr.bf16.mxu0 0
      %283 = vmatpush1.bf16.msra.mxu0 0
      %284 = vmatprep.mubr.bf16.mxu0 0
      %285 = vmatmul.mubr.bf16.gmra.mrb[0].mxu0 %v246
      %v286 = vpop.f32.mrb[0].mxu0
      %v287 = vadd.f32 %v201, %v286
      %v288 = vpop.f32.mrb[0].mxu0
      %v289 = vpop.f32.mrb[0].mxu0
      %v290 = vadd.f32 %v201, %v289
      %v291 = vpop.f32.mrb[0].mxu0
      %292 = vdwg.mxu0
      %293 = vst [vmem:[%s172] sm:$0xff] %v287
      %294 = vst [vmem:[%s172 + $0x8] sm:$0xff] %v290
      %s295 = smul.u32 2, %s14
      %p296 = scmp.lt.s32.totalorder %s295, 3
      %s297 = scalar_select %p296, %s295, 3
      %s298 = smul.addr %s297, 8
      %s299 = scalar_lea.vmem %s3, %s298
      // Predicated region
      $region33: #{vision_forward.4} parent=31 // pred_check
        %p300 = pneg %p100
      $region34: #{vision_forward.4} parent=31 // pred_check_branch
        %302 = sbr.rel (%p300) target = $region36
      $region35: #{vision_forward.4} parent=31 // pred_region
        %s303 = smul.u32 2, %s14
      $region36: #{vision_forward.4} parent=31 // pred_fallthru
        _
    $region32: #{vision_forward.4} parent=5 // pred_fallthru
      _
    %p304 = scmp.le.s32.totalorder 2, %s9
    // Predicated region
    $region37: #{vision_forward.4} parent=5 // pred_check
      %p305 = pneg %p304
    $region38: #{vision_forward.4} parent=5 // pred_check_branch
      %307 = sbr.rel (%p305) target = $region40
    $region39: #{vision_forward.4} parent=5 // pred_region
      %s308 = ssub.s32 %s9, 2
      // Predicated region
      $region41: #{vision_forward.4} parent=39 // pred_check
        %p309 = pneg %p106
      $region42: #{vision_forward.4} parent=39 // pred_check_branch
        %311 = sbr.rel (%p309) target = $region44
      $region43: #{vision_forward.4} parent=39 // pred_region
        %s312 = smul.u32 2, %s15
        %p313 = scmp.lt.s32.totalorder %s312, 3
        %s314 = scalar_select %p313, %s312, 3
        %s315 = smul.addr %s314, 8
        %s316 = scalar_lea.vmem %s3, %s315
      $region44: #{vision_forward.4} parent=39 // pred_fallthru
        _
    $region40: #{vision_forward.4} parent=5 // pred_fallthru
      _
  $region6: #{vision_forward.4} parent=0 // loop_footer
    %s13 = sadd.s32 1, %s9
  $region7: #{vision_forward.4} parent=0 // loop_footer_branch
    %8 = sbr.rel target = $region3
  $region8: #{vision_forward.4} parent=0 // loop_exit
    _

// kernel: vision_forward.7
$region0: #{vision_forward.7}
  #allocation0 [shape = 'u32[]', space=smem, size = 0x4, offset = 0x4, fixed_abs, tag = 'smem constant byte address 0x4 - core index']
  #allocation1 [shape = 'u32[144,128]{1,0:T(1,128)}', space=vmem, size = 0x12000, scoped, tag = 'internal scratch']
  %s0 = inlined_call_operand.vmem [shape: bf16[2,128], index: 0, kind: input, shape index: {}]
  %s1 = inlined_call_operand.vmem [shape: f32[1,128], index: 1, kind: input, shape index: {}]
  %s2 = inlined_call_operand.vmem [shape: f32[1,128], index: 2, kind: input, shape index: {}]
  %s3 = inlined_call_operand.vmem [shape: bf16[128,128], index: 3, kind: input, shape index: {}]
  %s4 = inlined_call_operand.vmem [shape: f32[1,128], index: 4, kind: input, shape index: {}]
  %s5 = inlined_call_operand.vmem [shape: bf16[128,512], index: 5, kind: input, shape index: {}]
  %s6 = inlined_call_operand.vmem [shape: f32[1,512], index: 6, kind: input, shape index: {}]
  %s7 = inlined_call_operand.vmem [shape: bf16[512,256], index: 7, kind: input, shape index: {}]
  %s8 = inlined_call_operand.vmem [shape: f32[1,256], index: 8, kind: input, shape index: {}]
  %s9 = inlined_call_operand.vmem [shape: bf16[256,64], index: 9, kind: input, shape index: {}]
  %s10 = inlined_call_operand.vmem [shape: f32[1,64], index: 10, kind: input, shape index: {}]
  %s11 = inlined_call_operand.vmem [shape: bf16[64,16], index: 11, kind: input, shape index: {}]
  %s12 = inlined_call_operand.vmem [shape: f32[1,16], index: 12, kind: input, shape index: {}]
  %s13 = inlined_call_operand.hbm [shape: f32[2,16], index: 13, kind: output, shape index: {}]
  %s14 = sld [smem:[#allocation0]]
  $region62: #{vision_forward.7} parent=0
    _
  %s16 = ssub.s32 1, %s14
  %s17 = scalar_select 0, %s16, %s14
  $region1: #{vision_forward.7} parent=0
    #allocation2 [shape = 'u8[1024]{0}', space=vmem, size = 0x400, scoped, tag = 'output window, operand 0, single buffered']
    #allocation3 [shape = 's32[1]{0}', space=sflag, size = 0x4, scoped, tag = 'scoped memory for vision_forward.7']
    %18 = vsyncpa [#allocation3], 0
    // Predicated region
    $region2: #{vision_forward.7} parent=1 // pred_check
      _
    $region3: #{vision_forward.7} parent=1 // pred_check_branch
      %20 = sbr.rel (0) target = $region5
    $region4: #{vision_forward.7} parent=1 // pred_region
      _
    $region5: #{vision_forward.7} parent=1 // pred_fallthru
      _
    // Predicated region
    $region6: #{vision_forward.7} parent=1 // pred_check
      _
    $region7: #{vision_forward.7} parent=1 // pred_check_branch
      %22 = sbr.rel (0) target = $region9
    $region8: #{vision_forward.7} parent=1 // pred_region
      _
    $region9: #{vision_forward.7} parent=1 // pred_fallthru
      _
    // Predicated region
    $region10: #{vision_forward.7} parent=1 // pred_check
      _
    $region11: #{vision_forward.7} parent=1 // pred_check_branch
      %24 = sbr.rel (0) target = $region13
    $region12: #{vision_forward.7} parent=1 // pred_region
      _
    $region13: #{vision_forward.7} parent=1 // pred_fallthru
      _
    // Predicated region
    $region14: #{vision_forward.7} parent=1 // pred_check
      _
    $region15: #{vision_forward.7} parent=1 // pred_check_branch
      %26 = sbr.rel (0) target = $region17
    $region16: #{vision_forward.7} parent=1 // pred_region
      _
    $region17: #{vision_forward.7} parent=1 // pred_fallthru
      _
    // Predicated region
    $region18: #{vision_forward.7} parent=1 // pred_check
      _
    $region19: #{vision_forward.7} parent=1 // pred_check_branch
      %28 = sbr.rel (0) target = $region21
    $region20: #{vision_forward.7} parent=1 // pred_region
      _
    $region21: #{vision_forward.7} parent=1 // pred_fallthru
      _
    // Predicated region
    $region22: #{vision_forward.7} parent=1 // pred_check
      _
    $region23: #{vision_forward.7} parent=1 // pred_check_branch
      %30 = sbr.rel (0) target = $region25
    $region24: #{vision_forward.7} parent=1 // pred_region
      _
    $region25: #{vision_forward.7} parent=1 // pred_fallthru
      _
    // Predicated region
    $region26: #{vision_forward.7} parent=1 // pred_check
      _
    $region27: #{vision_forward.7} parent=1 // pred_check_branch
      %32 = sbr.rel (0) target = $region29
    $region28: #{vision_forward.7} parent=1 // pred_region
      _
    $region29: #{vision_forward.7} parent=1 // pred_fallthru
      _
    // Predicated region
    $region30: #{vision_forward.7} parent=1 // pred_check
      _
    $region31: #{vision_forward.7} parent=1 // pred_check_branch
      %34 = sbr.rel (0) target = $region33
    $region32: #{vision_forward.7} parent=1 // pred_region
      _
    $region33: #{vision_forward.7} parent=1 // pred_fallthru
      _
    // Predicated region
    $region34: #{vision_forward.7} parent=1 // pred_check
      _
    $region35: #{vision_forward.7} parent=1 // pred_check_branch
      %36 = sbr.rel (0) target = $region37
    $region36: #{vision_forward.7} parent=1 // pred_region
      _
    $region37: #{vision_forward.7} parent=1 // pred_fallthru
      _
    // Predicated region
    $region38: #{vision_forward.7} parent=1 // pred_check
      _
    $region39: #{vision_forward.7} parent=1 // pred_check_branch
      %38 = sbr.rel (0) target = $region41
    $region40: #{vision_forward.7} parent=1 // pred_region
      _
    $region41: #{vision_forward.7} parent=1 // pred_fallthru
      _
    // Predicated region
    $region42: #{vision_forward.7} parent=1 // pred_check
      _
    $region43: #{vision_forward.7} parent=1 // pred_check_branch
      %40 = sbr.rel (0) target = $region45
    $region44: #{vision_forward.7} parent=1 // pred_region
      _
    $region45: #{vision_forward.7} parent=1 // pred_fallthru
      _
    // Predicated region
    $region46: #{vision_forward.7} parent=1 // pred_check
      _
    $region47: #{vision_forward.7} parent=1 // pred_check_branch
      %42 = sbr.rel (0) target = $region49
    $region48: #{vision_forward.7} parent=1 // pred_region
      _
    $region49: #{vision_forward.7} parent=1 // pred_fallthru
      _
    // Predicated region
    $region50: #{vision_forward.7} parent=1 // pred_check
      _
    $region51: #{vision_forward.7} parent=1 // pred_check_branch
      %44 = sbr.rel (0) target = $region53
    $region52: #{vision_forward.7} parent=1 // pred_region
      _
    $region53: #{vision_forward.7} parent=1 // pred_fallthru
      _
    %v46 = vld [vmem:[%s0] sm:$0x1]
    %v47 = vunpack.c.l.bf16 %v46
    %v48 = vld [vmem:[%s1] sm:$0x1]
    %v49 = vld [vmem:[%s2] sm:$0x1]
    %vm50 = vcmask 1041408
    %v51 = vsel %vm50, %v47, 0.0
    %52 = vadd.xlane.f32.xlu0 %v51
    %v53 = vpop.xlane.xlu0 %52
    %v54 = vrcp.pop 128.0
    %v55 = vmul.f32 %v53, %v54
    %v56 = vsub.f32 %v47, %v55
    %v57 = vmul.f32 %v56, %v56
    %v58 = vsel %vm50, %v57, 0.0
    %59 = vadd.xlane.f32.xlu0 %v58
    %v60 = vpop.xlane.xlu0 %59
    %v61 = vmul.f32 %v60, %v54
    %v62 = vadd.f32 %v61, 1e-12
    %v63 = vrsqrt.pop %v62
    %v64 = vmul.f32 %v56, %v63
    %v66 = vlaneseq
    %v67 = vshrl.u32 %v66, 7
    %v68 = vsub.s32 0, %v67
    %v69 = vrot.slane %v48, %v68
    %v71 = vmul.f32 %v64, %v69
    %v73 = vlaneseq
    %v74 = vshrl.u32 %v73, 7
    %v75 = vsub.s32 0, %v74
    %v76 = vrot.slane %v49, %v75
    %v78 = vadd.f32 %v71, %v76
    %v79 = vld [vmem:[%s3] sm:$0xf]
    %v80 = vld [vmem:[%s3 + $0x4] sm:$0xf]
    %v81 = vld [vmem:[%s3 + $0x8] sm:$0xf]
    %v82 = vld [vmem:[%s3 + $0xc] sm:$0xf]
    %v83 = vld [vmem:[%s3 + $0x10] sm:$0xf]
    %v84 = vld [vmem:[%s3 + $0x14] sm:$0xf]
    %v85 = vld [vmem:[%s3 + $0x18] sm:$0xf]
    %v86 = vld [vmem:[%s3 + $0x1c] sm:$0xf]
    %v87 = vld [vmem:[%s3 + $0x20] sm:$0xf]
    %v88 = vld [vmem:[%s3 + $0x24] sm:$0xf]
    %v89 = vld [vmem:[%s3 + $0x28] sm:$0xf]
    %v90 = vld [vmem:[%s3 + $0x2c] sm:$0xf]
    %v91 = vld [vmem:[%s3 + $0x30] sm:$0xf]
    %v92 = vld [vmem:[%s3 + $0x34] sm:$0xf]
    %v93 = vld [vmem:[%s3 + $0x38] sm:$0xf]
    %v94 = vld [vmem:[%s3 + $0x3c] sm:$0xf]
    %v95 = vpack.c.bf16 %v78, %v78
    %v96 = vld [vmem:[%s4] sm:$0x1]
    %v98 = vlaneseq
    %v99 = vshrl.u32 %v98, 7
    %v100 = vsub.s32 0, %v99
    %v101 = vrot.slane %v96, %v100
    %v119 = vunpack.c.l.b16 %v79
    %v120 = vunpack.c.l.b16 %v80
    %v121 = vunpack.c.l.b16 %v81
    %v122 = vunpack.c.l.b16 %v82
    %v123 = vunpack.c.l.b16 %v83
    %v124 = vunpack.c.l.b16 %v84
    %v125 = vunpack.c.l.b16 %v85
    %v126 = vunpack.c.l.b16 %v86
    %v127 = vunpack.c.l.b16 %v87
    %v128 = vunpack.c.l.b16 %v88
    %v129 = vunpack.c.l.b16 %v89
    %v130 = vunpack.c.l.b16 %v90
    %v131 = vunpack.c.l.b16 %v91
    %v132 = vunpack.c.l.b16 %v92
    %v133 = vunpack.c.l.b16 %v93
    %v134 = vunpack.c.l.b16 %v94
    %v135 = vpack.c.b16 %v120, %v119
    %v136 = vpack.c.b16 %v122, %v121
    %v137 = vpack.c.b16 %v124, %v123
    %v138 = vpack.c.b16 %v126, %v125
    %v139 = vpack.c.b16 %v128, %v127
    %v140 = vpack.c.b16 %v130, %v129
    %v141 = vpack.c.b16 %v132, %v131
    %v142 = vpack.c.b16 %v134, %v133
    %151 = vmatprep.subr.bf16.mxu0 0
    %152 = vmatpush1.bf16.msra.mxu0 %v135
    %153 = vmatprep.subr.bf16.mxu0 0
    %154 = vmatpush1.bf16.msra.mxu0 %v136
    %155 = vmatprep.subr.bf16.mxu0 0
    %156 = vmatpush1.bf16.msra.mxu0 %v137
    %157 = vmatprep.subr.bf16.mxu0 0
    %158 = vmatpush1.bf16.msra.mxu0 %v138
    %159 = vmatprep.subr.bf16.mxu0 0
    %160 = vmatpush1.bf16.msra.mxu0 %v139
    %161 = vmatprep.subr.bf16.mxu0 0
    %162 = vmatpush1.bf16.msra.mxu0 %v140
    %163 = vmatprep.subr.bf16.mxu0 0
    %164 = vmatpush1.bf16.msra.mxu0 %v141
    %165 = vmatprep.subr.bf16.mxu0 0
    %166 = vmatpush1.bf16.msra.mxu0 %v142
    %167 = vmatprep.subr.bf16.mxu0 0
    %168 = vmatpush1.bf16.msra.mxu0 0
    %169 = vmatprep.subr.bf16.mxu0 0
    %170 = vmatpush1.bf16.msra.mxu0 0
    %171 = vmatprep.subr.bf16.mxu0 0
    %172 = vmatpush1.bf16.msra.mxu0 0
    %173 = vmatprep.subr.bf16.mxu0 0
    %174 = vmatpush1.bf16.msra.mxu0 0
    %175 = vmatprep.subr.bf16.mxu0 0
    %176 = vmatpush1.bf16.msra.mxu0 0
    %177 = vmatprep.subr.bf16.mxu0 0
    %178 = vmatpush1.bf16.msra.mxu0 0
    %179 = vmatprep.subr.bf16.mxu0 0
    %180 = vmatpush1.bf16.msra.mxu0 0
    %181 = vmatprep.subr.bf16.mxu0 0
    %182 = vmatpush1.bf16.msra.mxu0 0
    %183 = vmatprep.mubr.bf16.mxu0 0
    %184 = vmatmul.mubr.bf16.gmra.mrb[0].mxu0 %v95
    %v185 = vpop.f32.mrb[0].mxu0
    %v186 = vadd.f32 %v101, %v185
    %v187 = vpop.f32.mrb[0].mxu0
    %v188 = vpop.f32.mrb[0].mxu0
    %v189 = vpop.f32.mrb[0].mxu0
    %190 = vdwg.mxu0
    %v191 = vtanh.pop %v186
    %v192 = vld [vmem:[%s5] sm:$0xff]
    %v193 = vld [vmem:[%s5 + $0x8] sm:$0xff]
    %v194 = vld [vmem:[%s5 + $0x10] sm:$0xff]
    %v195 = vld [vmem:[%s5 + $0x18] sm:$0xff]
    %v196 = vld [vmem:[%s5 + $0x20] sm:$0xff]
    %v197 = vld [vmem:[%s5 + $0x28] sm:$0xff]
    %v198 = vld [vmem:[%s5 + $0x30] sm:$0xff]
    %v199 = vld [vmem:[%s5 + $0x38] sm:$0xff]
    %v200 = vld [vmem:[%s5 + $0x40] sm:$0xff]
    %v201 = vld [vmem:[%s5 + $0x48] sm:$0xff]
    %v202 = vld [vmem:[%s5 + $0x50] sm:$0xff]
    %v203 = vld [vmem:[%s5 + $0x58] sm:$0xff]
    %v204 = vld [vmem:[%s5 + $0x60] sm:$0xff]
    %v205 = vld [vmem:[%s5 + $0x68] sm:$0xff]
    %v206 = vld [vmem:[%s5 + $0x70] sm:$0xff]
    %v207 = vld [vmem:[%s5 + $0x78] sm:$0xff]
    %v208 = vld [vmem:[%s5 + $0x80] sm:$0xff]
    %v209 = vld [vmem:[%s5 + $0x88] sm:$0xff]
    %v210 = vld [vmem:[%s5 + $0x90] sm:$0xff]
    %v211 = vld [vmem:[%s5 + $0x98] sm:$0xff]
    %v212 = vld [vmem:[%s5 + $0xa0] sm:$0xff]
    %v213 = vld [vmem:[%s5 + $0xa8] sm:$0xff]
    %v214 = vld [vmem:[%s5 + $0xb0] sm:$0xff]
    %v215 = vld [vmem:[%s5 + $0xb8] sm:$0xff]
    %v216 = vld [vmem:[%s5 + $0xc0] sm:$0xff]
    %v217 = vld [vmem:[%s5 + $0xc8] sm:$0xff]
    %v218 = vld [vmem:[%s5 + $0xd0] sm:$0xff]
    %v219 = vld [vmem:[%s5 + $0xd8] sm:$0xff]
    %v220 = vld [vmem:[%s5 + $0xe0] sm:$0xff]
    %v221 = vld [vmem:[%s5 + $0xe8] sm:$0xff]
    %v222 = vld [vmem:[%s5 + $0xf0] sm:$0xff]
    %v223 = vld [vmem:[%s5 + $0xf8] sm:$0xff]
    %v224 = vpack.c.bf16 %v191, %v191
    %v225 = vld [vmem:[%s6] sm:$0xf]
    %v227 = vlaneseq
    %v228 = vshrl.u32 %v227, 7
    %v229 = vsub.s32 0, %v228
    %v230 = vrot.slane %v225, %v229
    %v231 = vlaneseq
    %v232 = vshrl.u32 %v231, 7
    %v233 = vsub.s32 1, %v232
    %v234 = vrot.slane %v225, %v233
    %v235 = vlaneseq
    %v236 = vshrl.u32 %v235, 7
    %v237 = vsub.s32 2, %v236
    %v238 = vrot.slane %v225, %v237
    %v239 = vlaneseq
    %v240 = vshrl.u32 %v239, 7
    %v241 = vsub.s32 3, %v240
    %v242 = vrot.slane %v225, %v241
    %v279 = vunpack.c.l.b16 %v192
    %v280 = vunpack.c.h.b16 %v192
    %v281 = vunpack.c.l.b16 %v193
    %v282 = vunpack.c.h.b16 %v193
    %v283 = vunpack.c.l.b16 %v194
    %v284 = vunpack.c.h.b16 %v194
    %v285 = vunpack.c.l.b16 %v195
    %v286 = vunpack.c.h.b16 %v195
    %v287 = vunpack.c.l.b16 %v196
    %v288 = vunpack.c.h.b16 %v196
    %v289 = vunpack.c.l.b16 %v197
    %v290 = vunpack.c.h.b16 %v197
    %v291 = vunpack.c.l.b16 %v198
    %v292 = vunpack.c.h.b16 %v198
    %v293 = vunpack.c.l.b16 %v199
    %v294 = vunpack.c.h.b16 %v199
    %v295 = vunpack.c.l.b16 %v200
    %v296 = vunpack.c.h.b16 %v200
    %v297 = vunpack.c.l.b16 %v201
    %v298 = vunpack.c.h.b16 %v201
    %v299 = vunpack.c.l.b16 %v202
    %v300 = vunpack.c.h.b16 %v202
    %v301 = vunpack.c.l.b16 %v203
    %v302 = vunpack.c.h.b16 %v203
    %v303 = vunpack.c.l.b16 %v204
    %v304 = vunpack.c.h.b16 %v204
    %v305 = vunpack.c.l.b16 %v205
    %v306 = vunpack.c.h.b16 %v205
    %v307 = vunpack.c.l.b16 %v206
    %v308 = vunpack.c.h.b16 %v206
    %v309 = vunpack.c.l.b16 %v207
    %v310 = vunpack.c.h.b16 %v207
    %v311 = vunpack.c.l.b16 %v208
    %v312 = vunpack.c.h.b16 %v208
    %v313 = vunpack.c.l.b16 %v209
    %v314 = vunpack.c.h.b16 %v209
    %v315 = vunpack.c.l.b16 %v210
    %v316 = vunpack.c.h.b16 %v210
    %v317 = vunpack.c.l.b16 %v211
    %v318 = vunpack.c.h.b16 %v211
    %v319 = vunpack.c.l.b16 %v212
    %v320 = vunpack.c.h.b16 %v212
    %v321 = vunpack.c.l.b16 %v213
    %v322 = vunpack.c.h.b16 %v213
    %v323 = vunpack.c.l.b16 %v214
    %v324 = vunpack.c.h.b16 %v214
    %v325 = vunpack.c.l.b16 %v215
    %v326 = vunpack.c.h.b16 %v215
    %v327 = vunpack.c.l.b16 %v216
    %v328 = vunpack.c.h.b16 %v216
    %v329 = vunpack.c.l.b16 %v217
    %v330 = vunpack.c.h.b16 %v217
    %v331 = vunpack.c.l.b16 %v218
    %v332 = vunpack.c.h.b16 %v218
    %v333 = vunpack.c.l.b16 %v219
    %v334 = vunpack.c.h.b16 %v219
    %v335 = vunpack.c.l.b16 %v220
    %v336 = vunpack.c.h.b16 %v220
    %v337 = vunpack.c.l.b16 %v221
    %v338 = vunpack.c.h.b16 %v221
    %v339 = vunpack.c.l.b16 %v222
    %v340 = vunpack.c.h.b16 %v222
    %v341 = vunpack.c.l.b16 %v223
    %v342 = vunpack.c.h.b16 %v223
    %v343 = vpack.c.b16 %v283, %v279
    %v344 = vpack.c.b16 %v284, %v280
    %v345 = vpack.c.b16 %v285, %v281
    %v346 = vpack.c.b16 %v286, %v282
    %v347 = vpack.c.b16 %v291, %v287
    %v348 = vpack.c.b16 %v292, %v288
    %v349 = vpack.c.b16 %v293, %v289
    %v350 = vpack.c.b16 %v294, %v290
    %v351 = vpack.c.b16 %v299, %v295
    %v352 = vpack.c.b16 %v300, %v296
    %v353 = vpack.c.b16 %v301, %v297
    %v354 = vpack.c.b16 %v302, %v298
    %v355 = vpack.c.b16 %v307, %v303
    %v356 = vpack.c.b16 %v308, %v304
    %v357 = vpack.c.b16 %v309, %v305
    %v358 = vpack.c.b16 %v310, %v306
    %v359 = vpack.c.b16 %v315, %v311
    %v360 = vpack.c.b16 %v316, %v312
    %v361 = vpack.c.b16 %v317, %v313
    %v362 = vpack.c.b16 %v318, %v314
    %v363 = vpack.c.b16 %v323, %v319
    %v364 = vpack.c.b16 %v324, %v320
    %v365 = vpack.c.b16 %v325, %v321
    %v366 = vpack.c.b16 %v326, %v322
    %v367 = vpack.c.b16 %v331, %v327
    %v368 = vpack.c.b16 %v332, %v328
    %v369 = vpack.c.b16 %v333, %v329
    %v370 = vpack.c.b16 %v334, %v330
    %v371 = vpack.c.b16 %v339, %v335
    %v372 = vpack.c.b16 %v340, %v336
    %v373 = vpack.c.b16 %v341, %v337
    %v374 = vpack.c.b16 %v342, %v338
    %407 = vmatprep.subr.bf16.mxu0 %v344
    %408 = vmatpush1.bf16.msra.mxu0 %v343
    %409 = vmatprep.subr.bf16.mxu0 %v348
    %410 = vmatpush1.bf16.msra.mxu0 %v347
    %411 = vmatprep.subr.bf16.mxu0 %v352
    %412 = vmatpush1.bf16.msra.mxu0 %v351
    %413 = vmatprep.subr.bf16.mxu0 %v356
    %414 = vmatpush1.bf16.msra.mxu0 %v355
    %415 = vmatprep.subr.bf16.mxu0 %v360
    %416 = vmatpush1.bf16.msra.mxu0 %v359
    %417 = vmatprep.subr.bf16.mxu0 %v364
    %418 = vmatpush1.bf16.msra.mxu0 %v363
    %419 = vmatprep.subr.bf16.mxu0 %v368
    %420 = vmatpush1.bf16.msra.mxu0 %v367
    %421 = vmatprep.subr.bf16.mxu0 %v372
    %422 = vmatpush1.bf16.msra.mxu0 %v371
    %423 = vmatprep.subr.bf16.mxu0 0
    %424 = vmatpush1.bf16.msra.mxu0 0
    %425 = vmatprep.subr.bf16.mxu0 0
    %426 = vmatpush1.bf16.msra.mxu0 0
    %427 = vmatprep.subr.bf16.mxu0 0
    %428 = vmatpush1.bf16.msra.mxu0 0
    %429 = vmatprep.subr.bf16.mxu0 0
    %430 = vmatpush1.bf16.msra.mxu0 0
    %431 = vmatprep.subr.bf16.mxu0 0
    %432 = vmatpush1.bf16.msra.mxu0 0
    %433 = vmatprep.subr.bf16.mxu0 0
    %434 = vmatpush1.bf16.msra.mxu0 0
    %435 = vmatprep.subr.bf16.mxu0 0
    %436 = vmatpush1.bf16.msra.mxu0 0
    %437 = vmatprep.subr.bf16.mxu0 0
    %438 = vmatpush1.bf16.msra.mxu0 0
    %439 = vmatprep.mubr.bf16.mxu0 0
    %440 = vmatmul.mubr.bf16.gmra.mrb[0].mxu0 %v224
    %v441 = vpop.f32.mrb[0].mxu0
    %v442 = vadd.f32 %v230, %v441
    %v443 = vpop.f32.mrb[0].mxu0
    %v444 = vadd.f32 %v234, %v443
    %v445 = vpop.f32.mrb[0].mxu0
    %v446 = vpop.f32.mrb[0].mxu0
    %447 = vdwg.mxu0
    %448 = vmatprep.subr.bf16.mxu0 %v346
    %449 = vmatpush1.bf16.msra.mxu0 %v345
    %450 = vmatprep.subr.bf16.mxu0 %v350
    %451 = vmatpush1.bf16.msra.mxu0 %v349
    %452 = vmatprep.subr.bf16.mxu0 %v354
    %453 = vmatpush1.bf16.msra.mxu0 %v353
    %454 = vmatprep.subr.bf16.mxu0 %v358
    %455 = vmatpush1.bf16.msra.mxu0 %v357
    %456 = vmatprep.subr.bf16.mxu0 %v362
    %457 = vmatpush1.bf16.msra.mxu0 %v361
    %458 = vmatprep.subr.bf16.mxu0 %v366
    %459 = vmatpush1.bf16.msra.mxu0 %v365
    %460 = vmatprep.subr.bf16.mxu0 %v370
    %461 = vmatpush1.bf16.msra.mxu0 %v369
    %462 = vmatprep.subr.bf16.mxu0 %v374
    %463 = vmatpush1.bf16.msra.mxu0 %v373
    %464 = vmatprep.subr.bf16.mxu0 0
    %465 = vmatpush1.bf16.msra.mxu0 0
    %466 = vmatprep.subr.bf16.mxu0 0
    %467 = vmatpush1.bf16.msra.mxu0 0
    %468 = vmatprep.subr.bf16.mxu0 0
    %469 = vmatpush1.bf16.msra.mxu0 0
    %470 = vmatprep.subr.bf16.mxu0 0
    %471 = vmatpush1.bf16.msra.mxu0 0
    %472 = vmatprep.subr.bf16.mxu0 0
    %473 = vmatpush1.bf16.msra.mxu0 0
    %474 = vmatprep.subr.bf16.mxu0 0
    %475 = vmatpush1.bf16.msra.mxu0 0
    %476 = vmatprep.subr.bf16.mxu0 0
    %477 = vmatpush1.bf16.msra.mxu0 0
    %478 = vmatprep.subr.bf16.mxu0 0
    %479 = vmatpush1.bf16.msra.mxu0 0
    %480 = vmatprep.mubr.bf16.mxu0 0
    %481 = vmatmul.mubr.bf16.gmra.mrb[0].mxu0 %v224
    %v482 = vpop.f32.mrb[0].mxu0
    %v483 = vadd.f32 %v238, %v482
    %v484 = vpop.f32.mrb[0].mxu0
    %v485 = vadd.f32 %v242, %v484
    %v486 = vpop.f32.mrb[0].mxu0
    %v487 = vpop.f32.mrb[0].mxu0
    %488 = vdwg.mxu0
    %v489 = vsub.f32 0.0, %v442
    %v490 = vsub.f32 0.0, %v444
    %v491 = vsub.f32 0.0, %v483
    %v492 = vsub.f32 0.0, %v485
    %v493 = vmul.f32 %v489, 1.442695
    %v494 = vpow.pop %v493
    %v495 = vmul.f32 %v490, 1.442695
    %v496 = vpow.pop %v495
    %v497 = vmul.f32 %v491, 1.442695
    %v498 = vpow.pop %v497
    %v499 = vmul.f32 %v492, 1.442695
    %v500 = vpow.pop %v499
    %v501 = vadd.f32 %v494, 1.0
    %v502 = vadd.f32 %v496, 1.0
    %v503 = vadd.f32 %v498, 1.0
    %v504 = vadd.f32 %v500, 1.0
    %v505 = vrcp.pop %v501
    %v506 = vmul.f32 1.0, %v505
    %v507 = vrcp.pop %v502
    %v508 = vmul.f32 1.0, %v507
    %v509 = vrcp.pop %v503
    %v510 = vmul.f32 1.0, %v509
    %v511 = vrcp.pop %v504
    %v512 = vmul.f32 1.0, %v511
    %v513 = vmul.f32 %v442, %v506
    %v514 = vmul.f32 %v444, %v508
    %v515 = vmul.f32 %v483, %v510
    %v516 = vmul.f32 %v485, %v512
    %v517 = vld [vmem:[%s7] sm:$0xff]
    %v518 = vld [vmem:[%s7 + $0x8] sm:$0xff]
    %v519 = vld [vmem:[%s7 + $0x10] sm:$0xff]
    %v520 = vld [vmem:[%s7 + $0x18] sm:$0xff]
    %v521 = vld [vmem:[%s7 + $0x20] sm:$0xff]
    %v522 = vld [vmem:[%s7 + $0x28] sm:$0xff]
    %v523 = vld [vmem:[%s7 + $0x30] sm:$0xff]
    %v524 = vld [vmem:[%s7 + $0x38] sm:$0xff]
    %v525 = vld [vmem:[%s7 + $0x40] sm:$0xff]
    %v526 = vld [vmem:[%s7 + $0x48] sm:$0xff]
    %v527 = vld [vmem:[%s7 + $0x50] sm:$0xff]
    %v528 = vld [vmem:[%s7 + $0x58] sm:$0xff]
    %v529 = vld [vmem:[%s7 + $0x60] sm:$0xff]
    %v530 = vld [vmem:[%s7 + $0x68] sm:$0xff]
    %v531 = vld [vmem:[%s7 + $0x70] sm:$0xff]
    %v532 = vld [vmem:[%s7 + $0x78] sm:$0xff]
    %v533 = vld [vmem:[%s7 + $0x80] sm:$0xff]
    %v534 = vld [vmem:[%s7 + $0x88] sm:$0xff]
    %v535 = vld [vmem:[%s7 + $0x90] sm:$0xff]
    %v536 = vld [vmem:[%s7 + $0x98] sm:$0xff]
    %v537 = vld [vmem:[%s7 + $0xa0] sm:$0xff]
    %v538 = vld [vmem:[%s7 + $0xa8] sm:$0xff]
    %v539 = vld [vmem:[%s7 + $0xb0] sm:$0xff]
    %v540 = vld [vmem:[%s7 + $0xb8] sm:$0xff]
    %v541 = vld [vmem:[%s7 + $0xc0] sm:$0xff]
    %v542 = vld [vmem:[%s7 + $0xc8] sm:$0xff]
    %v543 = vld [vmem:[%s7 + $0xd0] sm:$0xff]
    %v544 = vld [vmem:[%s7 + $0xd8] sm:$0xff]
    %v545 = vld [vmem:[%s7 + $0xe0] sm:$0xff]
    %v546 = vld [vmem:[%s7 + $0xe8] sm:$0xff]
    %v547 = vld [vmem:[%s7 + $0xf0] sm:$0xff]
    %v548 = vld [vmem:[%s7 + $0xf8] sm:$0xff]
    %v549 = vld [vmem:[%s7 + $0x100] sm:$0xff]
    %v550 = vld [vmem:[%s7 + $0x108] sm:$0xff]
    %v551 = vld [vmem:[%s7 + $0x110] sm:$0xff]
    %v552 = vld [vmem:[%s7 + $0x118] sm:$0xff]
    %v553 = vld [vmem:[%s7 + $0x120] sm:$0xff]
    %v554 = vld [vmem:[%s7 + $0x128] sm:$0xff]
    %v555 = vld [vmem:[%s7 + $0x130] sm:$0xff]
    %v556 = vld [vmem:[%s7 + $0x138] sm:$0xff]
    %v557 = vld [vmem:[%s7 + $0x140] sm:$0xff]
    %v558 = vld [vmem:[%s7 + $0x148] sm:$0xff]
    %v559 = vld [vmem:[%s7 + $0x150] sm:$0xff]
    %v560 = vld [vmem:[%s7 + $0x158] sm:$0xff]
    %v561 = vld [vmem:[%s7 + $0x160] sm:$0xff]
    %v562 = vld [vmem:[%s7 + $0x168] sm:$0xff]
    %v563 = vld [vmem:[%s7 + $0x170] sm:$0xff]
    %v564 = vld [vmem:[%s7 + $0x178] sm:$0xff]
    %v565 = vld [vmem:[%s7 + $0x180] sm:$0xff]
    %v566 = vld [vmem:[%s7 + $0x188] sm:$0xff]
    %v567 = vld [vmem:[%s7 + $0x190] sm:$0xff]
    %v568 = vld [vmem:[%s7 + $0x198] sm:$0xff]
    %v569 = vld [vmem:[%s7 + $0x1a0] sm:$0xff]
    %v570 = vld [vmem:[%s7 + $0x1a8] sm:$0xff]
    %v571 = vld [vmem:[%s7 + $0x1b0] sm:$0xff]
    %v572 = vld [vmem:[%s7 + $0x1b8] sm:$0xff]
    %v573 = vld [vmem:[%s7 + $0x1c0] sm:$0xff]
    %v574 = vld [vmem:[%s7 + $0x1c8] sm:$0xff]
    %v575 = vld [vmem:[%s7 + $0x1d0] sm:$0xff]
    %v576 = vld [vmem:[%s7 + $0x1d8] sm:$0xff]
    %v577 = vld [vmem:[%s7 + $0x1e0] sm:$0xff]
    %v578 = vld [vmem:[%s7 + $0x1e8] sm:$0xff]
    %v579 = vld [vmem:[%s7 + $0x1f0] sm:$0xff]
    %v580 = vld [vmem:[%s7 + $0x1f8] sm:$0xff]
    %v581 = vpack.c.bf16 %v513, %v513
    %v582 = vpack.c.bf16 %v514, %v514
    %v583 = vpack.c.bf16 %v515, %v515
    %v584 = vpack.c.bf16 %v516, %v516
    %v585 = vld [vmem:[%s8] sm:$0x3]
    %v587 = vlaneseq
    %v588 = vshrl.u32 %v587, 7
    %v589 = vsub.s32 0, %v588
    %v590 = vrot.slane %v585, %v589
    %v591 = vlaneseq
    %v592 = vshrl.u32 %v591, 7
    %v593 = vsub.s32 1, %v592
    %v594 = vrot.slane %v585, %v593
    %v661 = vunpack.c.l.b16 %v517
    %v662 = vunpack.c.h.b16 %v517
    %v663 = vunpack.c.l.b16 %v518
    %v664 = vunpack.c.h.b16 %v518
    %v665 = vunpack.c.l.b16 %v519
    %v666 = vunpack.c.h.b16 %v519
    %v667 = vunpack.c.l.b16 %v520
    %v668 = vunpack.c.h.b16 %v520
    %v669 = vunpack.c.l.b16 %v521
    %v670 = vunpack.c.h.b16 %v521
    %v671 = vunpack.c.l.b16 %v522
    %v672 = vunpack.c.h.b16 %v522
    %v673 = vunpack.c.l.b16 %v523
    %v674 = vunpack.c.h.b16 %v523
    %v675 = vunpack.c.l.b16 %v524
    %v676 = vunpack.c.h.b16 %v524
    %v677 = vunpack.c.l.b16 %v525
    %v678 = vunpack.c.h.b16 %v525
    %v679 = vunpack.c.l.b16 %v526
    %v680 = vunpack.c.h.b16 %v526
    %v681 = vunpack.c.l.b16 %v527
    %v682 = vunpack.c.h.b16 %v527
    %v683 = vunpack.c.l.b16 %v528
    %v684 = vunpack.c.h.b16 %v528
    %v685 = vunpack.c.l.b16 %v529
    %v686 = vunpack.c.h.b16 %v529
    %v687 = vunpack.c.l.b16 %v530
    %v688 = vunpack.c.h.b16 %v530
    %v689 = vunpack.c.l.b16 %v531
    %v690 = vunpack.c.h.b16 %v531
    %v691 = vunpack.c.l.b16 %v532
    %v692 = vunpack.c.h.b16 %v532
    %v693 = vunpack.c.l.b16 %v533
    %v694 = vunpack.c.h.b16 %v533
    %v695 = vunpack.c.l.b16 %v534
    %v696 = vunpack.c.h.b16 %v534
    %v697 = vunpack.c.l.b16 %v535
    %v698 = vunpack.c.h.b16 %v535
    %v699 = vunpack.c.l.b16 %v536
    %v700 = vunpack.c.h.b16 %v536
    %v701 = vunpack.c.l.b16 %v537
    %v702 = vunpack.c.h.b16 %v537
    %v703 = vunpack.c.l.b16 %v538
    %v704 = vunpack.c.h.b16 %v538
    %v705 = vunpack.c.l.b16 %v539
    %v706 = vunpack.c.h.b16 %v539
    %v707 = vunpack.c.l.b16 %v540
    %v708 = vunpack.c.h.b16 %v540
    %v709 = vunpack.c.l.b16 %v541
    %v710 = vunpack.c.h.b16 %v541
    %v711 = vunpack.c.l.b16 %v542
    %v712 = vunpack.c.h.b16 %v542
    %v713 = vunpack.c.l.b16 %v543
    %v714 = vunpack.c.h.b16 %v543
    %v715 = vunpack.c.l.b16 %v544
    %v716 = vunpack.c.h.b16 %v544
    %v717 = vunpack.c.l.b16 %v545
    %v718 = vunpack.c.h.b16 %v545
    %v719 = vunpack.c.l.b16 %v546
    %v720 = vunpack.c.h.b16 %v546
    %v721 = vunpack.c.l.b16 %v547
    %v722 = vunpack.c.h.b16 %v547
    %v723 = vunpack.c.l.b16 %v548
    %v724 = vunpack.c.h.b16 %v548
    %v725 = vunpack.c.l.b16 %v549
    %v726 = vunpack.c.h.b16 %v549
    %v727 = vunpack.c.l.b16 %v550
    %v728 = vunpack.c.h.b16 %v550
    %v729 = vunpack.c.l.b16 %v551
    %v730 = vunpack.c.h.b16 %v551
    %v731 = vunpack.c.l.b16 %v552
    %v732 = vunpack.c.h.b16 %v552
    %v733 = vunpack.c.l.b16 %v553
    %v734 = vunpack.c.h.b16 %v553
    %v735 = vunpack.c.l.b16 %v554
    %v736 = vunpack.c.h.b16 %v554
    %v737 = vunpack.c.l.b16 %v555
    %v738 = vunpack.c.h.b16 %v555
    %v739 = vunpack.c.l.b16 %v556
    %v740 = vunpack.c.h.b16 %v556
    %v741 = vunpack.c.l.b16 %v557
    %v742 = vunpack.c.h.b16 %v557
    %v743 = vunpack.c.l.b16 %v558
    %v744 = vunpack.c.h.b16 %v558
    %v745 = vunpack.c.l.b16 %v559
    %v746 = vunpack.c.h.b16 %v559
    %v747 = vunpack.c.l.b16 %v560
    %v748 = vunpack.c.h.b16 %v560
    %v749 = vunpack.c.l.b16 %v561
    %v750 = vunpack.c.h.b16 %v561
    %v751 = vunpack.c.l.b16 %v562
    %v752 = vunpack.c.h.b16 %v562
    %v753 = vunpack.c.l.b16 %v563
    %v754 = vunpack.c.h.b16 %v563
    %v755 = vunpack.c.l.b16 %v564
    %v756 = vunpack.c.h.b16 %v564
    %v757 = vunpack.c.l.b16 %v565
    %v758 = vunpack.c.h.b16 %v565
    %v759 = vunpack.c.l.b16 %v566
    %v760 = vunpack.c.h.b16 %v566
    %v761 = vunpack.c.l.b16 %v567
    %v762 = vunpack.c.h.b16 %v567
    %v763 = vunpack.c.l.b16 %v568
    %v764 = vunpack.c.h.b16 %v568
    %v765 = vunpack.c.l.b16 %v569
    %v766 = vunpack.c.h.b16 %v569
    %v767 = vunpack.c.l.b16 %v570
    %v768 = vunpack.c.h.b16 %v570
    %v769 = vunpack.c.l.b16 %v571
    %v770 = vunpack.c.h.b16 %v571
    %v771 = vunpack.c.l.b16 %v572
    %v772 = vunpack.c.h.b16 %v572
    %v773 = vunpack.c.l.b16 %v573
    %v774 = vunpack.c.h.b16 %v573
    %v775 = vunpack.c.l.b16 %v574
    %v776 = vunpack.c.h.b16 %v574
    %v777 = vunpack.c.l.b16 %v575
    %v778 = vunpack.c.h.b16 %v575
    %v779 = vunpack.c.l.b16 %v576
    %v780 = vunpack.c.h.b16 %v576
    %v781 = vunpack.c.l.b16 %v577
    %v782 = vunpack.c.h.b16 %v577
    %v783 = vunpack.c.l.b16 %v578
    %v784 = vunpack.c.h.b16 %v578
    %v785 = vunpack.c.l.b16 %v579
    %v786 = vunpack.c.h.b16 %v579
    %v787 = vunpack.c.l.b16 %v580
    %v788 = vunpack.c.h.b16 %v580
    %v789 = vpack.c.b16 %v663, %v661
    %v790 = vpack.c.b16 %v664, %v662
    %v791 = vpack.c.b16 %v667, %v665
    %v792 = vpack.c.b16 %v668, %v666
    %v793 = vpack.c.b16 %v671, %v669
    %v794 = vpack.c.b16 %v672, %v670
    %v795 = vpack.c.b16 %v675, %v673
    %v796 = vpack.c.b16 %v676, %v674
    %v797 = vpack.c.b16 %v679, %v677
    %v798 = vpack.c.b16 %v680, %v678
    %v799 = vpack.c.b16 %v683, %v681
    %v800 = vpack.c.b16 %v684, %v682
    %v801 = vpack.c.b16 %v687, %v685
    %v802 = vpack.c.b16 %v688, %v686
    %v803 = vpack.c.b16 %v691, %v689
    %v804 = vpack.c.b16 %v692, %v690
    %v805 = vpack.c.b16 %v695, %v693
    %v806 = vpack.c.b16 %v696, %v694
    %v807 = vpack.c.b16 %v699, %v697
    %v808 = vpack.c.b16 %v700, %v698
    %v809 = vpack.c.b16 %v703, %v701
    %v810 = vpack.c.b16 %v704, %v702
    %v811 = vpack.c.b16 %v707, %v705
    %v812 = vpack.c.b16 %v708, %v706
    %v813 = vpack.c.b16 %v711, %v709
    %v814 = vpack.c.b16 %v712, %v710
    %v815 = vpack.c.b16 %v715, %v713
    %v816 = vpack.c.b16 %v716, %v714
    %v817 = vpack.c.b16 %v719, %v717
    %v818 = vpack.c.b16 %v720, %v718
    %v819 = vpack.c.b16 %v723, %v721
    %v820 = vpack.c.b16 %v724, %v722
    %v821 = vpack.c.b16 %v727, %v725
    %v822 = vpack.c.b16 %v728, %v726
    %v823 = vpack.c.b16 %v731, %v729
    %v824 = vpack.c.b16 %v732, %v730
    %v825 = vpack.c.b16 %v735, %v733
    %v826 = vpack.c.b16 %v736, %v734
    %v827 = vpack.c.b16 %v739, %v737
    %v828 = vpack.c.b16 %v740, %v738
    %v829 = vpack.c.b16 %v743, %v741
    %v830 = vpack.c.b16 %v744, %v742
    %v831 = vpack.c.b16 %v747, %v745
    %v832 = vpack.c.b16 %v748, %v746
    %v833 = vpack.c.b16 %v751, %v749
    %v834 = vpack.c.b16 %v752, %v750
    %v835 = vpack.c.b16 %v755, %v753
    %v836 = vpack.c.b16 %v756, %v754
    %v837 = vpack.c.b16 %v759, %v757
    %v838 = vpack.c.b16 %v760, %v758
    %v839 = vpack.c.b16 %v763, %v761
    %v840 = vpack.c.b16 %v764, %v762
    %v841 = vpack.c.b16 %v767, %v765
    %v842 = vpack.c.b16 %v768, %v766
    %v843 = vpack.c.b16 %v771, %v769
    %v844 = vpack.c.b16 %v772, %v770
    %v845 = vpack.c.b16 %v775, %v773
    %v846 = vpack.c.b16 %v776, %v774
    %v847 = vpack.c.b16 %v779, %v777
    %v848 = vpack.c.b16 %v780, %v778
    %v849 = vpack.c.b16 %v783, %v781
    %v850 = vpack.c.b16 %v784, %v782
    %v851 = vpack.c.b16 %v787, %v785
    %v852 = vpack.c.b16 %v788, %v786
    %917 = vmatprep.subr.bf16.mxu0 %v790
    %918 = vmatpush1.bf16.msra.mxu0 %v789
    %919 = vmatprep.subr.bf16.mxu0 %v792
    %920 = vmatpush1.bf16.msra.mxu0 %v791
    %921 = vmatprep.subr.bf16.mxu0 %v794
    %922 = vmatpush1.bf16.msra.mxu0 %v793
    %923 = vmatprep.subr.bf16.mxu0 %v796
    %924 = vmatpush1.bf16.msra.mxu0 %v795
    %925 = vmatprep.subr.bf16.mxu0 %v798
    %926 = vmatpush1.bf16.msra.mxu0 %v797
    %927 = vmatprep.subr.bf16.mxu0 %v800
    %928 = vmatpush1.bf16.msra.mxu0 %v799
    %929 = vmatprep.subr.bf16.mxu0 %v802
    %930 = vmatpush1.bf16.msra.mxu0 %v801
    %931 = vmatprep.subr.bf16.mxu0 %v804
    %932 = vmatpush1.bf16.msra.mxu0 %v803
    %933 = vmatprep.subr.bf16.mxu0 %v806
    %934 = vmatpush1.bf16.msra.mxu0 %v805
    %935 = vmatprep.subr.bf16.mxu0 %v808
    %936 = vmatpush1.bf16.msra.mxu0 %v807
    %937 = vmatprep.subr.bf16.mxu0 %v810
    %938 = vmatpush1.bf16.msra.mxu0 %v809
    %939 = vmatprep.subr.bf16.mxu0 %v812
    %940 = vmatpush1.bf16.msra.mxu0 %v811
    %941 = vmatprep.subr.bf16.mxu0 %v814
    %942 = vmatpush1.bf16.msra.mxu0 %v813
    %943 = vmatprep.subr.bf16.mxu0 %v816
    %944 = vmatpush1.bf16.msra.mxu0 %v815
    %945 = vmatprep.subr.bf16.mxu0 %v818
    %946 = vmatpush1.bf16.msra.mxu0 %v817
    %947 = vmatprep.subr.bf16.mxu0 %v820
    %948 = vmatpush1.bf16.msra.mxu0 %v819
    %949 = vmatprep.mubr.bf16.mxu0 %v582
    %950 = vmatmul.mubr.bf16.gmra.mrb[0].mxu0 %v581
    %v951 = vpop.f32.mrb[0].mxu0
    %v952 = vadd.f32 %v590, %v951
    %v953 = vpop.f32.mrb[0].mxu0
    %v954 = vadd.f32 %v594, %v953
    %v955 = vpop.f32.mrb[0].mxu0
    %v956 = vpop.f32.mrb[0].mxu0
    %957 = vdwg.mxu0
    %958 = vmatprep.subr.bf16.mxu0 %v822
    %959 = vmatpush1.bf16.msra.mxu0 %v821
    %960 = vmatprep.subr.bf16.mxu0 %v824
    %961 = vmatpush1.bf16.msra.mxu0 %v823
    %962 = vmatprep.subr.bf16.mxu0 %v826
    %963 = vmatpush1.bf16.msra.mxu0 %v825
    %964 = vmatprep.subr.bf16.mxu0 %v828
    %965 = vmatpush1.bf16.msra.mxu0 %v827
    %966 = vmatprep.subr.bf16.mxu0 %v830
    %967 = vmatpush1.bf16.msra.mxu0 %v829
    %968 = vmatprep.subr.bf16.mxu0 %v832
    %969 = vmatpush1.bf16.msra.mxu0 %v831
    %970 = vmatprep.subr.bf16.mxu0 %v834
    %971 = vmatpush1.bf16.msra.mxu0 %v833
    %972 = vmatprep.subr.bf16.mxu0 %v836
    %973 = vmatpush1.bf16.msra.mxu0 %v835
    %974 = vmatprep.subr.bf16.mxu0 %v838
    %975 = vmatpush1.bf16.msra.mxu0 %v837
    %976 = vmatprep.subr.bf16.mxu0 %v840
    %977 = vmatpush1.bf16.msra.mxu0 %v839
    %978 = vmatprep.subr.bf16.mxu0 %v842
    %979 = vmatpush1.bf16.msra.mxu0 %v841
    %980 = vmatprep.subr.bf16.mxu0 %v844
    %981 = vmatpush1.bf16.msra.mxu0 %v843
    %982 = vmatprep.subr.bf16.mxu0 %v846
    %983 = vmatpush1.bf16.msra.mxu0 %v845
    %984 = vmatprep.subr.bf16.mxu0 %v848
    %985 = vmatpush1.bf16.msra.mxu0 %v847
    %986 = vmatprep.subr.bf16.mxu0 %v850
    %987 = vmatpush1.bf16.msra.mxu0 %v849
    %988 = vmatprep.subr.bf16.mxu0 %v852
    %989 = vmatpush1.bf16.msra.mxu0 %v851
    %990 = vmatprep.mubr.bf16.mxu0 %v584
    %991 = vmatmul.mubr.bf16.gmra.mrb[0].mxu0 %v583
    %v992 = vpop.f32.mrb[0].mxu0
    %v993 = vadd.f32 %v952, %v992
    %v994 = vpop.f32.mrb[0].mxu0
    %v995 = vadd.f32 %v954, %v994
    %v996 = vpop.f32.mrb[0].mxu0
    %v997 = vpop.f32.mrb[0].mxu0
    %998 = vdwg.mxu0
    %v999 = vsub.f32 0.0, %v993
    %v1000 = vsub.f32 0.0, %v995
    %v1001 = vmul.f32 %v999, 1.442695
    %v1002 = vpow.pop %v1001
    %v1003 = vmul.f32 %v1000, 1.442695
    %v1004 = vpow.pop %v1003
    %v1005 = vadd.f32 %v1002, 1.0
    %v1006 = vadd.f32 %v1004, 1.0
    %v1007 = vrcp.pop %v1005
    %v1008 = vmul.f32 1.0, %v1007
    %v1009 = vrcp.pop %v1006
    %v1010 = vmul.f32 1.0, %v1009
    %v1011 = vmul.f32 %v993, %v1008
    %v1012 = vmul.f32 %v995, %v1010
    %v1013 = vld [vmem:[%s9] sm:$0xf]
    %v1014 = vld [vmem:[%s9 + $0x4] sm:$0xf]
    %v1015 = vld [vmem:[%s9 + $0x8] sm:$0xf]
    %v1016 = vld [vmem:[%s9 + $0xc] sm:$0xf]
    %v1017 = vld [vmem:[%s9 + $0x10] sm:$0xf]
    %v1018 = vld [vmem:[%s9 + $0x14] sm:$0xf]
    %v1019 = vld [vmem:[%s9 + $0x18] sm:$0xf]
    %v1020 = vld [vmem:[%s9 + $0x1c] sm:$0xf]
    %v1021 = vld [vmem:[%s9 + $0x20] sm:$0xf]
    %v1022 = vld [vmem:[%s9 + $0x24] sm:$0xf]
    %v1023 = vld [vmem:[%s9 + $0x28] sm:$0xf]
    %v1024 = vld [vmem:[%s9 + $0x2c] sm:$0xf]
    %v1025 = vld [vmem:[%s9 + $0x30] sm:$0xf]
    %v1026 = vld [vmem:[%s9 + $0x34] sm:$0xf]
    %v1027 = vld [vmem:[%s9 + $0x38] sm:$0xf]
    %v1028 = vld [vmem:[%s9 + $0x3c] sm:$0xf]
    %v1029 = vld [vmem:[%s9 + $0x40] sm:$0xf]
    %v1030 = vld [vmem:[%s9 + $0x44] sm:$0xf]
    %v1031 = vld [vmem:[%s9 + $0x48] sm:$0xf]
    %v1032 = vld [vmem:[%s9 + $0x4c] sm:$0xf]
    %v1033 = vld [vmem:[%s9 + $0x50] sm:$0xf]
    %v1034 = vld [vmem:[%s9 + $0x54] sm:$0xf]
    %v1035 = vld [vmem:[%s9 + $0x58] sm:$0xf]
    %v1036 = vld [vmem:[%s9 + $0x5c] sm:$0xf]
    %v1037 = vld [vmem:[%s9 + $0x60] sm:$0xf]
    %v1038 = vld [vmem:[%s9 + $0x64] sm:$0xf]
    %v1039 = vld [vmem:[%s9 + $0x68] sm:$0xf]
    %v1040 = vld [vmem:[%s9 + $0x6c] sm:$0xf]
    %v1041 = vld [vmem:[%s9 + $0x70] sm:$0xf]
    %v1042 = vld [vmem:[%s9 + $0x74] sm:$0xf]
    %v1043 = vld [vmem:[%s9 + $0x78] sm:$0xf]
    %v1044 = vld [vmem:[%s9 + $0x7c] sm:$0xf]
    %v1045 = vpack.c.bf16 %v1011, %v1011
    %v1046 = vpack.c.bf16 %v1012, %v1012
    %v1047 = vld [vmem:[%s10] sm:$0x1]
    %v1049 = vlaneseq
    %v1050 = vshrl.u32 %v1049, 7
    %v1051 = vsub.s32 0, %v1050
    %v1052 = vrot.slane %v1047, %v1051
    %v1086 = vunpack.c.l.b16 %v1013
    %v1087 = vunpack.c.l.b16 %v1014
    %v1088 = vunpack.c.l.b16 %v1015
    %v1089 = vunpack.c.l.b16 %v1016
    %v1090 = vunpack.c.l.b16 %v1017
    %v1091 = vunpack.c.l.b16 %v1018
    %v1092 = vunpack.c.l.b16 %v1019
    %v1093 = vunpack.c.l.b16 %v1020
    %v1094 = vunpack.c.l.b16 %v1021
    %v1095 = vunpack.c.l.b16 %v1022
    %v1096 = vunpack.c.l.b16 %v1023
    %v1097 = vunpack.c.l.b16 %v1024
    %v1098 = vunpack.c.l.b16 %v1025
    %v1099 = vunpack.c.l.b16 %v1026
    %v1100 = vunpack.c.l.b16 %v1027
    %v1101 = vunpack.c.l.b16 %v1028
    %v1102 = vunpack.c.l.b16 %v1029
    %v1103 = vunpack.c.l.b16 %v1030
    %v1104 = vunpack.c.l.b16 %v1031
    %v1105 = vunpack.c.l.b16 %v1032
    %v1106 = vunpack.c.l.b16 %v1033
    %v1107 = vunpack.c.l.b16 %v1034
    %v1108 = vunpack.c.l.b16 %v1035
    %v1109 = vunpack.c.l.b16 %v1036
    %v1110 = vunpack.c.l.b16 %v1037
    %v1111 = vunpack.c.l.b16 %v1038
    %v1112 = vunpack.c.l.b16 %v1039
    %v1113 = vunpack.c.l.b16 %v1040
    %v1114 = vunpack.c.l.b16 %v1041
    %v1115 = vunpack.c.l.b16 %v1042
    %v1116 = vunpack.c.l.b16 %v1043
    %v1117 = vunpack.c.l.b16 %v1044
    %v1118 = vpack.c.b16 %v1087, %v1086
    %v1119 = vpack.c.b16 %v1089, %v1088
    %v1120 = vpack.c.b16 %v1091, %v1090
    %v1121 = vpack.c.b16 %v1093, %v1092
    %v1122 = vpack.c.b16 %v1095, %v1094
    %v1123 = vpack.c.b16 %v1097, %v1096
    %v1124 = vpack.c.b16 %v1099, %v1098
    %v1125 = vpack.c.b16 %v1101, %v1100
    %v1126 = vpack.c.b16 %v1103, %v1102
    %v1127 = vpack.c.b16 %v1105, %v1104
    %v1128 = vpack.c.b16 %v1107, %v1106
    %v1129 = vpack.c.b16 %v1109, %v1108
    %v1130 = vpack.c.b16 %v1111, %v1110
    %v1131 = vpack.c.b16 %v1113, %v1112
    %v1132 = vpack.c.b16 %v1115, %v1114
    %v1133 = vpack.c.b16 %v1117, %v1116
    %1150 = vmatprep.subr.bf16.mxu0 0
    %1151 = vmatpush1.bf16.msra.mxu0 %v1118
    %1152 = vmatprep.subr.bf16.mxu0 0
    %1153 = vmatpush1.bf16.msra.mxu0 %v1119
    %1154 = vmatprep.subr.bf16.mxu0 0
    %1155 = vmatpush1.bf16.msra.mxu0 %v1120
    %1156 = vmatprep.subr.bf16.mxu0 0
    %1157 = vmatpush1.bf16.msra.mxu0 %v1121
    %1158 = vmatprep.subr.bf16.mxu0 0
    %1159 = vmatpush1.bf16.msra.mxu0 %v1122
    %1160 = vmatprep.subr.bf16.mxu0 0
    %1161 = vmatpush1.bf16.msra.mxu0 %v1123
    %1162 = vmatprep.subr.bf16.mxu0 0
    %1163 = vmatpush1.bf16.msra.mxu0 %v1124
    %1164 = vmatprep.subr.bf16.mxu0 0
    %1165 = vmatpush1.bf16.msra.mxu0 %v1125
    %1166 = vmatprep.subr.bf16.mxu0 0
    %1167 = vmatpush1.bf16.msra.mxu0 %v1126
    %1168 = vmatprep.subr.bf16.mxu0 0
    %1169 = vmatpush1.bf16.msra.mxu0 %v1127
    %1170 = vmatprep.subr.bf16.mxu0 0
    %1171 = vmatpush1.bf16.msra.mxu0 %v1128
    %1172 = vmatprep.subr.bf16.mxu0 0
    %1173 = vmatpush1.bf16.msra.mxu0 %v1129
    %1174 = vmatprep.subr.bf16.mxu0 0
    %1175 = vmatpush1.bf16.msra.mxu0 %v1130
    %1176 = vmatprep.subr.bf16.mxu0 0
    %1177 = vmatpush1.bf16.msra.mxu0 %v1131
    %1178 = vmatprep.subr.bf16.mxu0 0
    %1179 = vmatpush1.bf16.msra.mxu0 %v1132
    %1180 = vmatprep.subr.bf16.mxu0 0
    %1181 = vmatpush1.bf16.msra.mxu0 %v1133
    %1182 = vmatprep.mubr.bf16.mxu0 %v1046
    %1183 = vmatmul.mubr.bf16.gmra.mrb[0].mxu0 %v1045
    %v1184 = vpop.f32.mrb[0].mxu0
    %v1185 = vadd.f32 %v1052, %v1184
    %v1186 = vpop.f32.mrb[0].mxu0
    %v1187 = vpop.f32.mrb[0].mxu0
    %v1188 = vpop.f32.mrb[0].mxu0
    %1189 = vdwg.mxu0
    %v1190 = vsub.f32 0.0, %v1185
    %v1191 = vmul.f32 %v1190, 1.442695
    %v1192 = vpow.pop %v1191
    %v1193 = vadd.f32 %v1192, 1.0
    %v1194 = vrcp.pop %v1193
    %v1195 = vmul.f32 1.0, %v1194
    %v1196 = vmul.f32 %v1185, %v1195
    %v1197 = vld [vmem:[%s11] sm:$0xf]
    %v1198 = vld [vmem:[%s11 + $0x4] sm:$0xf]
    %v1199 = vld [vmem:[%s11 + $0x8] sm:$0xf]
    %v1200 = vld [vmem:[%s11 + $0xc] sm:$0xf]
    %v1201 = vld [vmem:[%s11 + $0x10] sm:$0xf]
    %v1202 = vld [vmem:[%s11 + $0x14] sm:$0xf]
    %v1203 = vld [vmem:[%s11 + $0x18] sm:$0xf]
    %v1204 = vld [vmem:[%s11 + $0x1c] sm:$0xf]
    %v1205 = vpack.c.bf16 %v1196, %v1196
    %v1206 = vld [vmem:[%s12] sm:$0x1]
    %v1208 = vlaneseq
    %v1209 = vshrl.u32 %v1208, 7
    %v1210 = vsub.s32 0, %v1209
    %v1211 = vrot.slane %v1206, %v1210
    %v1221 = vunpack.c.l.b16 %v1197
    %v1222 = vunpack.c.l.b16 %v1198
    %v1223 = vunpack.c.l.b16 %v1199
    %v1224 = vunpack.c.l.b16 %v1200
    %v1225 = vunpack.c.l.b16 %v1201
    %v1226 = vunpack.c.l.b16 %v1202
    %v1227 = vunpack.c.l.b16 %v1203
    %v1228 = vunpack.c.l.b16 %v1204
    %v1229 = vpack.c.b16 %v1222, %v1221
    %v1230 = vpack.c.b16 %v1224, %v1223
    %v1231 = vpack.c.b16 %v1226, %v1225
    %v1232 = vpack.c.b16 %v1228, %v1227
    %vm1237 = vcmask 523264
    %v1239 = vsel %vm1237, %v1205, 0
    %1241 = vmatprep.subr.bf16.mxu0 0
    %1242 = vmatpush1.bf16.msra.mxu0 %v1229
    %1243 = vmatprep.subr.bf16.mxu0 0
    %1244 = vmatpush1.bf16.msra.mxu0 %v1230
    %1245 = vmatprep.subr.bf16.mxu0 0
    %1246 = vmatpush1.bf16.msra.mxu0 %v1231
    %1247 = vmatprep.subr.bf16.mxu0 0
    %1248 = vmatpush1.bf16.msra.mxu0 %v1232
    %1249 = vmatprep.subr.bf16.mxu0 0
    %1250 = vmatpush1.bf16.msra.mxu0 0
    %1251 = vmatprep.subr.bf16.mxu0 0
    %1252 = vmatpush1.bf16.msra.mxu0 0
    %1253 = vmatprep.subr.bf16.mxu0 0
    %1254 = vmatpush1.bf16.msra.mxu0 0
    %1255 = vmatprep.subr.bf16.mxu0 0
    %1256 = vmatpush1.bf16.msra.mxu0 0
    %1257 = vmatprep.subr.bf16.mxu0 0
    %1258 = vmatpush1.bf16.msra.mxu0 0
    %1259 = vmatprep.subr.bf16.mxu0 0
    %1260 = vmatpush1.bf16.msra.mxu0 0
    %1261 = vmatprep.subr.bf16.mxu0 0
    %1262 = vmatpush1.bf16.msra.mxu0 0
    %1263 = vmatprep.subr.bf16.mxu0 0
    %1264 = vmatpush1.bf16.msra.mxu0 0
    %1265 = vmatprep.subr.bf16.mxu0 0
    %1266 = vmatpush1.bf16.msra.mxu0 0
    %1267 = vmatprep.subr.bf16.mxu0 0
    %1268 = vmatpush1.bf16.msra.mxu0 0
    %1269 = vmatprep.subr.bf16.mxu0 0
    %1270 = vmatpush1.bf16.msra.mxu0 0
    %1271 = vmatprep.subr.bf16.mxu0 0
    %1272 = vmatpush1.bf16.msra.mxu0 0
    %1273 = vmatprep.mubr.bf16.mxu0 0
    %1274 = vmatmul.mubr.bf16.gmra.mrb[0].mxu0 %v1239
    %v1275 = vpop.f32.mrb[0].mxu0
    %v1276 = vadd.f32 %v1211, %v1275
    %v1277 = vpop.f32.mrb[0].mxu0
    %v1278 = vpop.f32.mrb[0].mxu0
    %v1279 = vpop.f32.mrb[0].mxu0
    %1280 = vdwg.mxu0
    %vm1281 = vcmask 123904
    %1282 = vst.msk [vmem:[#allocation2] sm:$0x3] %vm1281, %v1276
    // Predicated region
    $region54: #{vision_forward.7} parent=1 // pred_check
      _
    $region55: #{vision_forward.7} parent=1 // pred_check_branch
      %1284 = sbr.rel (0) target = $region57
    $region56: #{vision_forward.7} parent=1 // pred_region
      %s1286 = ssub.s32 32, 32
      %1287 = vsyncadd [#allocation3], %s1286
      %s1289 = sshll.u32 [#allocation2], 4
      %s1290 = int_to_ptr.vmem [resolvable:$true] %s1289
      %1292 = dma.vmem_to_hbm [thread:$0]  %s1290, 32, %s13, [#allocation3]
    $region57: #{vision_forward.7} parent=1 // pred_fallthru
      _
    // Predicated region
    $region58: #{vision_forward.7} parent=1 // pred_check
      _
    $region59: #{vision_forward.7} parent=1 // pred_check_branch
      %1294 = sbr.rel (0) target = $region61
    $region60: #{vision_forward.7} parent=1 // pred_region
      %1295 = dma.done [#allocation3], 32
    $region61: #{vision_forward.7} parent=1 // pred_fallthru
      _
    %1296 = vsyncpa [#allocation3], 1

// kernel: vision_forward.5
$region0: #{vision_forward.5}
  #allocation0 [shape = 'u32[]', space=smem, size = 0x4, offset = 0x4, fixed_abs, tag = 'smem constant byte address 0x4 - core index']
  #allocation1 [shape = 'u32[144,128]{1,0:T(1,128)}', space=vmem, size = 0x12000, scoped, tag = 'internal scratch']
  %s0 = inlined_call_operand.vmem [shape: bf16[2,17,128], index: 0, kind: input, shape index: {}]
  %s1 = inlined_call_operand.vmem [shape: f32[1,128], index: 1, kind: input, shape index: {}]
  %s2 = inlined_call_operand.vmem [shape: f32[1,128], index: 2, kind: input, shape index: {}]
  %s3 = inlined_call_operand.vmem [shape: bf16[128,384], index: 3, kind: input, shape index: {}]
  %s4 = inlined_call_operand.vmem [shape: f32[1,384], index: 4, kind: input, shape index: {}]
  %s5 = inlined_call_operand.vmem [shape: bf16[128,128], index: 5, kind: input, shape index: {}]
  %s6 = inlined_call_operand.vmem [shape: f32[1,128], index: 6, kind: input, shape index: {}]
  %s7 = inlined_call_operand.vmem [shape: f32[1,128], index: 7, kind: input, shape index: {}]
  %s8 = inlined_call_operand.vmem [shape: f32[1,128], index: 8, kind: input, shape index: {}]
  %s9 = inlined_call_operand.vmem [shape: bf16[128,512], index: 9, kind: input, shape index: {}]
  %s10 = inlined_call_operand.vmem [shape: f32[1,512], index: 10, kind: input, shape index: {}]
  %s11 = inlined_call_operand.vmem [shape: bf16[512,128], index: 11, kind: input, shape index: {}]
  %s12 = inlined_call_operand.vmem [shape: f32[1,128], index: 12, kind: input, shape index: {}]
  %s13 = inlined_call_operand.vmem [shape: bf16[2,17,128], index: 13, kind: output, shape index: {}]
  %s14 = sld [smem:[#allocation0]]
  $region85: #{vision_forward.5} parent=0
    _
  %s16 = ssub.s32 1, %s14
  %s17 = scalar_select 0, %s16, %s14
  loop: start=0, step=1, limit=4
  $region2: #{vision_forward.5} parent=0 // loop_pre_header
    _
  $region3: #{vision_forward.5} parent=0 // loop_header
    %s19 = sphi 0, %s23
    %p20 = scmp.ge.s32.totalorder %s19, 4
    %s29 = sphi 0, %s31
    %s32 = sphi 0, %s29
    %s33 = sphi 0, %s32
    %s49 = sphi 0, %s33
    %s53 = sphi 0, %s53
    %s55 = sphi 0, %s53
    %s56 = sphi 0, %s55
    %s70 = sphi 0, %s56
    %s74 = sphi 0, %s74
    %s76 = sphi 0, %s74
    %s77 = sphi 0, %s76
    %s91 = sphi 0, %s77
    %s95 = sphi 0, %s95
    %s97 = sphi 0, %s95
    %s98 = sphi 0, %s97
    %s112 = sphi 0, %s98
    %s116 = sphi 0, %s116
    %s118 = sphi 0, %s116
    %s119 = sphi 0, %s118
    %s133 = sphi 0, %s119
    %s137 = sphi 0, %s137
    %s139 = sphi 0, %s137
    %s140 = sphi 0, %s139
    %s154 = sphi 0, %s140
    %s158 = sphi 0, %s158
    %s160 = sphi 0, %s158
    %s161 = sphi 0, %s160
    %s175 = sphi 0, %s161
    %s179 = sphi 0, %s179
    %s181 = sphi 0, %s179
    %s182 = sphi 0, %s181
    %s196 = sphi 0, %s182
    %s200 = sphi 0, %s200
    %s202 = sphi 0, %s200
    %s203 = sphi 0, %s202
    %s217 = sphi 0, %s203
    %s221 = sphi 0, %s221
    %s223 = sphi 0, %s221
    %s224 = sphi 0, %s223
    %s238 = sphi 0, %s224
    %s242 = sphi 0, %s242
    %s244 = sphi 0, %s242
    %s245 = sphi 0, %s244
    %s259 = sphi 0, %s245
    %s263 = sphi 0, %s263
    %s265 = sphi 0, %s263
    %s266 = sphi 0, %s265
    %s280 = sphi 0, %s266
    %s284 = sphi 0, %s284
    %s286 = sphi 0, %s284
    %s287 = sphi 0, %s286
    %s301 = sphi 0, %s287
    %s307 = sphi 0, %s309
    %s310 = sphi 0, %s307
    %s311 = sphi 0, %s310
    %s327 = sphi 0, %s311
  $region4: #{vision_forward.5} parent=0 // loop_header_branch
    %22 = sbr.rel (%p20) target = $region8
  $region5: #{vision_forward.5} parent=0 // loop_body
    %s24 = ssub.s32 %s19, 1
    %s25 = ssub.s32 %s19, 2
    %s26 = sadd.s32 %s19, 1
    %s27 = ssub.s32 %s19, %s26
    %p28 = scmp.eq.s32.totalorder %s27, 0
    %s30 = sadd.s32 %s29, 1
    %s31 = scalar_select %p28, %s29, %s30
    %p34 = pneg %p28
    %p35 = scmp.eq.s32.totalorder %s19, 1
    %p36 = por %p34, %p35
    %p37 = scmp.ne.s32.totalorder %s29, %s32
    %p38 = scmp.eq.s32.totalorder %s19, 0
    %p39 = por %p37, %p38
    %p40 = scmp.ne.s32.totalorder %s29, %s32
    %p41 = scmp.eq.s32.totalorder %s24, 1
    %p42 = por %p40, %p41
    %p43 = scmp.ne.s32.totalorder %s32, %s33
    %p44 = scmp.eq.s32.totalorder %s24, 0
    %p45 = por %p43, %p44
    %p46 = scmp.ne.s32.totalorder %s32, %s33
    %p47 = scmp.eq.s32.totalorder %s25, 1
    %p48 = por %p46, %p47
    %p50 = scmp.ne.s32.totalorder %s33, %s49
    %p51 = scmp.eq.s32.totalorder %s25, 0
    %p52 = por %p50, %p51
    %s54 = sadd.s32 %s53, 1
    %p57 = scmp.eq.s32.totalorder %s19, 1
    %p58 = scmp.ne.s32.totalorder %s53, %s55
    %p59 = scmp.eq.s32.totalorder %s19, 0
    %p60 = por %p58, %p59
    %p61 = scmp.ne.s32.totalorder %s53, %s55
    %p62 = scmp.eq.s32.totalorder %s24, 1
    %p63 = por %p61, %p62
    %p64 = scmp.ne.s32.totalorder %s55, %s56
    %p65 = scmp.eq.s32.totalorder %s24, 0
    %p66 = por %p64, %p65
    %p67 = scmp.ne.s32.totalorder %s55, %s56
    %p68 = scmp.eq.s32.totalorder %s25, 1
    %p69 = por %p67, %p68
    %p71 = scmp.ne.s32.totalorder %s56, %s70
    %p72 = scmp.eq.s32.totalorder %s25, 0
    %p73 = por %p71, %p72
    %s75 = sadd.s32 %s74, 1
    %p78 = scmp.eq.s32.totalorder %s19, 1
    %p79 = scmp.ne.s32.totalorder %s74, %s76
    %p80 = scmp.eq.s32.totalorder %s19, 0
    %p81 = por %p79, %p80
    %p82 = scmp.ne.s32.totalorder %s74, %s76
    %p83 = scmp.eq.s32.totalorder %s24, 1
    %p84 = por %p82, %p83
    %p85 = scmp.ne.s32.totalorder %s76, %s77
    %p86 = scmp.eq.s32.totalorder %s24, 0
    %p87 = por %p85, %p86
    %p88 = scmp.ne.s32.totalorder %s76, %s77
    %p89 = scmp.eq.s32.totalorder %s25, 1
    %p90 = por %p88, %p89
    %p92 = scmp.ne.s32.totalorder %s77, %s91
    %p93 = scmp.eq.s32.totalorder %s25, 0
    %p94 = por %p92, %p93
    %s96 = sadd.s32 %s95, 1
    %p99 = scmp.eq.s32.totalorder %s19, 1
    %p100 = scmp.ne.s32.totalorder %s95, %s97
    %p101 = scmp.eq.s32.totalorder %s19, 0
    %p102 = por %p100, %p101
    %p103 = scmp.ne.s32.totalorder %s95, %s97
    %p104 = scmp.eq.s32.totalorder %s24, 1
    %p105 = por %p103, %p104
    %p106 = scmp.ne.s32.totalorder %s97, %s98
    %p107 = scmp.eq.s32.totalorder %s24, 0
    %p108 = por %p106, %p107
    %p109 = scmp.ne.s32.totalorder %s97, %s98
    %p110 = scmp.eq.s32.totalorder %s25, 1
    %p111 = por %p109, %p110
    %p113 = scmp.ne.s32.totalorder %s98, %s112
    %p114 = scmp.eq.s32.totalorder %s25, 0
    %p115 = por %p113, %p114
    %s117 = sadd.s32 %s116, 1
    %p120 = scmp.eq.s32.totalorder %s19, 1
    %p121 = scmp.ne.s32.totalorder %s116, %s118
    %p122 = scmp.eq.s32.totalorder %s19, 0
    %p123 = por %p121, %p122
    %p124 = scmp.ne.s32.totalorder %s116, %s118
    %p125 = scmp.eq.s32.totalorder %s24, 1
    %p126 = por %p124, %p125
    %p127 = scmp.ne.s32.totalorder %s118, %s119
    %p128 = scmp.eq.s32.totalorder %s24, 0
    %p129 = por %p127, %p128
    %p130 = scmp.ne.s32.totalorder %s118, %s119
    %p131 = scmp.eq.s32.totalorder %s25, 1
    %p132 = por %p130, %p131
    %p134 = scmp.ne.s32.totalorder %s119, %s133
    %p135 = scmp.eq.s32.totalorder %s25, 0
    %p136 = por %p134, %p135
    %s138 = sadd.s32 %s137, 1
    %p141 = scmp.eq.s32.totalorder %s19, 1
    %p142 = scmp.ne.s32.totalorder %s137, %s139
    %p143 = scmp.eq.s32.totalorder %s19, 0
    %p144 = por %p142, %p143
    %p145 = scmp.ne.s32.totalorder %s137, %s139
    %p146 = scmp.eq.s32.totalorder %s24, 1
    %p147 = por %p145, %p146
    %p148 = scmp.ne.s32.totalorder %s139, %s140
    %p149 = scmp.eq.s32.totalorder %s24, 0
    %p150 = por %p148, %p149
    %p151 = scmp.ne.s32.totalorder %s139, %s140
    %p152 = scmp.eq.s32.totalorder %s25, 1
    %p153 = por %p151, %p152
    %p155 = scmp.ne.s32.totalorder %s140, %s154
    %p156 = scmp.eq.s32.totalorder %s25, 0
    %p157 = por %p155, %p156
    %s159 = sadd.s32 %s158, 1
    %p162 = scmp.eq.s32.totalorder %s19, 1
    %p163 = scmp.ne.s32.totalorder %s158, %s160
    %p164 = scmp.eq.s32.totalorder %s19, 0
    %p165 = por %p163, %p164
    %p166 = scmp.ne.s32.totalorder %s158, %s160
    %p167 = scmp.eq.s32.totalorder %s24, 1
    %p168 = por %p166, %p167
    %p169 = scmp.ne.s32.totalorder %s160, %s161
    %p170 = scmp.eq.s32.totalorder %s24, 0
    %p171 = por %p169, %p170
    %p172 = scmp.ne.s32.totalorder %s160, %s161
    %p173 = scmp.eq.s32.totalorder %s25, 1
    %p174 = por %p172, %p173
    %p176 = scmp.ne.s32.totalorder %s161, %s175
    %p177 = scmp.eq.s32.totalorder %s25, 0
    %p178 = por %p176, %p177
    %s180 = sadd.s32 %s179, 1
    %p183 = scmp.eq.s32.totalorder %s19, 1
    %p184 = scmp.ne.s32.totalorder %s179, %s181
    %p185 = scmp.eq.s32.totalorder %s19, 0
    %p186 = por %p184, %p185
    %p187 = scmp.ne.s32.totalorder %s179, %s181
    %p188 = scmp.eq.s32.totalorder %s24, 1
    %p189 = por %p187, %p188
    %p190 = scmp.ne.s32.totalorder %s181, %s182
    %p191 = scmp.eq.s32.totalorder %s24, 0
    %p192 = por %p190, %p191
    %p193 = scmp.ne.s32.totalorder %s181, %s182
    %p194 = scmp.eq.s32.totalorder %s25, 1
    %p195 = por %p193, %p194
    %p197 = scmp.ne.s32.totalorder %s182, %s196
    %p198 = scmp.eq.s32.totalorder %s25, 0
    %p199 = por %p197, %p198
    %s201 = sadd.s32 %s200, 1
    %p204 = scmp.eq.s32.totalorder %s19, 1
    %p205 = scmp.ne.s32.totalorder %s200, %s202
    %p206 = scmp.eq.s32.totalorder %s19, 0
    %p207 = por %p205, %p206
    %p208 = scmp.ne.s32.totalorder %s200, %s202
    %p209 = scmp.eq.s32.totalorder %s24, 1
    %p210 = por %p208, %p209
    %p211 = scmp.ne.s32.totalorder %s202, %s203
    %p212 = scmp.eq.s32.totalorder %s24, 0
    %p213 = por %p211, %p212
    %p214 = scmp.ne.s32.totalorder %s202, %s203
    %p215 = scmp.eq.s32.totalorder %s25, 1
    %p216 = por %p214, %p215
    %p218 = scmp.ne.s32.totalorder %s203, %s217
    %p219 = scmp.eq.s32.totalorder %s25, 0
    %p220 = por %p218, %p219
    %s222 = sadd.s32 %s221, 1
    %p225 = scmp.eq.s32.totalorder %s19, 1
    %p226 = scmp.ne.s32.totalorder %s221, %s223
    %p227 = scmp.eq.s32.totalorder %s19, 0
    %p228 = por %p226, %p227
    %p229 = scmp.ne.s32.totalorder %s221, %s223
    %p230 = scmp.eq.s32.totalorder %s24, 1
    %p231 = por %p229, %p230
    %p232 = scmp.ne.s32.totalorder %s223, %s224
    %p233 = scmp.eq.s32.totalorder %s24, 0
    %p234 = por %p232, %p233
    %p235 = scmp.ne.s32.totalorder %s223, %s224
    %p236 = scmp.eq.s32.totalorder %s25, 1
    %p237 = por %p235, %p236
    %p239 = scmp.ne.s32.totalorder %s224, %s238
    %p240 = scmp.eq.s32.totalorder %s25, 0
    %p241 = por %p239, %p240
    %s243 = sadd.s32 %s242, 1
    %p246 = scmp.eq.s32.totalorder %s19, 1
    %p247 = scmp.ne.s32.totalorder %s242, %s244
    %p248 = scmp.eq.s32.totalorder %s19, 0
    %p249 = por %p247, %p248
    %p250 = scmp.ne.s32.totalorder %s242, %s244
    %p251 = scmp.eq.s32.totalorder %s24, 1
    %p252 = por %p250, %p251
    %p253 = scmp.ne.s32.totalorder %s244, %s245
    %p254 = scmp.eq.s32.totalorder %s24, 0
    %p255 = por %p253, %p254
    %p256 = scmp.ne.s32.totalorder %s244, %s245
    %p257 = scmp.eq.s32.totalorder %s25, 1
    %p258 = por %p256, %p257
    %p260 = scmp.ne.s32.totalorder %s245, %s259
    %p261 = scmp.eq.s32.totalorder %s25, 0
    %p262 = por %p260, %p261
    %s264 = sadd.s32 %s263, 1
    %p267 = scmp.eq.s32.totalorder %s19, 1
    %p268 = scmp.ne.s32.totalorder %s263, %s265
    %p269 = scmp.eq.s32.totalorder %s19, 0
    %p270 = por %p268, %p269
    %p271 = scmp.ne.s32.totalorder %s263, %s265
    %p272 = scmp.eq.s32.totalorder %s24, 1
    %p273 = por %p271, %p272
    %p274 = scmp.ne.s32.totalorder %s265, %s266
    %p275 = scmp.eq.s32.totalorder %s24, 0
    %p276 = por %p274, %p275
    %p277 = scmp.ne.s32.totalorder %s265, %s266
    %p278 = scmp.eq.s32.totalorder %s25, 1
    %p279 = por %p277, %p278
    %p281 = scmp.ne.s32.totalorder %s266, %s280
    %p282 = scmp.eq.s32.totalorder %s25, 0
    %p283 = por %p281, %p282
    %s285 = sadd.s32 %s284, 1
    %p288 = scmp.eq.s32.totalorder %s19, 1
    %p289 = scmp.ne.s32.totalorder %s284, %s286
    %p290 = scmp.eq.s32.totalorder %s19, 0
    %p291 = por %p289, %p290
    %p292 = scmp.ne.s32.totalorder %s284, %s286
    %p293 = scmp.eq.s32.totalorder %s24, 1
    %p294 = por %p292, %p293
    %p295 = scmp.ne.s32.totalorder %s286, %s287
    %p296 = scmp.eq.s32.totalorder %s24, 0
    %p297 = por %p295, %p296
    %p298 = scmp.ne.s32.totalorder %s286, %s287
    %p299 = scmp.eq.s32.totalorder %s25, 1
    %p300 = por %p298, %p299
    %p302 = scmp.ne.s32.totalorder %s287, %s301
    %p303 = scmp.eq.s32.totalorder %s25, 0
    %p304 = por %p302, %p303
    %s305 = ssub.s32 %s19, %s26
    %p306 = scmp.eq.s32.totalorder %s305, 0
    %s308 = sadd.s32 %s307, 1
    %s309 = scalar_select %p306, %s307, %s308
    %p312 = pneg %p306
    %p313 = scmp.eq.s32.totalorder %s19, 1
    %p314 = por %p312, %p313
    %p315 = scmp.ne.s32.totalorder %s307, %s310
    %p316 = scmp.eq.s32.totalorder %s19, 0
    %p317 = por %p315, %p316
    %p318 = scmp.ne.s32.totalorder %s307, %s310
    %p319 = scmp.eq.s32.totalorder %s24, 1
    %p320 = por %p318, %p319
    %p321 = scmp.ne.s32.totalorder %s310, %s311
    %p322 = scmp.eq.s32.totalorder %s24, 0
    %p323 = por %p321, %p322
    %p324 = scmp.ne.s32.totalorder %s310, %s311
    %p325 = scmp.eq.s32.totalorder %s25, 1
    %p326 = por %p324, %p325
    %p328 = scmp.ne.s32.totalorder %s311, %s327
    %p329 = scmp.eq.s32.totalorder %s25, 0
    %p330 = por %p328, %p329
    %p331 = scmp.le.s32.totalorder 1, %s19
    %p332 = scmp.lt.s32.totalorder %s19, 3
    %p333 = pnand %p331, %p332
    %p334 = pneg %p333
    // Predicated region
    $region9: #{vision_forward.5} parent=5 // pred_check
      _
    $region10: #{vision_forward.5} parent=5 // pred_check_branch
      %336 = sbr.rel (%p333) target = $region12
    $region11: #{vision_forward.5} parent=5 // pred_region
      %s337 = ssub.s32 %s19, 1
      // Predicated region
      $region13: #{vision_forward.5} parent=11 // pred_check
        %p338 = pneg %p66
      $region14: #{vision_forward.5} parent=11 // pred_check_branch
        %340 = sbr.rel (%p338) target = $region16
      $region15: #{vision_forward.5} parent=11 // pred_region
        _
      $region16: #{vision_forward.5} parent=11 // pred_fallthru
        _
      // Predicated region
      $region17: #{vision_forward.5} parent=11 // pred_check
        %p341 = pneg %p87
      $region18: #{vision_forward.5} parent=11 // pred_check_branch
        %343 = sbr.rel (%p341) target = $region20
      $region19: #{vision_forward.5} parent=11 // pred_region
        _
      $region20: #{vision_forward.5} parent=11 // pred_fallthru
        _
      // Predicated region
      $region21: #{vision_forward.5} parent=11 // pred_check
        %p344 = pneg %p108
      $region22: #{vision_forward.5} parent=11 // pred_check_branch
        %346 = sbr.rel (%p344) target = $region24
      $region23: #{vision_forward.5} parent=11 // pred_region
        _
      $region24: #{vision_forward.5} parent=11 // pred_fallthru
        _
      // Predicated region
      $region25: #{vision_forward.5} parent=11 // pred_check
        %p347 = pneg %p129
      $region26: #{vision_forward.5} parent=11 // pred_check_branch
        %349 = sbr.rel (%p347) target = $region28
      $region27: #{vision_forward.5} parent=11 // pred_region
        _
      $region28: #{vision_forward.5} parent=11 // pred_fallthru
        _
      // Predicated region
      $region29: #{vision_forward.5} parent=11 // pred_check
        %p350 = pneg %p150
      $region30: #{vision_forward.5} parent=11 // pred_check_branch
        %352 = sbr.rel (%p350) target = $region32
      $region31: #{vision_forward.5} parent=11 // pred_region
        _
      $region32: #{vision_forward.5} parent=11 // pred_fallthru
        _
      // Predicated region
      $region33: #{vision_forward.5} parent=11 // pred_check
        %p353 = pneg %p171
      $region34: #{vision_forward.5} parent=11 // pred_check_branch
        %355 = sbr.rel (%p353) target = $region36
      $region35: #{vision_forward.5} parent=11 // pred_region
        _
      $region36: #{vision_forward.5} parent=11 // pred_fallthru
        _
      // Predicated region
      $region37: #{vision_forward.5} parent=11 // pred_check
        %p356 = pneg %p192
      $region38: #{vision_forward.5} parent=11 // pred_check_branch
        %358 = sbr.rel (%p356) target = $region40
      $region39: #{vision_forward.5} parent=11 // pred_region
        _
      $region40: #{vision_forward.5} parent=11 // pred_fallthru
        _
      // Predicated region
      $region41: #{vision_forward.5} parent=11 // pred_check
        %p359 = pneg %p213
      $region42: #{vision_forward.5} parent=11 // pred_check_branch
        %361 = sbr.rel (%p359) target = $region44
      $region43: #{vision_forward.5} parent=11 // pred_region
        _
      $region44: #{vision_forward.5} parent=11 // pred_fallthru
        _
      // Predicated region
      $region45: #{vision_forward.5} parent=11 // pred_check
        %p362 = pneg %p234
      $region46: #{vision_forward.5} parent=11 // pred_check_branch
        %364 = sbr.rel (%p362) target = $region48
      $region47: #{vision_forward.5} parent=11 // pred_region
        _
      $region48: #{vision_forward.5} parent=11 // pred_fallthru
        _
      // Predicated region
      $region49: #{vision_forward.5} parent=11 // pred_check
        %p365 = pneg %p255
      $region50: #{vision_forward.5} parent=11 // pred_check_branch
        %367 = sbr.rel (%p365) target = $region52
      $region51: #{vision_forward.5} parent=11 // pred_region
        _
      $region52: #{vision_forward.5} parent=11 // pred_fallthru
        _
      // Predicated region
      $region53: #{vision_forward.5} parent=11 // pred_check
        %p368 = pneg %p276
      $region54: #{vision_forward.5} parent=11 // pred_check_branch
        %370 = sbr.rel (%p368) target = $region56
      $region55: #{vision_forward.5} parent=11 // pred_region
        _
      $region56: #{vision_forward.5} parent=11 // pred_fallthru
        _
      // Predicated region
      $region57: #{vision_forward.5} parent=11 // pred_check
        %p371 = pneg %p297
      $region58: #{vision_forward.5} parent=11 // pred_check_branch
        %373 = sbr.rel (%p371) target = $region60
      $region59: #{vision_forward.5} parent=11 // pred_region
        _
      $region60: #{vision_forward.5} parent=11 // pred_fallthru
        _
    $region12: #{vision_forward.5} parent=5 // pred_fallthru
      _
    %p374 = scmp.lt.s32.totalorder %s19, 2
    // Predicated region
    $region61: #{vision_forward.5} parent=5 // pred_check
      %p375 = pneg %p374
    $region62: #{vision_forward.5} parent=5 // pred_check_branch
      %377 = sbr.rel (%p375) target = $region64
    $region63: #{vision_forward.5} parent=5 // pred_region
      // Predicated region
      $region65: #{vision_forward.5} parent=63 // pred_check
        %p378 = pneg %p39
      $region66: #{vision_forward.5} parent=63 // pred_check_branch
        %380 = sbr.rel (%p378) target = $region68
      $region67: #{vision_forward.5} parent=63 // pred_region
        %p381 = scmp.lt.s32.totalorder %s19, 1
        %s382 = scalar_select %p381, %s19, 1
        %s383 = smul.addr %s382, 3
        %s384 = smul.addr %s383, 4
        %s385 = scalar_lea.vmem %s0, %s384
      $region68: #{vision_forward.5} parent=63 // pred_fallthru
        _
    $region64: #{vision_forward.5} parent=5 // pred_fallthru
      _
    %p386 = scmp.le.s32.totalorder 1, %s19
    %p387 = scmp.lt.s32.totalorder %s19, 3
    %p388 = pnand %p386, %p387
    %p389 = pneg %p388
    // Predicated region
    $region69: #{vision_forward.5} parent=5 // pred_check
      _
    $region70: #{vision_forward.5} parent=5 // pred_check_branch
      %391 = sbr.rel (%p388) target = $region72
    $region71: #{vision_forward.5} parent=5 // pred_region
      %s392 = ssub.s32 %s19, 1
      %p393 = scmp.lt.s32.totalorder %s24, 1
      %s394 = scalar_select %p393, %s24, 1
      %s395 = smul.addr %s394, 3
      %s396 = smul.addr %s395, 4
      %s397 = scalar_lea.vmem %s0, %s396
      %p398 = pneg %p45
      %p399 = pneg %p42
      %p400 = pneg %p66
      %p401 = pneg %p63
      %p402 = pneg %p87
      %p403 = pneg %p84
      %p404 = pneg %p108
      %p405 = pneg %p105
      %p406 = pneg %p129
      %p407 = pneg %p126
      %p408 = pneg %p150
      %p409 = pneg %p147
      %p410 = pneg %p171
      %p411 = pneg %p168
      %p412 = pneg %p192
      %p413 = pneg %p189
      %p414 = pneg %p213
      %p415 = pneg %p210
      %p416 = pneg %p234
      %p417 = pneg %p231
      %p418 = pneg %p255
      %p419 = pneg %p252
      %p420 = pneg %p276
      %p421 = pneg %p273
      %p422 = pneg %p297
      %p423 = pneg %p294
      %p424 = pneg %p323
      %p425 = pneg %p320
      %p426 = scmp.lt.s32.totalorder %s24, 1
      %s427 = scalar_select %p426, %s24, 1
      %s428 = smul.addr %s427, 3
      %s429 = smul.addr %s428, 4
      %s430 = scalar_lea.vmem %s13, %s429
      %p431 = scmp.lt.s32.totalorder %s24, 1
      %s432 = scalar_select %p431, %s24, 1
      %s433 = smul.addr %s432, 3
      %s434 = smul.addr %s433, 4
      %s435 = scalar_lea.vmem %s0, %s434
      %p436 = scmp.lt.s32.totalorder %s24, 1
      %s437 = scalar_select %p436, %s24, 1
      %s438 = smul.addr %s437, 3
      %s439 = smul.addr %s438, 4
      %s440 = scalar_lea.vmem %s13, %s439
      %v442 = vld [vmem:[%s435] sm:$0xf]
      %v443 = vld [vmem:[%s435 + $0x4] sm:$0xf]
      %v444 = vld [vmem:[%s435 + $0x8] sm:$0x1]
      %v445 = vunpack.c.l.bf16 %v442
      %v446 = vunpack.c.l.bf16 %v443
      %v447 = vunpack.c.l.bf16 %v444
      %v448 = vld [vmem:[%s1] sm:$0x1]
      %v449 = vld [vmem:[%s2] sm:$0x1]
      %450 = vadd.xlane.f32.xlu0 %v445
      %v451 = vpop.xlane.xlu0 %450
      %452 = vadd.xlane.f32.xlu0 %v446
      %v453 = vpop.xlane.xlu0 %452
      %vm454 = vcmask 1040384
      %v455 = vsel %vm454, %v447, 0.0
      %456 = vadd.xlane.f32.xlu0 %v455
      %v457 = vpop.xlane.xlu0 %456
      %v458 = vrcp.pop 128.0
      %v459 = vmul.f32 %v451, %v458
      %v460 = vmul.f32 %v453, %v458
      %v461 = vmul.f32 %v457, %v458
      %v462 = vsub.f32 %v445, %v459
      %v463 = vsub.f32 %v446, %v460
      %v464 = vsub.f32 %v447, %v461
      %v465 = vmul.f32 %v462, %v462
      %v466 = vmul.f32 %v463, %v463
      %v467 = vmul.f32 %v464, %v464
      %468 = vadd.xlane.f32.xlu0 %v465
      %v469 = vpop.xlane.xlu0 %468
      %470 = vadd.xlane.f32.xlu0 %v466
      %v471 = vpop.xlane.xlu0 %470
      %v472 = vsel %vm454, %v467, 0.0
      %473 = vadd.xlane.f32.xlu0 %v472
      %v474 = vpop.xlane.xlu0 %473
      %v475 = vmul.f32 %v469, %v458
      %v476 = vmul.f32 %v471, %v458
      %v477 = vmul.f32 %v474, %v458
      %v478 = vadd.f32 %v475, 1e-12
      %v479 = vadd.f32 %v476, 1e-12
      %v480 = vadd.f32 %v477, 1e-12
      %v481 = vrsqrt.pop %v478
      %v482 = vrsqrt.pop %v479
      %v483 = vrsqrt.pop %v480
      %v484 = vmul.f32 %v462, %v481
      %v485 = vmul.f32 %v463, %v482
      %v486 = vmul.f32 %v464, %v483
      %v488 = vlaneseq
      %v489 = vshrl.u32 %v488, 7
      %v490 = vsub.s32 0, %v489
      %v491 = vrot.slane %v448, %v490
      %v493 = vmul.f32 %v484, %v491
      %v494 = vmul.f32 %v485, %v491
      %v495 = vmul.f32 %v486, %v491
      %v497 = vlaneseq
      %v498 = vshrl.u32 %v497, 7
      %v499 = vsub.s32 0, %v498
      %v500 = vrot.slane %v449, %v499
      %v502 = vadd.f32 %v493, %v500
      %v503 = vadd.f32 %v494, %v500
      %v504 = vadd.f32 %v495, %v500
      %v505 = vld [vmem:[%s3] sm:$0xff]
      %v506 = vld [vmem:[%s3 + $0x8] sm:$0xf]
      %v507 = vld [vmem:[%s3 + $0xc] sm:$0xff]
      %v508 = vld [vmem:[%s3 + $0x14] sm:$0xf]
      %v509 = vld [vmem:[%s3 + $0x18] sm:$0xff]
      %v510 = vld [vmem:[%s3 + $0x20] sm:$0xf]
      %v511 = vld [vmem:[%s3 + $0x24] sm:$0xff]
      %v512 = vld [vmem:[%s3 + $0x2c] sm:$0xf]
      %v513 = vld [vmem:[%s3 + $0x30] sm:$0xff]
      %v514 = vld [vmem:[%s3 + $0x38] sm:$0xf]
      %v515 = vld [vmem:[%s3 + $0x3c] sm:$0xff]
      %v516 = vld [vmem:[%s3 + $0x44] sm:$0xf]
      %v517 = vld [vmem:[%s3 + $0x48] sm:$0xff]
      %v518 = vld [vmem:[%s3 + $0x50] sm:$0xf]
      %v519 = vld [vmem:[%s3 + $0x54] sm:$0xff]
      %v520 = vld [vmem:[%s3 + $0x5c] sm:$0xf]
      %v521 = vld [vmem:[%s3 + $0x60] sm:$0xff]
      %v522 = vld [vmem:[%s3 + $0x68] sm:$0xf]
      %v523 = vld [vmem:[%s3 + $0x6c] sm:$0xff]
      %v524 = vld [vmem:[%s3 + $0x74] sm:$0xf]
      %v525 = vld [vmem:[%s3 + $0x78] sm:$0xff]
      %v526 = vld [vmem:[%s3 + $0x80] sm:$0xf]
      %v527 = vld [vmem:[%s3 + $0x84] sm:$0xff]
      %v528 = vld [vmem:[%s3 + $0x8c] sm:$0xf]
      %v529 = vld [vmem:[%s3 + $0x90] sm:$0xff]
      %v530 = vld [vmem:[%s3 + $0x98] sm:$0xf]
      %v531 = vld [vmem:[%s3 + $0x9c] sm:$0xff]
      %v532 = vld [vmem:[%s3 + $0xa4] sm:$0xf]
      %v533 = vld [vmem:[%s3 + $0xa8] sm:$0xff]
      %v534 = vld [vmem:[%s3 + $0xb0] sm:$0xf]
      %v535 = vld [vmem:[%s3 + $0xb4] sm:$0xff]
      %v536 = vld [vmem:[%s3 + $0xbc] sm:$0xf]
      %v537 = vpack.c.bf16 %v503, %v502
      %v538 = vpack.c.bf16 %v504, %v504
      %v539 = vld [vmem:[%s4] sm:$0x7]
      %v541 = vlaneseq
      %v542 = vshrl.u32 %v541, 7
      %v543 = vsub.s32 0, %v542
      %v544 = vrot.slane %v539, %v543
      %v545 = vlaneseq
      %v546 = vshrl.u32 %v545, 7
      %v547 = vsub.s32 1, %v546
      %v548 = vrot.slane %v539, %v547
      %v549 = vlaneseq
      %v550 = vshrl.u32 %v549, 7
      %v551 = vsub.s32 2, %v550
      %v552 = vrot.slane %v539, %v551
      %v588 = vunpack.c.l.b16 %v505
      %v589 = vunpack.c.h.b16 %v505
      %v590 = vunpack.c.l.b16 %v506
      %v591 = vunpack.c.l.b16 %v507
      %v592 = vunpack.c.h.b16 %v507
      %v593 = vunpack.c.l.b16 %v508
      %v594 = vunpack.c.l.b16 %v509
      %v595 = vunpack.c.h.b16 %v509
      %v596 = vunpack.c.l.b16 %v510
      %v597 = vunpack.c.l.b16 %v511
      %v598 = vunpack.c.h.b16 %v511
      %v599 = vunpack.c.l.b16 %v512
      %v600 = vunpack.c.l.b16 %v513
      %v601 = vunpack.c.h.b16 %v513
      %v602 = vunpack.c.l.b16 %v514
      %v603 = vunpack.c.l.b16 %v515
      %v604 = vunpack.c.h.b16 %v515
      %v605 = vunpack.c.l.b16 %v516
      %v606 = vunpack.c.l.b16 %v517
      %v607 = vunpack.c.h.b16 %v517
      %v608 = vunpack.c.l.b16 %v518
      %v609 = vunpack.c.l.b16 %v519
      %v610 = vunpack.c.h.b16 %v519
      %v611 = vunpack.c.l.b16 %v520
      %v612 = vunpack.c.l.b16 %v521
      %v613 = vunpack.c.h.b16 %v521
      %v614 = vunpack.c.l.b16 %v522
      %v615 = vunpack.c.l.b16 %v523
      %v616 = vunpack.c.h.b16 %v523
      %v617 = vunpack.c.l.b16 %v524
      %v618 = vunpack.c.l.b16 %v525
      %v619 = vunpack.c.h.b16 %v525
      %v620 = vunpack.c.l.b16 %v526
      %v621 = vunpack.c.l.b16 %v527
      %v622 = vunpack.c.h.b16 %v527
      %v623 = vunpack.c.l.b16 %v528
      %v624 = vunpack.c.l.b16 %v529
      %v625 = vunpack.c.h.b16 %v529
      %v626 = vunpack.c.l.b16 %v530
      %v627 = vunpack.c.l.b16 %v531
      %v628 = vunpack.c.h.b16 %v531
      %v629 = vunpack.c.l.b16 %v532
      %v630 = vunpack.c.l.b16 %v533
      %v631 = vunpack.c.h.b16 %v533
      %v632 = vunpack.c.l.b16 %v534
      %v633 = vunpack.c.l.b16 %v535
      %v634 = vunpack.c.h.b16 %v535
      %v635 = vunpack.c.l.b16 %v536
      %v636 = vpack.c.b16 %v591, %v588
      %v637 = vpack.c.b16 %v592, %v589
      %v638 = vpack.c.b16 %v593, %v590
      %v639 = vpack.c.b16 %v597, %v594
      %v640 = vpack.c.b16 %v598, %v595
      %v641 = vpack.c.b16 %v599, %v596
      %v642 = vpack.c.b16 %v603, %v600
      %v643 = vpack.c.b16 %v604, %v601
      %v644 = vpack.c.b16 %v605, %v602
      %v645 = vpack.c.b16 %v609, %v606
      %v646 = vpack.c.b16 %v610, %v607
      %v647 = vpack.c.b16 %v611, %v608
      %v648 = vpack.c.b16 %v615, %v612
      %v649 = vpack.c.b16 %v616, %v613
      %v650 = vpack.c.b16 %v617, %v614
      %v651 = vpack.c.b16 %v621, %v618
      %v652 = vpack.c.b16 %v622, %v619
      %v653 = vpack.c.b16 %v623, %v620
      %v654 = vpack.c.b16 %v627, %v624
      %v655 = vpack.c.b16 %v628, %v625
      %v656 = vpack.c.b16 %v629, %v626
      %v657 = vpack.c.b16 %v633, %v630
      %v658 = vpack.c.b16 %v634, %v631
      %v659 = vpack.c.b16 %v635, %v632
      %684 = vmatprep.subr.bf16.mxu0 %v637
      %685 = vmatpush1.bf16.msra.mxu0 %v636
      %686 = vmatprep.subr.bf16.mxu0 %v640
      %687 = vmatpush1.bf16.msra.mxu0 %v639
      %688 = vmatprep.subr.bf16.mxu0 %v643
      %689 = vmatpush1.bf16.msra.mxu0 %v642
      %690 = vmatprep.subr.bf16.mxu0 %v646
      %691 = vmatpush1.bf16.msra.mxu0 %v645
      %692 = vmatprep.subr.bf16.mxu0 %v649
      %693 = vmatpush1.bf16.msra.mxu0 %v648
      %694 = vmatprep.subr.bf16.mxu0 %v652
      %695 = vmatpush1.bf16.msra.mxu0 %v651
      %696 = vmatprep.subr.bf16.mxu0 %v655
      %697 = vmatpush1.bf16.msra.mxu0 %v654
      %698 = vmatprep.subr.bf16.mxu0 %v658
      %699 = vmatpush1.bf16.msra.mxu0 %v657
      %700 = vmatprep.subr.bf16.mxu0 0
      %701 = vmatpush1.bf16.msra.mxu0 0
      %702 = vmatprep.subr.bf16.mxu0 0
      %703 = vmatpush1.bf16.msra.mxu0 0
      %704 = vmatprep.subr.bf16.mxu0 0
      %705 = vmatpush1.bf16.msra.mxu0 0
      %706 = vmatprep.subr.bf16.mxu0 0
      %707 = vmatpush1.bf16.msra.mxu0 0
      %708 = vmatprep.subr.bf16.mxu0 0
      %709 = vmatpush1.bf16.msra.mxu0 0
      %710 = vmatprep.subr.bf16.mxu0 0
      %711 = vmatpush1.bf16.msra.mxu0 0
      %712 = vmatprep.subr.bf16.mxu0 0
      %713 = vmatpush1.bf16.msra.mxu0 0
      %714 = vmatprep.subr.bf16.mxu0 0
      %715 = vmatpush1.bf16.msra.mxu0 0
      %716 = vmatprep.mubr.bf16.mxu0 0
      %717 = vmatmul.mubr.bf16.gmra.mrb[0].mxu0 %v537
      %v718 = vpop.f32.mrb[0].mxu0
      %v719 = vadd.f32 %v544, %v718
      %v720 = vpop.f32.mrb[0].mxu0
      %v721 = vadd.f32 %v548, %v720
      %v722 = vpop.f32.mrb[0].mxu0
      %v723 = vadd.f32 %v544, %v722
      %v724 = vpop.f32.mrb[0].mxu0
      %v725 = vadd.f32 %v548, %v724
      %726 = vmatprep.mubr.bf16.mxu0 0
      %727 = vmatmul.mubr.bf16.gmra.mrb[0].mxu0 %v538
      %v728 = vpop.f32.mrb[0].mxu0
      %v729 = vadd.f32 %v544, %v728
      %v730 = vpop.f32.mrb[0].mxu0
      %v731 = vadd.f32 %v548, %v730
      %v732 = vpop.f32.mrb[0].mxu0
      %v733 = vpop.f32.mrb[0].mxu0
      %734 = vdwg.mxu0
      %735 = vmatprep.subr.bf16.mxu0 0
      %736 = vmatpush1.bf16.msra.mxu0 %v638
      %737 = vmatprep.subr.bf16.mxu0 0
      %738 = vmatpush1.bf16.msra.mxu0 %v641
      %739 = vmatprep.subr.bf16.mxu0 0
      %740 = vmatpush1.bf16.msra.mxu0 %v644
      %741 = vmatprep.subr.bf16.mxu0 0
      %742 = vmatpush1.bf16.msra.mxu0 %v647
      %743 = vmatprep.subr.bf16.mxu0 0
      %744 = vmatpush1.bf16.msra.mxu0 %v650
      %745 = vmatprep.subr.bf16.mxu0 0
      %746 = vmatpush1.bf16.msra.mxu0 %v653
      %747 = vmatprep.subr.bf16.mxu0 0
      %748 = vmatpush1.bf16.msra.mxu0 %v656
      %749 = vmatprep.subr.bf16.mxu0 0
      %750 = vmatpush1.bf16.msra.mxu0 %v659
      %751 = vmatprep.subr.bf16.mxu0 0
      %752 = vmatpush1.bf16.msra.mxu0 0
      %753 = vmatprep.subr.bf16.mxu0 0
      %754 = vmatpush1.bf16.msra.mxu0 0
      %755 = vmatprep.subr.bf16.mxu0 0
      %756 = vmatpush1.bf16.msra.mxu0 0
      %757 = vmatprep.subr.bf16.mxu0 0
      %758 = vmatpush1.bf16.msra.mxu0 0
      %759 = vmatprep.subr.bf16.mxu0 0
      %760 = vmatpush1.bf16.msra.mxu0 0
      %761 = vmatprep.subr.bf16.mxu0 0
      %762 = vmatpush1.bf16.msra.mxu0 0
      %763 = vmatprep.subr.bf16.mxu0 0
      %764 = vmatpush1.bf16.msra.mxu0 0
      %765 = vmatprep.subr.bf16.mxu0 0
      %766 = vmatpush1.bf16.msra.mxu0 0
      %767 = vmatprep.mubr.bf16.mxu0 0
      %768 = vmatmul.mubr.bf16.gmra.mrb[0].mxu0 %v537
      %v769 = vpop.f32.mrb[0].mxu0
      %v770 = vadd.f32 %v552, %v769
      %v771 = vpop.f32.mrb[0].mxu0
      %v772 = vpop.f32.mrb[0].mxu0
      %v773 = vadd.f32 %v552, %v772
      %v774 = vpop.f32.mrb[0].mxu0
      %775 = vmatprep.mubr.bf16.mxu0 0
      %776 = vmatmul.mubr.bf16.gmra.mrb[0].mxu0 %v538
      %v777 = vpop.f32.mrb[0].mxu0
      %v778 = vadd.f32 %v552, %v777
      %v779 = vpop.f32.mrb[0].mxu0
      %v780 = vpop.f32.mrb[0].mxu0
      %v781 = vpop.f32.mrb[0].mxu0
      %782 = vdwg.mxu0
      %v783 = vld [vmem:[%s5] sm:$0xf]
      %v784 = vld [vmem:[%s5 + $0x4] sm:$0xf]
      %v785 = vld [vmem:[%s5 + $0x8] sm:$0xf]
      %v786 = vld [vmem:[%s5 + $0xc] sm:$0xf]
      %v787 = vld [vmem:[%s5 + $0x10] sm:$0xf]
      %v788 = vld [vmem:[%s5 + $0x14] sm:$0xf]
      %v789 = vld [vmem:[%s5 + $0x18] sm:$0xf]
      %v790 = vld [vmem:[%s5 + $0x1c] sm:$0xf]
      %v791 = vld [vmem:[%s5 + $0x20] sm:$0xf]
      %v792 = vld [vmem:[%s5 + $0x24] sm:$0xf]
      %v793 = vld [vmem:[%s5 + $0x28] sm:$0xf]
      %v794 = vld [vmem:[%s5 + $0x2c] sm:$0xf]
      %v795 = vld [vmem:[%s5 + $0x30] sm:$0xf]
      %v796 = vld [vmem:[%s5 + $0x34] sm:$0xf]
      %v797 = vld [vmem:[%s5 + $0x38] sm:$0xf]
      %v798 = vld [vmem:[%s5 + $0x3c] sm:$0xf]
      %v799 = vld [vmem:[%s6] sm:$0x1]
      %v801 = vlaneseq
      %v802 = vshrl.u32 %v801, 7
      %v803 = vsub.s32 0, %v802
      %v804 = vrot.slane %v799, %v803
      %v806 = vadd.f32 %v445, %v804
      %v807 = vadd.f32 %v446, %v804
      %v808 = vadd.f32 %v447, %v804
      %v809 = vpack.c.bf16 %v723, %v719
      %v810 = vpack.c.bf16 %v729, %v729
      %v811 = vpack.c.bf16 %v725, %v721
      %v812 = vpack.c.bf16 %v731, %v731
      %vm813 = vcmask 261120
      %v815 = vsel %vm813, %v809, 0
      %v818 = vsel %vm813, %v810, 0
      %v821 = vsel %vm813, %v811, 0
      %v824 = vsel %vm813, %v812, 0
      %826 = vmatprep.subr.bf16.mxu0 0
      %827 = vmatpush1.bf16.xpose.msra.mxu0 %v821
      %828 = vmatprep.subr.bf16.mxu0 0
      %829 = vmatpush1.bf16.xpose.msra.mxu0 %v824
      %830 = vmatprep.subr.bf16.mxu0 0
      %831 = vmatpush1.bf16.xpose.msra.mxu0 0
      %832 = vmatprep.subr.bf16.mxu0 0
      %833 = vmatpush1.bf16.xpose.msra.mxu0 0
      %834 = vmatprep.subr.bf16.mxu0 0
      %835 = vmatpush1.bf16.xpose.msra.mxu0 0
      %836 = vmatprep.subr.bf16.mxu0 0
      %837 = vmatpush1.bf16.xpose.msra.mxu0 0
      %838 = vmatprep.subr.bf16.mxu0 0
      %839 = vmatpush1.bf16.xpose.msra.mxu0 0
      %840 = vmatprep.subr.bf16.mxu0 0
      %841 = vmatpush1.bf16.xpose.msra.mxu0 0
      %842 = vmatprep.subr.bf16.mxu0 0
      %843 = vmatpush1.bf16.xpose.msra.mxu0 0
      %844 = vmatprep.subr.bf16.mxu0 0
      %845 = vmatpush1.bf16.xpose.msra.mxu0 0
      %846 = vmatprep.subr.bf16.mxu0 0
      %847 = vmatpush1.bf16.xpose.msra.mxu0 0
      %848 = vmatprep.subr.bf16.mxu0 0
      %849 = vmatpush1.bf16.xpose.msra.mxu0 0
      %850 = vmatprep.subr.bf16.mxu0 0
      %851 = vmatpush1.bf16.xpose.msra.mxu0 0
      %852 = vmatprep.subr.bf16.mxu0 0
      %853 = vmatpush1.bf16.xpose.msra.mxu0 0
      %854 = vmatprep.subr.bf16.mxu0 0
      %855 = vmatpush1.bf16.xpose.msra.mxu0 0
      %856 = vmatprep.subr.bf16.mxu0 0
      %857 = vmatpush1.bf16.xpose.msra.mxu0 0
      %858 = vmatprep.mubr.bf16.mxu0 0
      %859 = vmatmul.mubr.bf16.gmra.mrb[0].mxu0 %v815
      %v860 = vpop.f32.mrb[0].mxu0
      %v861 = vadd.f32 0.0, %v860
      %v862 = vpop.f32.mrb[0].mxu0
      %v863 = vpop.f32.mrb[0].mxu0
      %v864 = vadd.f32 0.0, %v863
      %v865 = vpop.f32.mrb[0].mxu0
      %866 = vmatprep.mubr.bf16.mxu0 0
      %867 = vmatmul.mubr.bf16.gmra.mrb[0].mxu0 %v818
      %v868 = vpop.f32.mrb[0].mxu0
      %v869 = vadd.f32 0.0, %v868
      %v870 = vpop.f32.mrb[0].mxu0
      %v871 = vpop.f32.mrb[0].mxu0
      %v872 = vpop.f32.mrb[0].mxu0
      %873 = vdwg.mxu0
      %v874 = vmul.f32 %v861, 0.17677669
      %v875 = vmul.f32 %v864, 0.17677669
      %v876 = vmul.f32 %v869, 0.17677669
      %vm877 = vcmask 138240
      %v878 = vsel %vm877, %v874, -inf
      %879 = vmax.xlane.f32.xlu0 %v878
      %v880 = vpop.xlane.xlu0 %879
      %v881 = vsel %vm877, %v875, -inf
      %882 = vmax.xlane.f32.xlu0 %v881
      %v883 = vpop.xlane.xlu0 %882
      %vm884 = vcmask 131072
      %v885 = vsel %vm884, %v876, -inf
      %886 = vmax.xlane.f32.xlu0 %v885
      %v887 = vpop.xlane.xlu0 %886
      %v888 = vsub.f32 %v874, %v880
      %v889 = vsub.f32 %v875, %v883
      %v890 = vsub.f32 %v876, %v887
      %v891 = vmul.f32 %v888, 1.442695
      %v892 = vpow.pop %v891
      %v893 = vmul.f32 %v889, 1.442695
      %v894 = vpow.pop %v893
      %v895 = vmul.f32 %v890, 1.442695
      %v896 = vpow.pop %v895
      %v897 = vsel %vm877, %v892, 0.0
      %898 = vadd.xlane.f32.xlu0 %v897
      %v899 = vpop.xlane.xlu0 %898
      %v900 = vsel %vm877, %v894, 0.0
      %901 = vadd.xlane.f32.xlu0 %v900
      %v902 = vpop.xlane.xlu0 %901
      %v903 = vsel %vm884, %v896, 0.0
      %904 = vadd.xlane.f32.xlu0 %v903
      %v905 = vpop.xlane.xlu0 %904
      %v906 = vrcp.pop %v899
      %v907 = vmul.f32 %v892, %v906
      %v908 = vrcp.pop %v902
      %v909 = vmul.f32 %v894, %v908
      %v910 = vrcp.pop %v905
      %v911 = vmul.f32 %v896, %v910
      %v912 = vpack.c.bf16 %v909, %v907
      %v913 = vpack.c.bf16 %v911, %v911
      %v914 = vpack.c.bf16 %v773, %v770
      %v915 = vpack.c.bf16 %v778, %v778
      %v917 = vsel %vm877, %v912, 0
      %v920 = vsel %vm877, %v913, 0
      %v922 = vsel 0, 4294967295, 65535
      %v923 = vsel %vm454, %v922, 0
      %v925 = vand.u32 %v915, %v923
      %927 = vmatprep.subr.bf16.mxu0 0
      %928 = vmatpush1.bf16.msra.mxu0 %v914
      %929 = vmatprep.subr.bf16.mxu0 0
      %930 = vmatpush1.bf16.msra.mxu0 %v925
      %931 = vmatprep.subr.bf16.mxu0 0
      %932 = vmatpush1.bf16.msra.mxu0 0
      %933 = vmatprep.subr.bf16.mxu0 0
      %934 = vmatpush1.bf16.msra.mxu0 0
      %935 = vmatprep.subr.bf16.mxu0 0
      %936 = vmatpush1.bf16.msra.mxu0 0
      %937 = vmatprep.subr.bf16.mxu0 0
      %938 = vmatpush1.bf16.msra.mxu0 0
      %939 = vmatprep.subr.bf16.mxu0 0
      %940 = vmatpush1.bf16.msra.mxu0 0
      %941 = vmatprep.subr.bf16.mxu0 0
      %942 = vmatpush1.bf16.msra.mxu0 0
      %943 = vmatprep.subr.bf16.mxu0 0
      %944 = vmatpush1.bf16.msra.mxu0 0
      %945 = vmatprep.subr.bf16.mxu0 0
      %946 = vmatpush1.bf16.msra.mxu0 0
      %947 = vmatprep.subr.bf16.mxu0 0
      %948 = vmatpush1.bf16.msra.mxu0 0
      %949 = vmatprep.subr.bf16.mxu0 0
      %950 = vmatpush1.bf16.msra.mxu0 0
      %951 = vmatprep.subr.bf16.mxu0 0
      %952 = vmatpush1.bf16.msra.mxu0 0
      %953 = vmatprep.subr.bf16.mxu0 0
      %954 = vmatpush1.bf16.msra.mxu0 0
      %955 = vmatprep.subr.bf16.mxu0 0
      %956 = vmatpush1.bf16.msra.mxu0 0
      %957 = vmatprep.subr.bf16.mxu0 0
      %958 = vmatpush1.bf16.msra.mxu0 0
      %959 = vmatprep.mubr.bf16.mxu0 0
      %960 = vmatmul.mubr.bf16.gmra.mrb[0].mxu0 %v917
      %v961 = vpop.f32.mrb[0].mxu0
      %v962 = vadd.f32 0.0, %v961
      %v963 = vpop.f32.mrb[0].mxu0
      %v964 = vpop.f32.mrb[0].mxu0
      %v965 = vadd.f32 0.0, %v964
      %v966 = vpop.f32.mrb[0].mxu0
      %967 = vmatprep.mubr.bf16.mxu0 0
      %968 = vmatmul.mubr.bf16.gmra.mrb[0].mxu0 %v920
      %v969 = vpop.f32.mrb[0].mxu0
      %v970 = vadd.f32 0.0, %v969
      %v971 = vpop.f32.mrb[0].mxu0
      %v972 = vpop.f32.mrb[0].mxu0
      %v973 = vpop.f32.mrb[0].mxu0
      %974 = vdwg.mxu0
      %v975 = vpack.c.bf16 %v965, %v962
      %v976 = vpack.c.bf16 %v970, %v970
      %v981 = vunpack.c.l.b16 %v783
      %v982 = vunpack.c.l.b16 %v784
      %v983 = vunpack.c.l.b16 %v785
      %v984 = vunpack.c.l.b16 %v786
      %v985 = vpack.c.b16 %v982, %v981
      %v986 = vpack.c.b16 %v984, %v983
      %v990 = vsel %vm813, %v975, 0
      %v993 = vsel %vm813, %v976, 0
      %995 = vmatprep.subr.bf16.mxu0 0
      %996 = vmatpush1.bf16.msra.mxu0 %v985
      %997 = vmatprep.subr.bf16.mxu0 0
      %998 = vmatpush1.bf16.msra.mxu0 %v986
      %999 = vmatprep.subr.bf16.mxu0 0
      %1000 = vmatpush1.bf16.msra.mxu0 0
      %1001 = vmatprep.subr.bf16.mxu0 0
      %1002 = vmatpush1.bf16.msra.mxu0 0
      %1003 = vmatprep.subr.bf16.mxu0 0
      %1004 = vmatpush1.bf16.msra.mxu0 0
      %1005 = vmatprep.subr.bf16.mxu0 0
      %1006 = vmatpush1.bf16.msra.mxu0 0
      %1007 = vmatprep.subr.bf16.mxu0 0
      %1008 = vmatpush1.bf16.msra.mxu0 0
      %1009 = vmatprep.subr.bf16.mxu0 0
      %1010 = vmatpush1.bf16.msra.mxu0 0
      %1011 = vmatprep.subr.bf16.mxu0 0
      %1012 = vmatpush1.bf16.msra.mxu0 0
      %1013 = vmatprep.subr.bf16.mxu0 0
      %1014 = vmatpush1.bf16.msra.mxu0 0
      %1015 = vmatprep.subr.bf16.mxu0 0
      %1016 = vmatpush1.bf16.msra.mxu0 0
      %1017 = vmatprep.subr.bf16.mxu0 0
      %1018 = vmatpush1.bf16.msra.mxu0 0
      %1019 = vmatprep.subr.bf16.mxu0 0
      %1020 = vmatpush1.bf16.msra.mxu0 0
      %1021 = vmatprep.subr.bf16.mxu0 0
      %1022 = vmatpush1.bf16.msra.mxu0 0
      %1023 = vmatprep.subr.bf16.mxu0 0
      %1024 = vmatpush1.bf16.msra.mxu0 0
      %1025 = vmatprep.subr.bf16.mxu0 0
      %1026 = vmatpush1.bf16.msra.mxu0 0
      %1027 = vmatprep.mubr.bf16.mxu0 0
      %1028 = vmatmul.mubr.bf16.gmra.mrb[0].mxu0 %v990
      %v1029 = vpop.f32.mrb[0].mxu0
      %v1030 = vadd.f32 0.0, %v1029
      %v1031 = vpop.f32.mrb[0].mxu0
      %v1032 = vpop.f32.mrb[0].mxu0
      %v1033 = vadd.f32 0.0, %v1032
      %v1034 = vpop.f32.mrb[0].mxu0
      %1035 = vmatprep.mubr.bf16.mxu0 0
      %1036 = vmatmul.mubr.bf16.gmra.mrb[0].mxu0 %v993
      %v1037 = vpop.f32.mrb[0].mxu0
      %v1038 = vadd.f32 0.0, %v1037
      %v1039 = vpop.f32.mrb[0].mxu0
      %v1040 = vpop.f32.mrb[0].mxu0
      %v1041 = vpop.f32.mrb[0].mxu0
      %1042 = vdwg.mxu0
      %v1043 = vadd.f32 %v806, %v1030
      %v1044 = vadd.f32 %v807, %v1033
      %v1045 = vadd.f32 %v808, %v1038
      %1048 = vrot.lane.b32.xlu0 %v809, 96
      %v1049 = vpop.permute.xlu0 %1048
      %1050 = vrot.lane.b32.xlu0 %v810, 96
      %v1051 = vpop.permute.xlu0 %1050
      %1054 = vrot.lane.b32.xlu0 %v811, 96
      %v1055 = vpop.permute.xlu0 %1054
      %1056 = vrot.lane.b32.xlu0 %v812, 96
      %v1057 = vpop.permute.xlu0 %1056
      %v1059 = vsel %vm813, %v1049, 0
      %v1062 = vsel %vm813, %v1051, 0
      %v1065 = vsel %vm813, %v1055, 0
      %v1068 = vsel %vm813, %v1057, 0
      %1070 = vmatprep.subr.bf16.mxu0 0
      %1071 = vmatpush1.bf16.xpose.msra.mxu0 %v1065
      %1072 = vmatprep.subr.bf16.mxu0 0
      %1073 = vmatpush1.bf16.xpose.msra.mxu0 %v1068
      %1074 = vmatprep.subr.bf16.mxu0 0
      %1075 = vmatpush1.bf16.xpose.msra.mxu0 0
      %1076 = vmatprep.subr.bf16.mxu0 0
      %1077 = vmatpush1.bf16.xpose.msra.mxu0 0
      %1078 = vmatprep.subr.bf16.mxu0 0
      %1079 = vmatpush1.bf16.xpose.msra.mxu0 0
      %1080 = vmatprep.subr.bf16.mxu0 0
      %1081 = vmatpush1.bf16.xpose.msra.mxu0 0
      %1082 = vmatprep.subr.bf16.mxu0 0
      %1083 = vmatpush1.bf16.xpose.msra.mxu0 0
      %1084 = vmatprep.subr.bf16.mxu0 0
      %1085 = vmatpush1.bf16.xpose.msra.mxu0 0
      %1086 = vmatprep.subr.bf16.mxu0 0
      %1087 = vmatpush1.bf16.xpose.msra.mxu0 0
      %1088 = vmatprep.subr.bf16.mxu0 0
      %1089 = vmatpush1.bf16.xpose.msra.mxu0 0
      %1090 = vmatprep.subr.bf16.mxu0 0
      %1091 = vmatpush1.bf16.xpose.msra.mxu0 0
      %1092 = vmatprep.subr.bf16.mxu0 0
      %1093 = vmatpush1.bf16.xpose.msra.mxu0 0
      %1094 = vmatprep.subr.bf16.mxu0 0
      %1095 = vmatpush1.bf16.xpose.msra.mxu0 0
      %1096 = vmatprep.subr.bf16.mxu0 0
      %1097 = vmatpush1.bf16.xpose.msra.mxu0 0
      %1098 = vmatprep.subr.bf16.mxu0 0
      %1099 = vmatpush1.bf16.xpose.msra.mxu0 0
      %1100 = vmatprep.subr.bf16.mxu0 0
      %1101 = vmatpush1.bf16.xpose.msra.mxu0 0
      %1102 = vmatprep.mubr.bf16.mxu0 0
      %1103 = vmatmul.mubr.bf16.gmra.mrb[0].mxu0 %v1059
      %v1104 = vpop.f32.mrb[0].mxu0
      %v1105 = vadd.f32 0.0, %v1104
      %v1106 = vpop.f32.mrb[0].mxu0
      %v1107 = vpop.f32.mrb[0].mxu0
      %v1108 = vadd.f32 0.0, %v1107
      %v1109 = vpop.f32.mrb[0].mxu0
      %1110 = vmatprep.mubr.bf16.mxu0 0
      %1111 = vmatmul.mubr.bf16.gmra.mrb[0].mxu0 %v1062
      %v1112 = vpop.f32.mrb[0].mxu0
      %v1113 = vadd.f32 0.0, %v1112
      %v1114 = vpop.f32.mrb[0].mxu0
      %v1115 = vpop.f32.mrb[0].mxu0
      %v1116 = vpop.f32.mrb[0].mxu0
      %1117 = vdwg.mxu0
      %v1118 = vmul.f32 %v1105, 0.17677669
      %v1119 = vmul.f32 %v1108, 0.17677669
      %v1120 = vmul.f32 %v1113, 0.17677669
      %v1121 = vsel %vm877, %v1118, -inf
      %1122 = vmax.xlane.f32.xlu0 %v1121
      %v1123 = vpop.xlane.xlu0 %1122
      %v1124 = vsel %vm877, %v1119, -inf
      %1125 = vmax.xlane.f32.xlu0 %v1124
      %v1126 = vpop.xlane.xlu0 %1125
      %v1127 = vsel %vm884, %v1120, -inf
      %1128 = vmax.xlane.f32.xlu0 %v1127
      %v1129 = vpop.xlane.xlu0 %1128
      %v1130 = vsub.f32 %v1118, %v1123
      %v1131 = vsub.f32 %v1119, %v1126
      %v1132 = vsub.f32 %v1120, %v1129
      %v1133 = vmul.f32 %v1130, 1.442695
      %v1134 = vpow.pop %v1133
      %v1135 = vmul.f32 %v1131, 1.442695
      %v1136 = vpow.pop %v1135
      %v1137 = vmul.f32 %v1132, 1.442695
      %v1138 = vpow.pop %v1137
      %v1139 = vsel %vm877, %v1134, 0.0
      %1140 = vadd.xlane.f32.xlu0 %v1139
      %v1141 = vpop.xlane.xlu0 %1140
      %v1142 = vsel %vm877, %v1136, 0.0
      %1143 = vadd.xlane.f32.xlu0 %v1142
      %v1144 = vpop.xlane.xlu0 %1143
      %v1145 = vsel %vm884, %v1138, 0.0
      %1146 = vadd.xlane.f32.xlu0 %v1145
      %v1147 = vpop.xlane.xlu0 %1146
      %v1148 = vrcp.pop %v1141
      %v1149 = vmul.f32 %v1134, %v1148
      %v1150 = vrcp.pop %v1144
      %v1151 = vmul.f32 %v1136, %v1150
      %v1152 = vrcp.pop %v1147
      %v1153 = vmul.f32 %v1138, %v1152
      %v1154 = vpack.c.bf16 %v1151, %v1149
      %v1155 = vpack.c.bf16 %v1153, %v1153
      %1158 = vrot.lane.b32.xlu0 %v914, 96
      %v1159 = vpop.permute.xlu0 %1158
      %1160 = vrot.lane.b32.xlu0 %v915, 96
      %v1161 = vpop.permute.xlu0 %1160
      %v1164 = vsel %vm877, %v1154, 0
      %v1167 = vsel %vm877, %v1155, 0
      %v1170 = vand.u32 %v1161, %v923
      %1172 = vmatprep.subr.bf16.mxu0 0
      %1173 = vmatpush1.bf16.msra.mxu0 %v1159
      %1174 = vmatprep.subr.bf16.mxu0 0
      %1175 = vmatpush1.bf16.msra.mxu0 %v1170
      %1176 = vmatprep.subr.bf16.mxu0 0
      %1177 = vmatpush1.bf16.msra.mxu0 0
      %1178 = vmatprep.subr.bf16.mxu0 0
      %1179 = vmatpush1.bf16.msra.mxu0 0
      %1180 = vmatprep.subr.bf16.mxu0 0
      %1181 = vmatpush1.bf16.msra.mxu0 0
      %1182 = vmatprep.subr.bf16.mxu0 0
      %1183 = vmatpush1.bf16.msra.mxu0 0
      %1184 = vmatprep.subr.bf16.mxu0 0
      %1185 = vmatpush1.bf16.msra.mxu0 0
      %1186 = vmatprep.subr.bf16.mxu0 0
      %1187 = vmatpush1.bf16.msra.mxu0 0
      %1188 = vmatprep.subr.bf16.mxu0 0
      %1189 = vmatpush1.bf16.msra.mxu0 0
      %1190 = vmatprep.subr.bf16.mxu0 0
      %1191 = vmatpush1.bf16.msra.mxu0 0
      %1192 = vmatprep.subr.bf16.mxu0 0
      %1193 = vmatpush1.bf16.msra.mxu0 0
      %1194 = vmatprep.subr.bf16.mxu0 0
      %1195 = vmatpush1.bf16.msra.mxu0 0
      %1196 = vmatprep.subr.bf16.mxu0 0
      %1197 = vmatpush1.bf16.msra.mxu0 0
      %1198 = vmatprep.subr.bf16.mxu0 0
      %1199 = vmatpush1.bf16.msra.mxu0 0
      %1200 = vmatprep.subr.bf16.mxu0 0
      %1201 = vmatpush1.bf16.msra.mxu0 0
      %1202 = vmatprep.subr.bf16.mxu0 0
      %1203 = vmatpush1.bf16.msra.mxu0 0
      %1204 = vmatprep.mubr.bf16.mxu0 0
      %1205 = vmatmul.mubr.bf16.gmra.mrb[0].mxu0 %v1164
      %v1206 = vpop.f32.mrb[0].mxu0
      %v1207 = vadd.f32 0.0, %v1206
      %v1208 = vpop.f32.mrb[0].mxu0
      %v1209 = vpop.f32.mrb[0].mxu0
      %v1210 = vadd.f32 0.0, %v1209
      %v1211 = vpop.f32.mrb[0].mxu0
      %1212 = vmatprep.mubr.bf16.mxu0 0
      %1213 = vmatmul.mubr.bf16.gmra.mrb[0].mxu0 %v1167
      %v1214 = vpop.f32.mrb[0].mxu0
      %v1215 = vadd.f32 0.0, %v1214
      %v1216 = vpop.f32.mrb[0].mxu0
      %v1217 = vpop.f32.mrb[0].mxu0
      %v1218 = vpop.f32.mrb[0].mxu0
      %1219 = vdwg.mxu0
      %v1220 = vpack.c.bf16 %v1210, %v1207
      %v1221 = vpack.c.bf16 %v1215, %v1215
      %v1226 = vunpack.c.l.b16 %v787
      %v1227 = vunpack.c.l.b16 %v788
      %v1228 = vunpack.c.l.b16 %v789
      %v1229 = vunpack.c.l.b16 %v790
      %v1230 = vpack.c.b16 %v1227, %v1226
      %v1231 = vpack.c.b16 %v1229, %v1228
      %v1235 = vsel %vm813, %v1220, 0
      %v1238 = vsel %vm813, %v1221, 0
      %1240 = vmatprep.subr.bf16.mxu0 0
      %1241 = vmatpush1.bf16.msra.mxu0 %v1230
      %1242 = vmatprep.subr.bf16.mxu0 0
      %1243 = vmatpush1.bf16.msra.mxu0 %v1231
      %1244 = vmatprep.subr.bf16.mxu0 0
      %1245 = vmatpush1.bf16.msra.mxu0 0
      %1246 = vmatprep.subr.bf16.mxu0 0
      %1247 = vmatpush1.bf16.msra.mxu0 0
      %1248 = vmatprep.subr.bf16.mxu0 0
      %1249 = vmatpush1.bf16.msra.mxu0 0
      %1250 = vmatprep.subr.bf16.mxu0 0
      %1251 = vmatpush1.bf16.msra.mxu0 0
      %1252 = vmatprep.subr.bf16.mxu0 0
      %1253 = vmatpush1.bf16.msra.mxu0 0
      %1254 = vmatprep.subr.bf16.mxu0 0
      %1255 = vmatpush1.bf16.msra.mxu0 0
      %1256 = vmatprep.subr.bf16.mxu0 0
      %1257 = vmatpush1.bf16.msra.mxu0 0
      %1258 = vmatprep.subr.bf16.mxu0 0
      %1259 = vmatpush1.bf16.msra.mxu0 0
      %1260 = vmatprep.subr.bf16.mxu0 0
      %1261 = vmatpush1.bf16.msra.mxu0 0
      %1262 = vmatprep.subr.bf16.mxu0 0
      %1263 = vmatpush1.bf16.msra.mxu0 0
      %1264 = vmatprep.subr.bf16.mxu0 0
      %1265 = vmatpush1.bf16.msra.mxu0 0
      %1266 = vmatprep.subr.bf16.mxu0 0
      %1267 = vmatpush1.bf16.msra.mxu0 0
      %1268 = vmatprep.subr.bf16.mxu0 0
      %1269 = vmatpush1.bf16.msra.mxu0 0
      %1270 = vmatprep.subr.bf16.mxu0 0
      %1271 = vmatpush1.bf16.msra.mxu0 0
      %1272 = vmatprep.mubr.bf16.mxu0 0
      %1273 = vmatmul.mubr.bf16.gmra.mrb[0].mxu0 %v1235
      %v1274 = vpop.f32.mrb[0].mxu0
      %v1275 = vadd.f32 0.0, %v1274
      %v1276 = vpop.f32.mrb[0].mxu0
      %v1277 = vpop.f32.mrb[0].mxu0
      %v1278 = vadd.f32 0.0, %v1277
      %v1279 = vpop.f32.mrb[0].mxu0
      %1280 = vmatprep.mubr.bf16.mxu0 0
      %1281 = vmatmul.mubr.bf16.gmra.mrb[0].mxu0 %v1238
      %v1282 = vpop.f32.mrb[0].mxu0
      %v1283 = vadd.f32 0.0, %v1282
      %v1284 = vpop.f32.mrb[0].mxu0
      %v1285 = vpop.f32.mrb[0].mxu0
      %v1286 = vpop.f32.mrb[0].mxu0
      %1287 = vdwg.mxu0
      %v1288 = vadd.f32 %v1043, %v1275
      %v1289 = vadd.f32 %v1044, %v1278
      %v1290 = vadd.f32 %v1045, %v1283
      %1291 = vrot.lane.b32.xlu0 %v809, 64
      %v1292 = vpop.permute.xlu0 %1291
      %1293 = vrot.lane.b32.xlu0 %v810, 64
      %v1294 = vpop.permute.xlu0 %1293
      %1295 = vrot.lane.b32.xlu0 %v811, 64
      %v1296 = vpop.permute.xlu0 %1295
      %1297 = vrot.lane.b32.xlu0 %v812, 64
      %v1298 = vpop.permute.xlu0 %1297
      %v1300 = vsel %vm813, %v1292, 0
      %v1303 = vsel %vm813, %v1294, 0
      %v1306 = vsel %vm813, %v1296, 0
      %v1309 = vsel %vm813, %v1298, 0
      %1311 = vmatprep.subr.bf16.mxu0 0
      %1312 = vmatpush1.bf16.xpose.msra.mxu0 %v1306
      %1313 = vmatprep.subr.bf16.mxu0 0
      %1314 = vmatpush1.bf16.xpose.msra.mxu0 %v1309
      %1315 = vmatprep.subr.bf16.mxu0 0
      %1316 = vmatpush1.bf16.xpose.msra.mxu0 0
      %1317 = vmatprep.subr.bf16.mxu0 0
      %1318 = vmatpush1.bf16.xpose.msra.mxu0 0
      %1319 = vmatprep.subr.bf16.mxu0 0
      %1320 = vmatpush1.bf16.xpose.msra.mxu0 0
      %1321 = vmatprep.subr.bf16.mxu0 0
      %1322 = vmatpush1.bf16.xpose.msra.mxu0 0
      %1323 = vmatprep.subr.bf16.mxu0 0
      %1324 = vmatpush1.bf16.xpose.msra.mxu0 0
      %1325 = vmatprep.subr.bf16.mxu0 0
      %1326 = vmatpush1.bf16.xpose.msra.mxu0 0
      %1327 = vmatprep.subr.bf16.mxu0 0
      %1328 = vmatpush1.bf16.xpose.msra.mxu0 0
      %1329 = vmatprep.subr.bf16.mxu0 0
      %1330 = vmatpush1.bf16.xpose.msra.mxu0 0
      %1331 = vmatprep.subr.bf16.mxu0 0
      %1332 = vmatpush1.bf16.xpose.msra.mxu0 0
      %1333 = vmatprep.subr.bf16.mxu0 0
      %1334 = vmatpush1.bf16.xpose.msra.mxu0 0
      %1335 = vmatprep.subr.bf16.mxu0 0
      %1336 = vmatpush1.bf16.xpose.msra.mxu0 0
      %1337 = vmatprep.subr.bf16.mxu0 0
      %1338 = vmatpush1.bf16.xpose.msra.mxu0 0
      %1339 = vmatprep.subr.bf16.mxu0 0
      %1340 = vmatpush1.bf16.xpose.msra.mxu0 0
      %1341 = vmatprep.subr.bf16.mxu0 0
      %1342 = vmatpush1.bf16.xpose.msra.mxu0 0
      %1343 = vmatprep.mubr.bf16.mxu0 0
      %1344 = vmatmul.mubr.bf16.gmra.mrb[0].mxu0 %v1300
      %v1345 = vpop.f32.mrb[0].mxu0
      %v1346 = vadd.f32 0.0, %v1345
      %v1347 = vpop.f32.mrb[0].mxu0
      %v1348 = vpop.f32.mrb[0].mxu0
      %v1349 = vadd.f32 0.0, %v1348
      %v1350 = vpop.f32.mrb[0].mxu0
      %1351 = vmatprep.mubr.bf16.mxu0 0
      %1352 = vmatmul.mubr.bf16.gmra.mrb[0].mxu0 %v1303
      %v1353 = vpop.f32.mrb[0].mxu0
      %v1354 = vadd.f32 0.0, %v1353
      %v1355 = vpop.f32.mrb[0].mxu0
      %v1356 = vpop.f32.mrb[0].mxu0
      %v1357 = vpop.f32.mrb[0].mxu0
      %1358 = vdwg.mxu0
      %v1359 = vmul.f32 %v1346, 0.17677669
      %v1360 = vmul.f32 %v1349, 0.17677669
      %v1361 = vmul.f32 %v1354, 0.17677669
      %v1362 = vsel %vm877, %v1359, -inf
      %1363 = vmax.xlane.f32.xlu0 %v1362
      %v1364 = vpop.xlane.xlu0 %1363
      %v1365 = vsel %vm877, %v1360, -inf
      %1366 = vmax.xlane.f32.xlu0 %v1365
      %v1367 = vpop.xlane.xlu0 %1366
      %v1368 = vsel %vm884, %v1361, -inf
      %1369 = vmax.xlane.f32.xlu0 %v1368
      %v1370 = vpop.xlane.xlu0 %1369
      %v1371 = vsub.f32 %v1359, %v1364
      %v1372 = vsub.f32 %v1360, %v1367
      %v1373 = vsub.f32 %v1361, %v1370
      %v1374 = vmul.f32 %v1371, 1.442695
      %v1375 = vpow.pop %v1374
      %v1376 = vmul.f32 %v1372, 1.442695
      %v1377 = vpow.pop %v1376
      %v1378 = vmul.f32 %v1373, 1.442695
      %v1379 = vpow.pop %v1378
      %v1380 = vsel %vm877, %v1375, 0.0
      %1381 = vadd.xlane.f32.xlu0 %v1380
      %v1382 = vpop.xlane.xlu0 %1381
      %v1383 = vsel %vm877, %v1377, 0.0
      %1384 = vadd.xlane.f32.xlu0 %v1383
      %v1385 = vpop.xlane.xlu0 %1384
      %v1386 = vsel %vm884, %v1379, 0.0
      %1387 = vadd.xlane.f32.xlu0 %v1386
      %v1388 = vpop.xlane.xlu0 %1387
      %v1389 = vrcp.pop %v1382
      %v1390 = vmul.f32 %v1375, %v1389
      %v1391 = vrcp.pop %v1385
      %v1392 = vmul.f32 %v1377, %v1391
      %v1393 = vrcp.pop %v1388
      %v1394 = vmul.f32 %v1379, %v1393
      %v1395 = vpack.c.bf16 %v1392, %v1390
      %v1396 = vpack.c.bf16 %v1394, %v1394
      %1397 = vrot.lane.b32.xlu0 %v914, 64
      %v1398 = vpop.permute.xlu0 %1397
      %1399 = vrot.lane.b32.xlu0 %v915, 64
      %v1400 = vpop.permute.xlu0 %1399
      %v1403 = vsel %vm877, %v1395, 0
      %v1406 = vsel %vm877, %v1396, 0
      %v1409 = vand.u32 %v1400, %v923
      %1411 = vmatprep.subr.bf16.mxu0 0
      %1412 = vmatpush1.bf16.msra.mxu0 %v1398
      %1413 = vmatprep.subr.bf16.mxu0 0
      %1414 = vmatpush1.bf16.msra.mxu0 %v1409
      %1415 = vmatprep.subr.bf16.mxu0 0
      %1416 = vmatpush1.bf16.msra.mxu0 0
      %1417 = vmatprep.subr.bf16.mxu0 0
      %1418 = vmatpush1.bf16.msra.mxu0 0
      %1419 = vmatprep.subr.bf16.mxu0 0
      %1420 = vmatpush1.bf16.msra.mxu0 0
      %1421 = vmatprep.subr.bf16.mxu0 0
      %1422 = vmatpush1.bf16.msra.mxu0 0
      %1423 = vmatprep.subr.bf16.mxu0 0
      %1424 = vmatpush1.bf16.msra.mxu0 0
      %1425 = vmatprep.subr.bf16.mxu0 0
      %1426 = vmatpush1.bf16.msra.mxu0 0
      %1427 = vmatprep.subr.bf16.mxu0 0
      %1428 = vmatpush1.bf16.msra.mxu0 0
      %1429 = vmatprep.subr.bf16.mxu0 0
      %1430 = vmatpush1.bf16.msra.mxu0 0
      %1431 = vmatprep.subr.bf16.mxu0 0
      %1432 = vmatpush1.bf16.msra.mxu0 0
      %1433 = vmatprep.subr.bf16.mxu0 0
      %1434 = vmatpush1.bf16.msra.mxu0 0
      %1435 = vmatprep.subr.bf16.mxu0 0
      %1436 = vmatpush1.bf16.msra.mxu0 0
      %1437 = vmatprep.subr.bf16.mxu0 0
      %1438 = vmatpush1.bf16.msra.mxu0 0
      %1439 = vmatprep.subr.bf16.mxu0 0
      %1440 = vmatpush1.bf16.msra.mxu0 0
      %1441 = vmatprep.subr.bf16.mxu0 0
      %1442 = vmatpush1.bf16.msra.mxu0 0
      %1443 = vmatprep.mubr.bf16.mxu0 0
      %1444 = vmatmul.mubr.bf16.gmra.mrb[0].mxu0 %v1403
      %v1445 = vpop.f32.mrb[0].mxu0
      %v1446 = vadd.f32 0.0, %v1445
      %v1447 = vpop.f32.mrb[0].mxu0
      %v1448 = vpop.f32.mrb[0].mxu0
      %v1449 = vadd.f32 0.0, %v1448
      %v1450 = vpop.f32.mrb[0].mxu0
      %1451 = vmatprep.mubr.bf16.mxu0 0
      %1452 = vmatmul.mubr.bf16.gmra.mrb[0].mxu0 %v1406
      %v1453 = vpop.f32.mrb[0].mxu0
      %v1454 = vadd.f32 0.0, %v1453
      %v1455 = vpop.f32.mrb[0].mxu0
      %v1456 = vpop.f32.mrb[0].mxu0
      %v1457 = vpop.f32.mrb[0].mxu0
      %1458 = vdwg.mxu0
      %v1459 = vpack.c.bf16 %v1449, %v1446
      %v1460 = vpack.c.bf16 %v1454, %v1454
      %v1465 = vunpack.c.l.b16 %v791
      %v1466 = vunpack.c.l.b16 %v792
      %v1467 = vunpack.c.l.b16 %v793
      %v1468 = vunpack.c.l.b16 %v794
      %v1469 = vpack.c.b16 %v1466, %v1465
      %v1470 = vpack.c.b16 %v1468, %v1467
      %v1474 = vsel %vm813, %v1459, 0
      %v1477 = vsel %vm813, %v1460, 0
      %1479 = vmatprep.subr.bf16.mxu0 0
      %1480 = vmatpush1.bf16.msra.mxu0 %v1469
      %1481 = vmatprep.subr.bf16.mxu0 0
      %1482 = vmatpush1.bf16.msra.mxu0 %v1470
      %1483 = vmatprep.subr.bf16.mxu0 0
      %1484 = vmatpush1.bf16.msra.mxu0 0
      %1485 = vmatprep.subr.bf16.mxu0 0
      %1486 = vmatpush1.bf16.msra.mxu0 0
      %1487 = vmatprep.subr.bf16.mxu0 0
      %1488 = vmatpush1.bf16.msra.mxu0 0
      %1489 = vmatprep.subr.bf16.mxu0 0
      %1490 = vmatpush1.bf16.msra.mxu0 0
      %1491 = vmatprep.subr.bf16.mxu0 0
      %1492 = vmatpush1.bf16.msra.mxu0 0
      %1493 = vmatprep.subr.bf16.mxu0 0
      %1494 = vmatpush1.bf16.msra.mxu0 0
      %1495 = vmatprep.subr.bf16.mxu0 0
      %1496 = vmatpush1.bf16.msra.mxu0 0
      %1497 = vmatprep.subr.bf16.mxu0 0
      %1498 = vmatpush1.bf16.msra.mxu0 0
      %1499 = vmatprep.subr.bf16.mxu0 0
      %1500 = vmatpush1.bf16.msra.mxu0 0
      %1501 = vmatprep.subr.bf16.mxu0 0
      %1502 = vmatpush1.bf16.msra.mxu0 0
      %1503 = vmatprep.subr.bf16.mxu0 0
      %1504 = vmatpush1.bf16.msra.mxu0 0
      %1505 = vmatprep.subr.bf16.mxu0 0
      %1506 = vmatpush1.bf16.msra.mxu0 0
      %1507 = vmatprep.subr.bf16.mxu0 0
      %1508 = vmatpush1.bf16.msra.mxu0 0
      %1509 = vmatprep.subr.bf16.mxu0 0
      %1510 = vmatpush1.bf16.msra.mxu0 0
      %1511 = vmatprep.mubr.bf16.mxu0 0
      %1512 = vmatmul.mubr.bf16.gmra.mrb[0].mxu0 %v1474
      %v1513 = vpop.f32.mrb[0].mxu0
      %v1514 = vadd.f32 0.0, %v1513
      %v1515 = vpop.f32.mrb[0].mxu0
      %v1516 = vpop.f32.mrb[0].mxu0
      %v1517 = vadd.f32 0.0, %v1516
      %v1518 = vpop.f32.mrb[0].mxu0
      %1519 = vmatprep.mubr.bf16.mxu0 0
      %1520 = vmatmul.mubr.bf16.gmra.mrb[0].mxu0 %v1477
      %v1521 = vpop.f32.mrb[0].mxu0
      %v1522 = vadd.f32 0.0, %v1521
      %v1523 = vpop.f32.mrb[0].mxu0
      %v1524 = vpop.f32.mrb[0].mxu0
      %v1525 = vpop.f32.mrb[0].mxu0
      %1526 = vdwg.mxu0
      %v1527 = vadd.f32 %v1288, %v1514
      %v1528 = vadd.f32 %v1289, %v1517
      %v1529 = vadd.f32 %v1290, %v1522
      %1530 = vrot.lane.b32.xlu0 %v809, 32
      %v1531 = vpop.permute.xlu0 %1530
      %1532 = vrot.lane.b32.xlu0 %v810, 32
      %v1533 = vpop.permute.xlu0 %1532
      %1534 = vrot.lane.b32.xlu0 %v811, 32
      %v1535 = vpop.permute.xlu0 %1534
      %1536 = vrot.lane.b32.xlu0 %v812, 32
      %v1537 = vpop.permute.xlu0 %1536
      %v1539 = vsel %vm813, %v1531, 0
      %v1542 = vsel %vm813, %v1533, 0
      %v1545 = vsel %vm813, %v1535, 0
      %v1548 = vsel %vm813, %v1537, 0
      %1550 = vmatprep.subr.bf16.mxu0 0
      %1551 = vmatpush1.bf16.xpose.msra.mxu0 %v1545
      %1552 = vmatprep.subr.bf16.mxu0 0
      %1553 = vmatpush1.bf16.xpose.msra.mxu0 %v1548
      %1554 = vmatprep.subr.bf16.mxu0 0
      %1555 = vmatpush1.bf16.xpose.msra.mxu0 0
      %1556 = vmatprep.subr.bf16.mxu0 0
      %1557 = vmatpush1.bf16.xpose.msra.mxu0 0
      %1558 = vmatprep.subr.bf16.mxu0 0
      %1559 = vmatpush1.bf16.xpose.msra.mxu0 0
      %1560 = vmatprep.subr.bf16.mxu0 0
      %1561 = vmatpush1.bf16.xpose.msra.mxu0 0
      %1562 = vmatprep.subr.bf16.mxu0 0
      %1563 = vmatpush1.bf16.xpose.msra.mxu0 0
      %1564 = vmatprep.subr.bf16.mxu0 0
      %1565 = vmatpush1.bf16.xpose.msra.mxu0 0
      %1566 = vmatprep.subr.bf16.mxu0 0
      %1567 = vmatpush1.bf16.xpose.msra.mxu0 0
      %1568 = vmatprep.subr.bf16.mxu0 0
      %1569 = vmatpush1.bf16.xpose.msra.mxu0 0
      %1570 = vmatprep.subr.bf16.mxu0 0
      %1571 = vmatpush1.bf16.xpose.msra.mxu0 0
      %1572 = vmatprep.subr.bf16.mxu0 0
      %1573 = vmatpush1.bf16.xpose.msra.mxu0 0
      %1574 = vmatprep.subr.bf16.mxu0 0
      %1575 = vmatpush1.bf16.xpose.msra.mxu0 0
      %1576 = vmatprep.subr.bf16.mxu0 0
      %1577 = vmatpush1.bf16.xpose.msra.mxu0 0
      %1578 = vmatprep.subr.bf16.mxu0 0
      %1579 = vmatpush1.bf16.xpose.msra.mxu0 0
      %1580 = vmatprep.subr.bf16.mxu0 0
      %1581 = vmatpush1.bf16.xpose.msra.mxu0 0
      %1582 = vmatprep.mubr.bf16.mxu0 0
      %1583 = vmatmul.mubr.bf16.gmra.mrb[0].mxu0 %v1539
      %v1584 = vpop.f32.mrb[0].mxu0
      %v1585 = vadd.f32 0.0, %v1584
      %v1586 = vpop.f32.mrb[0].mxu0
      %v1587 = vpop.f32.mrb[0].mxu0
      %v1588 = vadd.f32 0.0, %v1587
      %v1589 = vpop.f32.mrb[0].mxu0
      %1590 = vmatprep.mubr.bf16.mxu0 0
      %1591 = vmatmul.mubr.bf16.gmra.mrb[0].mxu0 %v1542
      %v1592 = vpop.f32.mrb[0].mxu0
      %v1593 = vadd.f32 0.0, %v1592
      %v1594 = vpop.f32.mrb[0].mxu0
      %v1595 = vpop.f32.mrb[0].mxu0
      %v1596 = vpop.f32.mrb[0].mxu0
      %1597 = vdwg.mxu0
      %v1598 = vmul.f32 %v1585, 0.17677669
      %v1599 = vmul.f32 %v1588, 0.17677669
      %v1600 = vmul.f32 %v1593, 0.17677669
      %v1601 = vsel %vm877, %v1598, -inf
      %1602 = vmax.xlane.f32.xlu0 %v1601
      %v1603 = vpop.xlane.xlu0 %1602
      %v1604 = vsel %vm877, %v1599, -inf
      %1605 = vmax.xlane.f32.xlu0 %v1604
      %v1606 = vpop.xlane.xlu0 %1605
      %v1607 = vsel %vm884, %v1600, -inf
      %1608 = vmax.xlane.f32.xlu0 %v1607
      %v1609 = vpop.xlane.xlu0 %1608
      %v1610 = vsub.f32 %v1598, %v1603
      %v1611 = vsub.f32 %v1599, %v1606
      %v1612 = vsub.f32 %v1600, %v1609
      %v1613 = vmul.f32 %v1610, 1.442695
      %v1614 = vpow.pop %v1613
      %v1615 = vmul.f32 %v1611, 1.442695
      %v1616 = vpow.pop %v1615
      %v1617 = vmul.f32 %v1612, 1.442695
      %v1618 = vpow.pop %v1617
      %v1619 = vsel %vm877, %v1614, 0.0
      %1620 = vadd.xlane.f32.xlu0 %v1619
      %v1621 = vpop.xlane.xlu0 %1620
      %v1622 = vsel %vm877, %v1616, 0.0
      %1623 = vadd.xlane.f32.xlu0 %v1622
      %v1624 = vpop.xlane.xlu0 %1623
      %v1625 = vsel %vm884, %v1618, 0.0
      %1626 = vadd.xlane.f32.xlu0 %v1625
      %v1627 = vpop.xlane.xlu0 %1626
      %v1628 = vrcp.pop %v1621
      %v1629 = vmul.f32 %v1614, %v1628
      %v1630 = vrcp.pop %v1624
      %v1631 = vmul.f32 %v1616, %v1630
      %v1632 = vrcp.pop %v1627
      %v1633 = vmul.f32 %v1618, %v1632
      %v1634 = vpack.c.bf16 %v1631, %v1629
      %v1635 = vpack.c.bf16 %v1633, %v1633
      %1636 = vrot.lane.b32.xlu0 %v914, 32
      %v1637 = vpop.permute.xlu0 %1636
      %1638 = vrot.lane.b32.xlu0 %v915, 32
      %v1639 = vpop.permute.xlu0 %1638
      %v1642 = vsel %vm877, %v1634, 0
      %v1645 = vsel %vm877, %v1635, 0
      %v1648 = vand.u32 %v1639, %v923
      %1650 = vmatprep.subr.bf16.mxu0 0
      %1651 = vmatpush1.bf16.msra.mxu0 %v1637
      %1652 = vmatprep.subr.bf16.mxu0 0
      %1653 = vmatpush1.bf16.msra.mxu0 %v1648
      %1654 = vmatprep.subr.bf16.mxu0 0
      %1655 = vmatpush1.bf16.msra.mxu0 0
      %1656 = vmatprep.subr.bf16.mxu0 0
      %1657 = vmatpush1.bf16.msra.mxu0 0
      %1658 = vmatprep.subr.bf16.mxu0 0
      %1659 = vmatpush1.bf16.msra.mxu0 0
      %1660 = vmatprep.subr.bf16.mxu0 0
      %1661 = vmatpush1.bf16.msra.mxu0 0
      %1662 = vmatprep.subr.bf16.mxu0 0
      %1663 = vmatpush1.bf16.msra.mxu0 0
      %1664 = vmatprep.subr.bf16.mxu0 0
      %1665 = vmatpush1.bf16.msra.mxu0 0
      %1666 = vmatprep.subr.bf16.mxu0 0
      %1667 = vmatpush1.bf16.msra.mxu0 0
      %1668 = vmatprep.subr.bf16.mxu0 0
      %1669 = vmatpush1.bf16.msra.mxu0 0
      %1670 = vmatprep.subr.bf16.mxu0 0
      %1671 = vmatpush1.bf16.msra.mxu0 0
      %1672 = vmatprep.subr.bf16.mxu0 0
      %1673 = vmatpush1.bf16.msra.mxu0 0
      %1674 = vmatprep.subr.bf16.mxu0 0
      %1675 = vmatpush1.bf16.msra.mxu0 0
      %1676 = vmatprep.subr.bf16.mxu0 0
      %1677 = vmatpush1.bf16.msra.mxu0 0
      %1678 = vmatprep.subr.bf16.mxu0 0
      %1679 = vmatpush1.bf16.msra.mxu0 0
      %1680 = vmatprep.subr.bf16.mxu0 0
      %1681 = vmatpush1.bf16.msra.mxu0 0
      %1682 = vmatprep.mubr.bf16.mxu0 0
      %1683 = vmatmul.mubr.bf16.gmra.mrb[0].mxu0 %v1642
      %v1684 = vpop.f32.mrb[0].mxu0
      %v1685 = vadd.f32 0.0, %v1684
      %v1686 = vpop.f32.mrb[0].mxu0
      %v1687 = vpop.f32.mrb[0].mxu0
      %v1688 = vadd.f32 0.0, %v1687
      %v1689 = vpop.f32.mrb[0].mxu0
      %1690 = vmatprep.mubr.bf16.mxu0 0
      %1691 = vmatmul.mubr.bf16.gmra.mrb[0].mxu0 %v1645
      %v1692 = vpop.f32.mrb[0].mxu0
      %v1693 = vadd.f32 0.0, %v1692
      %v1694 = vpop.f32.mrb[0].mxu0
      %v1695 = vpop.f32.mrb[0].mxu0
      %v1696 = vpop.f32.mrb[0].mxu0
      %1697 = vdwg.mxu0
      %v1698 = vpack.c.bf16 %v1688, %v1685
      %v1699 = vpack.c.bf16 %v1693, %v1693
      %v1704 = vunpack.c.l.b16 %v795
      %v1705 = vunpack.c.l.b16 %v796
      %v1706 = vunpack.c.l.b16 %v797
      %v1707 = vunpack.c.l.b16 %v798
      %v1708 = vpack.c.b16 %v1705, %v1704
      %v1709 = vpack.c.b16 %v1707, %v1706
      %v1713 = vsel %vm813, %v1698, 0
      %v1716 = vsel %vm813, %v1699, 0
      %1718 = vmatprep.subr.bf16.mxu0 0
      %1719 = vmatpush1.bf16.msra.mxu0 %v1708
      %1720 = vmatprep.subr.bf16.mxu0 0
      %1721 = vmatpush1.bf16.msra.mxu0 %v1709
      %1722 = vmatprep.subr.bf16.mxu0 0
      %1723 = vmatpush1.bf16.msra.mxu0 0
      %1724 = vmatprep.subr.bf16.mxu0 0
      %1725 = vmatpush1.bf16.msra.mxu0 0
      %1726 = vmatprep.subr.bf16.mxu0 0
      %1727 = vmatpush1.bf16.msra.mxu0 0
      %1728 = vmatprep.subr.bf16.mxu0 0
      %1729 = vmatpush1.bf16.msra.mxu0 0
      %1730 = vmatprep.subr.bf16.mxu0 0
      %1731 = vmatpush1.bf16.msra.mxu0 0
      %1732 = vmatprep.subr.bf16.mxu0 0
      %1733 = vmatpush1.bf16.msra.mxu0 0
      %1734 = vmatprep.subr.bf16.mxu0 0
      %1735 = vmatpush1.bf16.msra.mxu0 0
      %1736 = vmatprep.subr.bf16.mxu0 0
      %1737 = vmatpush1.bf16.msra.mxu0 0
      %1738 = vmatprep.subr.bf16.mxu0 0
      %1739 = vmatpush1.bf16.msra.mxu0 0
      %1740 = vmatprep.subr.bf16.mxu0 0
      %1741 = vmatpush1.bf16.msra.mxu0 0
      %1742 = vmatprep.subr.bf16.mxu0 0
      %1743 = vmatpush1.bf16.msra.mxu0 0
      %1744 = vmatprep.subr.bf16.mxu0 0
      %1745 = vmatpush1.bf16.msra.mxu0 0
      %1746 = vmatprep.subr.bf16.mxu0 0
      %1747 = vmatpush1.bf16.msra.mxu0 0
      %1748 = vmatprep.subr.bf16.mxu0 0
      %1749 = vmatpush1.bf16.msra.mxu0 0
      %1750 = vmatprep.mubr.bf16.mxu0 0
      %1751 = vmatmul.mubr.bf16.gmra.mrb[0].mxu0 %v1713
      %v1752 = vpop.f32.mrb[0].mxu0
      %v1753 = vadd.f32 0.0, %v1752
      %v1754 = vpop.f32.mrb[0].mxu0
      %v1755 = vpop.f32.mrb[0].mxu0
      %v1756 = vadd.f32 0.0, %v1755
      %v1757 = vpop.f32.mrb[0].mxu0
      %1758 = vmatprep.mubr.bf16.mxu0 0
      %1759 = vmatmul.mubr.bf16.gmra.mrb[0].mxu0 %v1716
      %v1760 = vpop.f32.mrb[0].mxu0
      %v1761 = vadd.f32 0.0, %v1760
      %v1762 = vpop.f32.mrb[0].mxu0
      %v1763 = vpop.f32.mrb[0].mxu0
      %v1764 = vpop.f32.mrb[0].mxu0
      %1765 = vdwg.mxu0
      %v1766 = vadd.f32 %v1527, %v1753
      %v1767 = vadd.f32 %v1528, %v1756
      %v1768 = vadd.f32 %v1529, %v1761
      %v1769 = vld [vmem:[%s7] sm:$0x1]
      %v1770 = vld [vmem:[%s8] sm:$0x1]
      %1771 = vadd.xlane.f32.xlu0 %v1766
      %v1772 = vpop.xlane.xlu0 %1771
      %1773 = vadd.xlane.f32.xlu0 %v1767
      %v1774 = vpop.xlane.xlu0 %1773
      %v1775 = vsel %vm454, %v1768, 0.0
      %1776 = vadd.xlane.f32.xlu0 %v1775
      %v1777 = vpop.xlane.xlu0 %1776
      %v1778 = vmul.f32 %v1772, %v458
      %v1779 = vmul.f32 %v1774, %v458
      %v1780 = vmul.f32 %v1777, %v458
      %v1781 = vsub.f32 %v1766, %v1778
      %v1782 = vsub.f32 %v1767, %v1779
      %v1783 = vsub.f32 %v1768, %v1780
      %v1784 = vmul.f32 %v1781, %v1781
      %v1785 = vmul.f32 %v1782, %v1782
      %v1786 = vmul.f32 %v1783, %v1783
      %1787 = vadd.xlane.f32.xlu0 %v1784
      %v1788 = vpop.xlane.xlu0 %1787
      %1789 = vadd.xlane.f32.xlu0 %v1785
      %v1790 = vpop.xlane.xlu0 %1789
      %v1791 = vsel %vm454, %v1786, 0.0
      %1792 = vadd.xlane.f32.xlu0 %v1791
      %v1793 = vpop.xlane.xlu0 %1792
      %v1794 = vmul.f32 %v1788, %v458
      %v1795 = vmul.f32 %v1790, %v458
      %v1796 = vmul.f32 %v1793, %v458
      %v1797 = vadd.f32 %v1794, 1e-12
      %v1798 = vadd.f32 %v1795, 1e-12
      %v1799 = vadd.f32 %v1796, 1e-12
      %v1800 = vrsqrt.pop %v1797
      %v1801 = vrsqrt.pop %v1798
      %v1802 = vrsqrt.pop %v1799
      %v1803 = vmul.f32 %v1781, %v1800
      %v1804 = vmul.f32 %v1782, %v1801
      %v1805 = vmul.f32 %v1783, %v1802
      %v1807 = vlaneseq
      %v1808 = vshrl.u32 %v1807, 7
      %v1809 = vsub.s32 0, %v1808
      %v1810 = vrot.slane %v1769, %v1809
      %v1812 = vmul.f32 %v1803, %v1810
      %v1813 = vmul.f32 %v1804, %v1810
      %v1814 = vmul.f32 %v1805, %v1810
      %v1816 = vlaneseq
      %v1817 = vshrl.u32 %v1816, 7
      %v1818 = vsub.s32 0, %v1817
      %v1819 = vrot.slane %v1770, %v1818
      %v1821 = vadd.f32 %v1812, %v1819
      %v1822 = vadd.f32 %v1813, %v1819
      %v1823 = vadd.f32 %v1814, %v1819
      %v1824 = vld [vmem:[%s9] sm:$0xff]
      %v1825 = vld [vmem:[%s9 + $0x8] sm:$0xff]
      %v1826 = vld [vmem:[%s9 + $0x10] sm:$0xff]
      %v1827 = vld [vmem:[%s9 + $0x18] sm:$0xff]
      %v1828 = vld [vmem:[%s9 + $0x20] sm:$0xff]
      %v1829 = vld [vmem:[%s9 + $0x28] sm:$0xff]
      %v1830 = vld [vmem:[%s9 + $0x30] sm:$0xff]
      %v1831 = vld [vmem:[%s9 + $0x38] sm:$0xff]
      %v1832 = vld [vmem:[%s9 + $0x40] sm:$0xff]
      %v1833 = vld [vmem:[%s9 + $0x48] sm:$0xff]
      %v1834 = vld [vmem:[%s9 + $0x50] sm:$0xff]
      %v1835 = vld [vmem:[%s9 + $0x58] sm:$0xff]
      %v1836 = vld [vmem:[%s9 + $0x60] sm:$0xff]
      %v1837 = vld [vmem:[%s9 + $0x68] sm:$0xff]
      %v1838 = vld [vmem:[%s9 + $0x70] sm:$0xff]
      %v1839 = vld [vmem:[%s9 + $0x78] sm:$0xff]
      %v1840 = vld [vmem:[%s9 + $0x80] sm:$0xff]
      %v1841 = vld [vmem:[%s9 + $0x88] sm:$0xff]
      %v1842 = vld [vmem:[%s9 + $0x90] sm:$0xff]
      %v1843 = vld [vmem:[%s9 + $0x98] sm:$0xff]
      %v1844 = vld [vmem:[%s9 + $0xa0] sm:$0xff]
      %v1845 = vld [vmem:[%s9 + $0xa8] sm:$0xff]
      %v1846 = vld [vmem:[%s9 + $0xb0] sm:$0xff]
      %v1847 = vld [vmem:[%s9 + $0xb8] sm:$0xff]
      %v1848 = vld [vmem:[%s9 + $0xc0] sm:$0xff]
      %v1849 = vld [vmem:[%s9 + $0xc8] sm:$0xff]
      %v1850 = vld [vmem:[%s9 + $0xd0] sm:$0xff]
      %v1851 = vld [vmem:[%s9 + $0xd8] sm:$0xff]
      %v1852 = vld [vmem:[%s9 + $0xe0] sm:$0xff]
      %v1853 = vld [vmem:[%s9 + $0xe8] sm:$0xff]
      %v1854 = vld [vmem:[%s9 + $0xf0] sm:$0xff]
      %v1855 = vld [vmem:[%s9 + $0xf8] sm:$0xff]
      %v1856 = vpack.c.bf16 %v1822, %v1821
      %v1857 = vpack.c.bf16 %v1823, %v1823
      %v1858 = vld [vmem:[%s10] sm:$0xf]
      %v1860 = vlaneseq
      %v1861 = vshrl.u32 %v1860, 7
      %v1862 = vsub.s32 0, %v1861
      %v1863 = vrot.slane %v1858, %v1862
      %v1864 = vlaneseq
      %v1865 = vshrl.u32 %v1864, 7
      %v1866 = vsub.s32 1, %v1865
      %v1867 = vrot.slane %v1858, %v1866
      %v1868 = vlaneseq
      %v1869 = vshrl.u32 %v1868, 7
      %v1870 = vsub.s32 2, %v1869
      %v1871 = vrot.slane %v1858, %v1870
      %v1872 = vlaneseq
      %v1873 = vshrl.u32 %v1872, 7
      %v1874 = vsub.s32 3, %v1873
      %v1875 = vrot.slane %v1858, %v1874
      %v1912 = vunpack.c.l.b16 %v1824
      %v1913 = vunpack.c.h.b16 %v1824
      %v1914 = vunpack.c.l.b16 %v1825
      %v1915 = vunpack.c.h.b16 %v1825
      %v1916 = vunpack.c.l.b16 %v1826
      %v1917 = vunpack.c.h.b16 %v1826
      %v1918 = vunpack.c.l.b16 %v1827
      %v1919 = vunpack.c.h.b16 %v1827
      %v1920 = vunpack.c.l.b16 %v1828
      %v1921 = vunpack.c.h.b16 %v1828
      %v1922 = vunpack.c.l.b16 %v1829
      %v1923 = vunpack.c.h.b16 %v1829
      %v1924 = vunpack.c.l.b16 %v1830
      %v1925 = vunpack.c.h.b16 %v1830
      %v1926 = vunpack.c.l.b16 %v1831
      %v1927 = vunpack.c.h.b16 %v1831
      %v1928 = vunpack.c.l.b16 %v1832
      %v1929 = vunpack.c.h.b16 %v1832
      %v1930 = vunpack.c.l.b16 %v1833
      %v1931 = vunpack.c.h.b16 %v1833
      %v1932 = vunpack.c.l.b16 %v1834
      %v1933 = vunpack.c.h.b16 %v1834
      %v1934 = vunpack.c.l.b16 %v1835
      %v1935 = vunpack.c.h.b16 %v1835
      %v1936 = vunpack.c.l.b16 %v1836
      %v1937 = vunpack.c.h.b16 %v1836
      %v1938 = vunpack.c.l.b16 %v1837
      %v1939 = vunpack.c.h.b16 %v1837
      %v1940 = vunpack.c.l.b16 %v1838
      %v1941 = vunpack.c.h.b16 %v1838
      %v1942 = vunpack.c.l.b16 %v1839
      %v1943 = vunpack.c.h.b16 %v1839
      %v1944 = vunpack.c.l.b16 %v1840
      %v1945 = vunpack.c.h.b16 %v1840
      %v1946 = vunpack.c.l.b16 %v1841
      %v1947 = vunpack.c.h.b16 %v1841
      %v1948 = vunpack.c.l.b16 %v1842
      %v1949 = vunpack.c.h.b16 %v1842
      %v1950 = vunpack.c.l.b16 %v1843
      %v1951 = vunpack.c.h.b16 %v1843
      %v1952 = vunpack.c.l.b16 %v1844
      %v1953 = vunpack.c.h.b16 %v1844
      %v1954 = vunpack.c.l.b16 %v1845
      %v1955 = vunpack.c.h.b16 %v1845
      %v1956 = vunpack.c.l.b16 %v1846
      %v1957 = vunpack.c.h.b16 %v1846
      %v1958 = vunpack.c.l.b16 %v1847
      %v1959 = vunpack.c.h.b16 %v1847
      %v1960 = vunpack.c.l.b16 %v1848
      %v1961 = vunpack.c.h.b16 %v1848
      %v1962 = vunpack.c.l.b16 %v1849
      %v1963 = vunpack.c.h.b16 %v1849
      %v1964 = vunpack.c.l.b16 %v1850
      %v1965 = vunpack.c.h.b16 %v1850
      %v1966 = vunpack.c.l.b16 %v1851
      %v1967 = vunpack.c.h.b16 %v1851
      %v1968 = vunpack.c.l.b16 %v1852
      %v1969 = vunpack.c.h.b16 %v1852
      %v1970 = vunpack.c.l.b16 %v1853
      %v1971 = vunpack.c.h.b16 %v1853
      %v1972 = vunpack.c.l.b16 %v1854
      %v1973 = vunpack.c.h.b16 %v1854
      %v1974 = vunpack.c.l.b16 %v1855
      %v1975 = vunpack.c.h.b16 %v1855
      %v1976 = vpack.c.b16 %v1916, %v1912
      %v1977 = vpack.c.b16 %v1917, %v1913
      %v1978 = vpack.c.b16 %v1918, %v1914
      %v1979 = vpack.c.b16 %v1919, %v1915
      %v1980 = vpack.c.b16 %v1924, %v1920
      %v1981 = vpack.c.b16 %v1925, %v1921
      %v1982 = vpack.c.b16 %v1926, %v1922
      %v1983 = vpack.c.b16 %v1927, %v1923
      %v1984 = vpack.c.b16 %v1932, %v1928
      %v1985 = vpack.c.b16 %v1933, %v1929
      %v1986 = vpack.c.b16 %v1934, %v1930
      %v1987 = vpack.c.b16 %v1935, %v1931
      %v1988 = vpack.c.b16 %v1940, %v1936
      %v1989 = vpack.c.b16 %v1941, %v1937
      %v1990 = vpack.c.b16 %v1942, %v1938
      %v1991 = vpack.c.b16 %v1943, %v1939
      %v1992 = vpack.c.b16 %v1948, %v1944
      %v1993 = vpack.c.b16 %v1949, %v1945
      %v1994 = vpack.c.b16 %v1950, %v1946
      %v1995 = vpack.c.b16 %v1951, %v1947
      %v1996 = vpack.c.b16 %v1956, %v1952
      %v1997 = vpack.c.b16 %v1957, %v1953
      %v1998 = vpack.c.b16 %v1958, %v1954
      %v1999 = vpack.c.b16 %v1959, %v1955
      %v2000 = vpack.c.b16 %v1964, %v1960
      %v2001 = vpack.c.b16 %v1965, %v1961
      %v2002 = vpack.c.b16 %v1966, %v1962
      %v2003 = vpack.c.b16 %v1967, %v1963
      %v2004 = vpack.c.b16 %v1972, %v1968
      %v2005 = vpack.c.b16 %v1973, %v1969
      %v2006 = vpack.c.b16 %v1974, %v1970
      %v2007 = vpack.c.b16 %v1975, %v1971
      %2040 = vmatprep.subr.bf16.mxu0 %v1977
      %2041 = vmatpush1.bf16.msra.mxu0 %v1976
      %2042 = vmatprep.subr.bf16.mxu0 %v1981
      %2043 = vmatpush1.bf16.msra.mxu0 %v1980
      %2044 = vmatprep.subr.bf16.mxu0 %v1985
      %2045 = vmatpush1.bf16.msra.mxu0 %v1984
      %2046 = vmatprep.subr.bf16.mxu0 %v1989
      %2047 = vmatpush1.bf16.msra.mxu0 %v1988
      %2048 = vmatprep.subr.bf16.mxu0 %v1993
      %2049 = vmatpush1.bf16.msra.mxu0 %v1992
      %2050 = vmatprep.subr.bf16.mxu0 %v1997
      %2051 = vmatpush1.bf16.msra.mxu0 %v1996
      %2052 = vmatprep.subr.bf16.mxu0 %v2001
      %2053 = vmatpush1.bf16.msra.mxu0 %v2000
      %2054 = vmatprep.subr.bf16.mxu0 %v2005
      %2055 = vmatpush1.bf16.msra.mxu0 %v2004
      %2056 = vmatprep.subr.bf16.mxu0 0
      %2057 = vmatpush1.bf16.msra.mxu0 0
      %2058 = vmatprep.subr.bf16.mxu0 0
      %2059 = vmatpush1.bf16.msra.mxu0 0
      %2060 = vmatprep.subr.bf16.mxu0 0
      %2061 = vmatpush1.bf16.msra.mxu0 0
      %2062 = vmatprep.subr.bf16.mxu0 0
      %2063 = vmatpush1.bf16.msra.mxu0 0
      %2064 = vmatprep.subr.bf16.mxu0 0
      %2065 = vmatpush1.bf16.msra.mxu0 0
      %2066 = vmatprep.subr.bf16.mxu0 0
      %2067 = vmatpush1.bf16.msra.mxu0 0
      %2068 = vmatprep.subr.bf16.mxu0 0
      %2069 = vmatpush1.bf16.msra.mxu0 0
      %2070 = vmatprep.subr.bf16.mxu0 0
      %2071 = vmatpush1.bf16.msra.mxu0 0
      %2072 = vmatprep.mubr.bf16.mxu0 0
      %2073 = vmatmul.mubr.bf16.gmra.mrb[0].mxu0 %v1856
      %v2074 = vpop.f32.mrb[0].mxu0
      %v2075 = vadd.f32 %v1863, %v2074
      %v2076 = vpop.f32.mrb[0].mxu0
      %v2077 = vadd.f32 %v1867, %v2076
      %v2078 = vpop.f32.mrb[0].mxu0
      %v2079 = vadd.f32 %v1863, %v2078
      %v2080 = vpop.f32.mrb[0].mxu0
      %v2081 = vadd.f32 %v1867, %v2080
      %2082 = vmatprep.mubr.bf16.mxu0 0
      %2083 = vmatmul.mubr.bf16.gmra.mrb[0].mxu0 %v1857
      %v2084 = vpop.f32.mrb[0].mxu0
      %v2085 = vadd.f32 %v1863, %v2084
      %v2086 = vpop.f32.mrb[0].mxu0
      %v2087 = vadd.f32 %v1867, %v2086
      %v2088 = vpop.f32.mrb[0].mxu0
      %v2089 = vpop.f32.mrb[0].mxu0
      %2090 = vdwg.mxu0
      %2091 = vmatprep.subr.bf16.mxu0 %v1979
      %2092 = vmatpush1.bf16.msra.mxu0 %v1978
      %2093 = vmatprep.subr.bf16.mxu0 %v1983
      %2094 = vmatpush1.bf16.msra.mxu0 %v1982
      %2095 = vmatprep.subr.bf16.mxu0 %v1987
      %2096 = vmatpush1.bf16.msra.mxu0 %v1986
      %2097 = vmatprep.subr.bf16.mxu0 %v1991
      %2098 = vmatpush1.bf16.msra.mxu0 %v1990
      %2099 = vmatprep.subr.bf16.mxu0 %v1995
      %2100 = vmatpush1.bf16.msra.mxu0 %v1994
      %2101 = vmatprep.subr.bf16.mxu0 %v1999
      %2102 = vmatpush1.bf16.msra.mxu0 %v1998
      %2103 = vmatprep.subr.bf16.mxu0 %v2003
      %2104 = vmatpush1.bf16.msra.mxu0 %v2002
      %2105 = vmatprep.subr.bf16.mxu0 %v2007
      %2106 = vmatpush1.bf16.msra.mxu0 %v2006
      %2107 = vmatprep.subr.bf16.mxu0 0
      %2108 = vmatpush1.bf16.msra.mxu0 0
      %2109 = vmatprep.subr.bf16.mxu0 0
      %2110 = vmatpush1.bf16.msra.mxu0 0
      %2111 = vmatprep.subr.bf16.mxu0 0
      %2112 = vmatpush1.bf16.msra.mxu0 0
      %2113 = vmatprep.subr.bf16.mxu0 0
      %2114 = vmatpush1.bf16.msra.mxu0 0
      %2115 = vmatprep.subr.bf16.mxu0 0
      %2116 = vmatpush1.bf16.msra.mxu0 0
      %2117 = vmatprep.subr.bf16.mxu0 0
      %2118 = vmatpush1.bf16.msra.mxu0 0
      %2119 = vmatprep.subr.bf16.mxu0 0
      %2120 = vmatpush1.bf16.msra.mxu0 0
      %2121 = vmatprep.subr.bf16.mxu0 0
      %2122 = vmatpush1.bf16.msra.mxu0 0
      %2123 = vmatprep.mubr.bf16.mxu0 0
      %2124 = vmatmul.mubr.bf16.gmra.mrb[0].mxu0 %v1856
      %v2125 = vpop.f32.mrb[0].mxu0
      %v2126 = vadd.f32 %v1871, %v2125
      %v2127 = vpop.f32.mrb[0].mxu0
      %v2128 = vadd.f32 %v1875, %v2127
      %v2129 = vpop.f32.mrb[0].mxu0
      %v2130 = vadd.f32 %v1871, %v2129
      %v2131 = vpop.f32.mrb[0].mxu0
      %v2132 = vadd.f32 %v1875, %v2131
      %2133 = vmatprep.mubr.bf16.mxu0 0
      %2134 = vmatmul.mubr.bf16.gmra.mrb[0].mxu0 %v1857
      %v2135 = vpop.f32.mrb[0].mxu0
      %v2136 = vadd.f32 %v1871, %v2135
      %v2137 = vpop.f32.mrb[0].mxu0
      %v2138 = vadd.f32 %v1875, %v2137
      %v2139 = vpop.f32.mrb[0].mxu0
      %v2140 = vpop.f32.mrb[0].mxu0
      %2141 = vdwg.mxu0
      %v2142 = vmul.f32 %v2075, 0.5
      %v2143 = vmul.f32 %v2077, 0.5
      %v2144 = vmul.f32 %v2126, 0.5
      %v2145 = vmul.f32 %v2128, 0.5
      %v2146 = vmul.f32 %v2079, 0.5
      %v2147 = vmul.f32 %v2081, 0.5
      %v2148 = vmul.f32 %v2130, 0.5
      %v2149 = vmul.f32 %v2132, 0.5
      %v2150 = vmul.f32 %v2085, 0.5
      %v2151 = vmul.f32 %v2087, 0.5
      %v2152 = vmul.f32 %v2136, 0.5
      %v2153 = vmul.f32 %v2138, 0.5
      %v2154 = vmul.f32 %v2075, 0.044715
      %v2155 = vmul.f32 %v2077, 0.044715
      %v2156 = vmul.f32 %v2126, 0.044715
      %v2157 = vmul.f32 %v2128, 0.044715
      %v2158 = vmul.f32 %v2079, 0.044715
      %v2159 = vmul.f32 %v2081, 0.044715
      %v2160 = vmul.f32 %v2130, 0.044715
      %v2161 = vmul.f32 %v2132, 0.044715
      %v2162 = vmul.f32 %v2085, 0.044715
      %v2163 = vmul.f32 %v2087, 0.044715
      %v2164 = vmul.f32 %v2136, 0.044715
      %v2165 = vmul.f32 %v2138, 0.044715
      %v2166 = vmul.f32 %v2154, %v2075
      %v2167 = vmul.f32 %v2155, %v2077
      %v2168 = vmul.f32 %v2156, %v2126
      %v2169 = vmul.f32 %v2157, %v2128
      %v2170 = vmul.f32 %v2158, %v2079
      %v2171 = vmul.f32 %v2159, %v2081
      %v2172 = vmul.f32 %v2160, %v2130
      %v2173 = vmul.f32 %v2161, %v2132
      %v2174 = vmul.f32 %v2162, %v2085
      %v2175 = vmul.f32 %v2163, %v2087
      %v2176 = vmul.f32 %v2164, %v2136
      %v2177 = vmul.f32 %v2165, %v2138
      %v2178 = vmul.f32 %v2166, %v2075
      %v2179 = vmul.f32 %v2167, %v2077
      %v2180 = vmul.f32 %v2168, %v2126
      %v2181 = vmul.f32 %v2169, %v2128
      %v2182 = vmul.f32 %v2170, %v2079
      %v2183 = vmul.f32 %v2171, %v2081
      %v2184 = vmul.f32 %v2172, %v2130
      %v2185 = vmul.f32 %v2173, %v2132
      %v2186 = vmul.f32 %v2174, %v2085
      %v2187 = vmul.f32 %v2175, %v2087
      %v2188 = vmul.f32 %v2176, %v2136
      %v2189 = vmul.f32 %v2177, %v2138
      %v2190 = vadd.f32 %v2075, %v2178
      %v2191 = vadd.f32 %v2077, %v2179
      %v2192 = vadd.f32 %v2126, %v2180
      %v2193 = vadd.f32 %v2128, %v2181
      %v2194 = vadd.f32 %v2079, %v2182
      %v2195 = vadd.f32 %v2081, %v2183
      %v2196 = vadd.f32 %v2130, %v2184
      %v2197 = vadd.f32 %v2132, %v2185
      %v2198 = vadd.f32 %v2085, %v2186
      %v2199 = vadd.f32 %v2087, %v2187
      %v2200 = vadd.f32 %v2136, %v2188
      %v2201 = vadd.f32 %v2138, %v2189
      %v2202 = vmul.f32 %v2190, 0.7978846
      %v2203 = vmul.f32 %v2191, 0.7978846
      %v2204 = vmul.f32 %v2192, 0.7978846
      %v2205 = vmul.f32 %v2193, 0.7978846
      %v2206 = vmul.f32 %v2194, 0.7978846
      %v2207 = vmul.f32 %v2195, 0.7978846
      %v2208 = vmul.f32 %v2196, 0.7978846
      %v2209 = vmul.f32 %v2197, 0.7978846
      %v2210 = vmul.f32 %v2198, 0.7978846
      %v2211 = vmul.f32 %v2199, 0.7978846
      %v2212 = vmul.f32 %v2200, 0.7978846
      %v2213 = vmul.f32 %v2201, 0.7978846
      %v2214 = vtanh.pop %v2202
      %v2215 = vtanh.pop %v2203
      %v2216 = vtanh.pop %v2204
      %v2217 = vtanh.pop %v2205
      %v2218 = vtanh.pop %v2206
      %v2219 = vtanh.pop %v2207
      %v2220 = vtanh.pop %v2208
      %v2221 = vtanh.pop %v2209
      %v2222 = vtanh.pop %v2210
      %v2223 = vtanh.pop %v2211
      %v2224 = vtanh.pop %v2212
      %v2225 = vtanh.pop %v2213
      %v2226 = vadd.f32 %v2214, 1.0
      %v2227 = vadd.f32 %v2215, 1.0
      %v2228 = vadd.f32 %v2216, 1.0
      %v2229 = vadd.f32 %v2217, 1.0
      %v2230 = vadd.f32 %v2218, 1.0
      %v2231 = vadd.f32 %v2219, 1.0
      %v2232 = vadd.f32 %v2220, 1.0
      %v2233 = vadd.f32 %v2221, 1.0
      %v2234 = vadd.f32 %v2222, 1.0
      %v2235 = vadd.f32 %v2223, 1.0
      %v2236 = vadd.f32 %v2224, 1.0
      %v2237 = vadd.f32 %v2225, 1.0
      %v2238 = vmul.f32 %v2142, %v2226
      %v2239 = vmul.f32 %v2143, %v2227
      %v2240 = vmul.f32 %v2144, %v2228
      %v2241 = vmul.f32 %v2145, %v2229
      %v2242 = vmul.f32 %v2146, %v2230
      %v2243 = vmul.f32 %v2147, %v2231
      %v2244 = vmul.f32 %v2148, %v2232
      %v2245 = vmul.f32 %v2149, %v2233
      %v2246 = vmul.f32 %v2150, %v2234
      %v2247 = vmul.f32 %v2151, %v2235
      %v2248 = vmul.f32 %v2152, %v2236
      %v2249 = vmul.f32 %v2153, %v2237
      %v2250 = vld [vmem:[%s11] sm:$0xf]
      %v2251 = vld [vmem:[%s11 + $0x4] sm:$0xf]
      %v2252 = vld [vmem:[%s11 + $0x8] sm:$0xf]
      %v2253 = vld [vmem:[%s11 + $0xc] sm:$0xf]
      %v2254 = vld [vmem:[%s11 + $0x10] sm:$0xf]
      %v2255 = vld [vmem:[%s11 + $0x14] sm:$0xf]
      %v2256 = vld [vmem:[%s11 + $0x18] sm:$0xf]
      %v2257 = vld [vmem:[%s11 + $0x1c] sm:$0xf]
      %v2258 = vld [vmem:[%s11 + $0x20] sm:$0xf]
      %v2259 = vld [vmem:[%s11 + $0x24] sm:$0xf]
      %v2260 = vld [vmem:[%s11 + $0x28] sm:$0xf]
      %v2261 = vld [vmem:[%s11 + $0x2c] sm:$0xf]
      %v2262 = vld [vmem:[%s11 + $0x30] sm:$0xf]
      %v2263 = vld [vmem:[%s11 + $0x34] sm:$0xf]
      %v2264 = vld [vmem:[%s11 + $0x38] sm:$0xf]
      %v2265 = vld [vmem:[%s11 + $0x3c] sm:$0xf]
      %v2266 = vld [vmem:[%s11 + $0x40] sm:$0xf]
      %v2267 = vld [vmem:[%s11 + $0x44] sm:$0xf]
      %v2268 = vld [vmem:[%s11 + $0x48] sm:$0xf]
      %v2269 = vld [vmem:[%s11 + $0x4c] sm:$0xf]
      %v2270 = vld [vmem:[%s11 + $0x50] sm:$0xf]
      %v2271 = vld [vmem:[%s11 + $0x54] sm:$0xf]
      %v2272 = vld [vmem:[%s11 + $0x58] sm:$0xf]
      %v2273 = vld [vmem:[%s11 + $0x5c] sm:$0xf]
      %v2274 = vld [vmem:[%s11 + $0x60] sm:$0xf]
      %v2275 = vld [vmem:[%s11 + $0x64] sm:$0xf]
      %v2276 = vld [vmem:[%s11 + $0x68] sm:$0xf]
      %v2277 = vld [vmem:[%s11 + $0x6c] sm:$0xf]
      %v2278 = vld [vmem:[%s11 + $0x70] sm:$0xf]
      %v2279 = vld [vmem:[%s11 + $0x74] sm:$0xf]
      %v2280 = vld [vmem:[%s11 + $0x78] sm:$0xf]
      %v2281 = vld [vmem:[%s11 + $0x7c] sm:$0xf]
      %v2282 = vld [vmem:[%s11 + $0x80] sm:$0xf]
      %v2283 = vld [vmem:[%s11 + $0x84] sm:$0xf]
      %v2284 = vld [vmem:[%s11 + $0x88] sm:$0xf]
      %v2285 = vld [vmem:[%s11 + $0x8c] sm:$0xf]
      %v2286 = vld [vmem:[%s11 + $0x90] sm:$0xf]
      %v2287 = vld [vmem:[%s11 + $0x94] sm:$0xf]
      %v2288 = vld [vmem:[%s11 + $0x98] sm:$0xf]
      %v2289 = vld [vmem:[%s11 + $0x9c] sm:$0xf]
      %v2290 = vld [vmem:[%s11 + $0xa0] sm:$0xf]
      %v2291 = vld [vmem:[%s11 + $0xa4] sm:$0xf]
      %v2292 = vld [vmem:[%s11 + $0xa8] sm:$0xf]
      %v2293 = vld [vmem:[%s11 + $0xac] sm:$0xf]
      %v2294 = vld [vmem:[%s11 + $0xb0] sm:$0xf]
      %v2295 = vld [vmem:[%s11 + $0xb4] sm:$0xf]
      %v2296 = vld [vmem:[%s11 + $0xb8] sm:$0xf]
      %v2297 = vld [vmem:[%s11 + $0xbc] sm:$0xf]
      %v2298 = vld [vmem:[%s11 + $0xc0] sm:$0xf]
      %v2299 = vld [vmem:[%s11 + $0xc4] sm:$0xf]
      %v2300 = vld [vmem:[%s11 + $0xc8] sm:$0xf]
      %v2301 = vld [vmem:[%s11 + $0xcc] sm:$0xf]
      %v2302 = vld [vmem:[%s11 + $0xd0] sm:$0xf]
      %v2303 = vld [vmem:[%s11 + $0xd4] sm:$0xf]
      %v2304 = vld [vmem:[%s11 + $0xd8] sm:$0xf]
      %v2305 = vld [vmem:[%s11 + $0xdc] sm:$0xf]
      %v2306 = vld [vmem:[%s11 + $0xe0] sm:$0xf]
      %v2307 = vld [vmem:[%s11 + $0xe4] sm:$0xf]
      %v2308 = vld [vmem:[%s11 + $0xe8] sm:$0xf]
      %v2309 = vld [vmem:[%s11 + $0xec] sm:$0xf]
      %v2310 = vld [vmem:[%s11 + $0xf0] sm:$0xf]
      %v2311 = vld [vmem:[%s11 + $0xf4] sm:$0xf]
      %v2312 = vld [vmem:[%s11 + $0xf8] sm:$0xf]
      %v2313 = vld [vmem:[%s11 + $0xfc] sm:$0xf]
      %v2314 = vpack.c.bf16 %v2242, %v2238
      %v2315 = vpack.c.bf16 %v2243, %v2239
      %v2316 = vpack.c.bf16 %v2244, %v2240
      %v2317 = vpack.c.bf16 %v2245, %v2241
      %v2318 = vpack.c.bf16 %v2246, %v2246
      %v2319 = vpack.c.bf16 %v2247, %v2247
      %v2320 = vpack.c.bf16 %v2248, %v2248
      %v2321 = vpack.c.bf16 %v2249, %v2249
      %v2322 = vld [vmem:[%s12] sm:$0x1]
      %v2324 = vlaneseq
      %v2325 = vshrl.u32 %v2324, 7
      %v2326 = vsub.s32 0, %v2325
      %v2327 = vrot.slane %v2322, %v2326
      %v2393 = vunpack.c.l.b16 %v2250
      %v2394 = vunpack.c.l.b16 %v2251
      %v2395 = vunpack.c.l.b16 %v2252
      %v2396 = vunpack.c.l.b16 %v2253
      %v2397 = vunpack.c.l.b16 %v2254
      %v2398 = vunpack.c.l.b16 %v2255
      %v2399 = vunpack.c.l.b16 %v2256
      %v2400 = vunpack.c.l.b16 %v2257
      %v2401 = vunpack.c.l.b16 %v2258
      %v2402 = vunpack.c.l.b16 %v2259
      %v2403 = vunpack.c.l.b16 %v2260
      %v2404 = vunpack.c.l.b16 %v2261
      %v2405 = vunpack.c.l.b16 %v2262
      %v2406 = vunpack.c.l.b16 %v2263
      %v2407 = vunpack.c.l.b16 %v2264
      %v2408 = vunpack.c.l.b16 %v2265
      %v2409 = vunpack.c.l.b16 %v2266
      %v2410 = vunpack.c.l.b16 %v2267
      %v2411 = vunpack.c.l.b16 %v2268
      %v2412 = vunpack.c.l.b16 %v2269
      %v2413 = vunpack.c.l.b16 %v2270
      %v2414 = vunpack.c.l.b16 %v2271
      %v2415 = vunpack.c.l.b16 %v2272
      %v2416 = vunpack.c.l.b16 %v2273
      %v2417 = vunpack.c.l.b16 %v2274
      %v2418 = vunpack.c.l.b16 %v2275
      %v2419 = vunpack.c.l.b16 %v2276
      %v2420 = vunpack.c.l.b16 %v2277
      %v2421 = vunpack.c.l.b16 %v2278
      %v2422 = vunpack.c.l.b16 %v2279
      %v2423 = vunpack.c.l.b16 %v2280
      %v2424 = vunpack.c.l.b16 %v2281
      %v2425 = vunpack.c.l.b16 %v2282
      %v2426 = vunpack.c.l.b16 %v2283
      %v2427 = vunpack.c.l.b16 %v2284
      %v2428 = vunpack.c.l.b16 %v2285
      %v2429 = vunpack.c.l.b16 %v2286
      %v2430 = vunpack.c.l.b16 %v2287
      %v2431 = vunpack.c.l.b16 %v2288
      %v2432 = vunpack.c.l.b16 %v2289
      %v2433 = vunpack.c.l.b16 %v2290
      %v2434 = vunpack.c.l.b16 %v2291
      %v2435 = vunpack.c.l.b16 %v2292
      %v2436 = vunpack.c.l.b16 %v2293
      %v2437 = vunpack.c.l.b16 %v2294
      %v2438 = vunpack.c.l.b16 %v2295
      %v2439 = vunpack.c.l.b16 %v2296
      %v2440 = vunpack.c.l.b16 %v2297
      %v2441 = vunpack.c.l.b16 %v2298
      %v2442 = vunpack.c.l.b16 %v2299
      %v2443 = vunpack.c.l.b16 %v2300
      %v2444 = vunpack.c.l.b16 %v2301
      %v2445 = vunpack.c.l.b16 %v2302
      %v2446 = vunpack.c.l.b16 %v2303
      %v2447 = vunpack.c.l.b16 %v2304
      %v2448 = vunpack.c.l.b16 %v2305
      %v2449 = vunpack.c.l.b16 %v2306
      %v2450 = vunpack.c.l.b16 %v2307
      %v2451 = vunpack.c.l.b16 %v2308
      %v2452 = vunpack.c.l.b16 %v2309
      %v2453 = vunpack.c.l.b16 %v2310
      %v2454 = vunpack.c.l.b16 %v2311
      %v2455 = vunpack.c.l.b16 %v2312
      %v2456 = vunpack.c.l.b16 %v2313
      %v2457 = vpack.c.b16 %v2394, %v2393
      %v2458 = vpack.c.b16 %v2396, %v2395
      %v2459 = vpack.c.b16 %v2398, %v2397
      %v2460 = vpack.c.b16 %v2400, %v2399
      %v2461 = vpack.c.b16 %v2402, %v2401
      %v2462 = vpack.c.b16 %v2404, %v2403
      %v2463 = vpack.c.b16 %v2406, %v2405
      %v2464 = vpack.c.b16 %v2408, %v2407
      %v2465 = vpack.c.b16 %v2410, %v2409
      %v2466 = vpack.c.b16 %v2412, %v2411
      %v2467 = vpack.c.b16 %v2414, %v2413
      %v2468 = vpack.c.b16 %v2416, %v2415
      %v2469 = vpack.c.b16 %v2418, %v2417
      %v2470 = vpack.c.b16 %v2420, %v2419
      %v2471 = vpack.c.b16 %v2422, %v2421
      %v2472 = vpack.c.b16 %v2424, %v2423
      %v2473 = vpack.c.b16 %v2426, %v2425
      %v2474 = vpack.c.b16 %v2428, %v2427
      %v2475 = vpack.c.b16 %v2430, %v2429
      %v2476 = vpack.c.b16 %v2432, %v2431
      %v2477 = vpack.c.b16 %v2434, %v2433
      %v2478 = vpack.c.b16 %v2436, %v2435
      %v2479 = vpack.c.b16 %v2438, %v2437
      %v2480 = vpack.c.b16 %v2440, %v2439
      %v2481 = vpack.c.b16 %v2442, %v2441
      %v2482 = vpack.c.b16 %v2444, %v2443
      %v2483 = vpack.c.b16 %v2446, %v2445
      %v2484 = vpack.c.b16 %v2448, %v2447
      %v2485 = vpack.c.b16 %v2450, %v2449
      %v2486 = vpack.c.b16 %v2452, %v2451
      %v2487 = vpack.c.b16 %v2454, %v2453
      %v2488 = vpack.c.b16 %v2456, %v2455
      %2521 = vmatprep.subr.bf16.mxu0 0
      %2522 = vmatpush1.bf16.msra.mxu0 %v2457
      %2523 = vmatprep.subr.bf16.mxu0 0
      %2524 = vmatpush1.bf16.msra.mxu0 %v2458
      %2525 = vmatprep.subr.bf16.mxu0 0
      %2526 = vmatpush1.bf16.msra.mxu0 %v2459
      %2527 = vmatprep.subr.bf16.mxu0 0
      %2528 = vmatpush1.bf16.msra.mxu0 %v2460
      %2529 = vmatprep.subr.bf16.mxu0 0
      %2530 = vmatpush1.bf16.msra.mxu0 %v2461
      %2531 = vmatprep.subr.bf16.mxu0 0
      %2532 = vmatpush1.bf16.msra.mxu0 %v2462
      %2533 = vmatprep.subr.bf16.mxu0 0
      %2534 = vmatpush1.bf16.msra.mxu0 %v2463
      %2535 = vmatprep.subr.bf16.mxu0 0
      %2536 = vmatpush1.bf16.msra.mxu0 %v2464
      %2537 = vmatprep.subr.bf16.mxu0 0
      %2538 = vmatpush1.bf16.msra.mxu0 %v2465
      %2539 = vmatprep.subr.bf16.mxu0 0
      %2540 = vmatpush1.bf16.msra.mxu0 %v2466
      %2541 = vmatprep.subr.bf16.mxu0 0
      %2542 = vmatpush1.bf16.msra.mxu0 %v2467
      %2543 = vmatprep.subr.bf16.mxu0 0
      %2544 = vmatpush1.bf16.msra.mxu0 %v2468
      %2545 = vmatprep.subr.bf16.mxu0 0
      %2546 = vmatpush1.bf16.msra.mxu0 %v2469
      %2547 = vmatprep.subr.bf16.mxu0 0
      %2548 = vmatpush1.bf16.msra.mxu0 %v2470
      %2549 = vmatprep.subr.bf16.mxu0 0
      %2550 = vmatpush1.bf16.msra.mxu0 %v2471
      %2551 = vmatprep.subr.bf16.mxu0 0
      %2552 = vmatpush1.bf16.msra.mxu0 %v2472
      %2553 = vmatprep.mubr.bf16.mxu0 %v2315
      %2554 = vmatmul.mubr.bf16.gmra.mrb[0].mxu0 %v2314
      %v2555 = vpop.f32.mrb[0].mxu0
      %v2556 = vadd.f32 %v2327, %v2555
      %v2557 = vpop.f32.mrb[0].mxu0
      %v2558 = vpop.f32.mrb[0].mxu0
      %v2559 = vadd.f32 %v2327, %v2558
      %v2560 = vpop.f32.mrb[0].mxu0
      %2561 = vmatprep.mubr.bf16.mxu0 %v2319
      %2562 = vmatmul.mubr.bf16.gmra.mrb[0].mxu0 %v2318
      %v2563 = vpop.f32.mrb[0].mxu0
      %v2564 = vadd.f32 %v2327, %v2563
      %v2565 = vpop.f32.mrb[0].mxu0
      %v2566 = vpop.f32.mrb[0].mxu0
      %v2567 = vpop.f32.mrb[0].mxu0
      %2568 = vdwg.mxu0
      %2569 = vmatprep.subr.bf16.mxu0 0
      %2570 = vmatpush1.bf16.msra.mxu0 %v2473
      %2571 = vmatprep.subr.bf16.mxu0 0
      %2572 = vmatpush1.bf16.msra.mxu0 %v2474
      %2573 = vmatprep.subr.bf16.mxu0 0
      %2574 = vmatpush1.bf16.msra.mxu0 %v2475
      %2575 = vmatprep.subr.bf16.mxu0 0
      %2576 = vmatpush1.bf16.msra.mxu0 %v2476
      %2577 = vmatprep.subr.bf16.mxu0 0
      %2578 = vmatpush1.bf16.msra.mxu0 %v2477
      %2579 = vmatprep.subr.bf16.mxu0 0
      %2580 = vmatpush1.bf16.msra.mxu0 %v2478
      %2581 = vmatprep.subr.bf16.mxu0 0
      %2582 = vmatpush1.bf16.msra.mxu0 %v2479
      %2583 = vmatprep.subr.bf16.mxu0 0
      %2584 = vmatpush1.bf16.msra.mxu0 %v2480
      %2585 = vmatprep.subr.bf16.mxu0 0
      %2586 = vmatpush1.bf16.msra.mxu0 %v2481
      %2587 = vmatprep.subr.bf16.mxu0 0
      %2588 = vmatpush1.bf16.msra.mxu0 %v2482
      %2589 = vmatprep.subr.bf16.mxu0 0
      %2590 = vmatpush1.bf16.msra.mxu0 %v2483
      %2591 = vmatprep.subr.bf16.mxu0 0
      %2592 = vmatpush1.bf16.msra.mxu0 %v2484
      %2593 = vmatprep.subr.bf16.mxu0 0
      %2594 = vmatpush1.bf16.msra.mxu0 %v2485
      %2595 = vmatprep.subr.bf16.mxu0 0
      %2596 = vmatpush1.bf16.msra.mxu0 %v2486
      %2597 = vmatprep.subr.bf16.mxu0 0
      %2598 = vmatpush1.bf16.msra.mxu0 %v2487
      %2599 = vmatprep.subr.bf16.mxu0 0
      %2600 = vmatpush1.bf16.msra.mxu0 %v2488
      %2601 = vmatprep.mubr.bf16.mxu0 %v2317
      %2602 = vmatmul.mubr.bf16.gmra.mrb[0].mxu0 %v2316
      %v2603 = vpop.f32.mrb[0].mxu0
      %v2604 = vadd.f32 %v2556, %v2603
      %v2605 = vpop.f32.mrb[0].mxu0
      %v2606 = vpop.f32.mrb[0].mxu0
      %v2607 = vadd.f32 %v2559, %v2606
      %v2608 = vpop.f32.mrb[0].mxu0
      %2609 = vmatprep.mubr.bf16.mxu0 %v2321
      %2610 = vmatmul.mubr.bf16.gmra.mrb[0].mxu0 %v2320
      %v2611 = vpop.f32.mrb[0].mxu0
      %v2612 = vadd.f32 %v2564, %v2611
      %v2613 = vpop.f32.mrb[0].mxu0
      %v2614 = vpop.f32.mrb[0].mxu0
      %v2615 = vpop.f32.mrb[0].mxu0
      %2616 = vdwg.mxu0
      %v2617 = vadd.f32 %v2604, %v1766
      %v2618 = vadd.f32 %v2607, %v1767
      %v2619 = vadd.f32 %v2612, %v1768
      %v2620 = vpack.c.bf16 %v2618, %v2617
      %v2621 = vpack.c.bf16 %v2619, %v2619
      %v2624 = vunpack.c.l.b16 %v2620
      %v2625 = vunpack.c.h.b16 %v2620
      %v2626 = vunpack.c.l.b16 %v2621
      %v2627 = vpack.c.b16 %v2624, %v2624
      %v2628 = vpack.c.b16 %v2625, %v2625
      %v2629 = vpack.c.b16 %v2626, %v2626
      %2633 = vst [vmem:[%s440] sm:$0xf] %v2627
      %2634 = vst [vmem:[%s440 + $0x4] sm:$0xf] %v2628
      %vm2635 = vcmask 1040384
      %vm2636 = vsmask.f32 256
      %vm2637 = vmand %vm2635, %vm2636
      %v2638 = vld [vmem:[%s440 + $0x8] sm:$0x1]
      %v2639 = vsel %vm2637, %v2629, %v2638
      %2640 = vst [vmem:[%s440 + $0x8] sm:$0x1] %v2639
      %p2641 = scmp.lt.s32.totalorder %s24, 1
      %s2642 = scalar_select %p2641, %s24, 1
      %s2643 = smul.addr %s2642, 3
      %s2644 = smul.addr %s2643, 4
      %s2645 = scalar_lea.vmem %s13, %s2644
      // Predicated region
      $region73: #{vision_forward.5} parent=71 // pred_check
        %p2646 = pneg %p320
      $region74: #{vision_forward.5} parent=71 // pred_check_branch
        %2648 = sbr.rel (%p2646) target = $region76
      $region75: #{vision_forward.5} parent=71 // pred_region
        _
      $region76: #{vision_forward.5} parent=71 // pred_fallthru
        _
    $region72: #{vision_forward.5} parent=5 // pred_fallthru
      _
    %p2649 = scmp.le.s32.totalorder 2, %s19
    // Predicated region
    $region77: #{vision_forward.5} parent=5 // pred_check
      %p2650 = pneg %p2649
    $region78: #{vision_forward.5} parent=5 // pred_check_branch
      %2652 = sbr.rel (%p2650) target = $region80
    $region79: #{vision_forward.5} parent=5 // pred_region
      %s2653 = ssub.s32 %s19, 2
      // Predicated region
      $region81: #{vision_forward.5} parent=79 // pred_check
        %p2654 = pneg %p326
      $region82: #{vision_forward.5} parent=79 // pred_check_branch
        %2656 = sbr.rel (%p2654) target = $region84
      $region83: #{vision_forward.5} parent=79 // pred_region
        %p2657 = scmp.lt.s32.totalorder %s25, 1
        %s2658 = scalar_select %p2657, %s25, 1
        %s2659 = smul.addr %s2658, 3
        %s2660 = smul.addr %s2659, 4
        %s2661 = scalar_lea.vmem %s13, %s2660
      $region84: #{vision_forward.5} parent=79 // pred_fallthru
        _
    $region80: #{vision_forward.5} parent=5 // pred_fallthru
      _
  $region6: #{vision_forward.5} parent=0 // loop_footer
    %s23 = sadd.s32 1, %s19
  $region7: #{vision_forward.5} parent=0 // loop_footer_branch
    %18 = sbr.rel target = $region3
  $region8: #{vision_forward.5} parent=0 // loop_exit
    _

</llo_original>
